<compile_context>
chip_gen: v7x
topology: tpu7x:2x2x1
jax: 0.10.0
libtpu: 0.0.40
codegen_flags: <defaults>
</compile_context>

<pallas_src>
import functools
import math
from typing import NamedTuple

import jax
import jax.numpy as jnp
import numpy as np
from jax.experimental import pallas as pl
from jax.experimental.pallas import tpu as pltpu

# ----------------------------- config (synthetic) -----------------------------
T_DIM = 32     # time_embedding_config.out_features
C1 = 16        # UNet base channels
C2 = 32        # UNet bottleneck channels
IMG_C = 3      # image channels per docstring [bs, h, w, 3]
CIN_PAD = 8    # pad 3 -> 8 input channels so the conv1 im2col stack is aligned


# --------------------------- precomputed constant ops --------------------------
@functools.lru_cache(maxsize=None)
def make_spatial_constants(H, W, B):
    """Constant operators (vectorized numpy, cached per (H, W, B)).

    pool_bd   : [B*HW, B*HW/4] bf16  block-diag 2x2 average pool (matmul on lanes)
    up_bd     : [B*HW/4, B*HW] bf16  block-diag 2x nearest upsample
    mask_full : [9, B*HW]      f32   per-image tap-validity masks (full res)
    mask_half : [9, B*HW/4]    f32   per-image tap-validity masks (half res)
    """
    HW = H * W
    Hh, Wh = H // 2, W // 2
    HW4 = Hh * Wh

    ys, xs = np.divmod(np.arange(HW), W)
    mask_full = np.zeros((9, HW), np.float32)
    for k in range(9):
        dy, dx = k // 3 - 1, k % 3 - 1
        mask_full[k] = ((ys + dy >= 0) & (ys + dy < H) &
                        (xs + dx >= 0) & (xs + dx < W))

    ysh, xsh = np.divmod(np.arange(HW4), Wh)
    mask_half = np.zeros((9, HW4), np.float32)
    for k in range(9):
        dy, dx = k // 3 - 1, k % 3 - 1
        mask_half[k] = ((ysh + dy >= 0) & (ysh + dy < Hh) &
                        (xsh + dx >= 0) & (xsh + dx < Wh))

    pool = np.zeros((HW, HW4), np.float32)
    y2, x2 = np.divmod(np.arange(HW4), Wh)
    for dy in (0, 1):
        for dx in (0, 1):
            pool[(2 * y2 + dy) * W + (2 * x2 + dx), np.arange(HW4)] = 0.25

    up = np.zeros((HW4, HW), np.float32)
    up[(ys // 2) * Wh + (xs // 2), np.arange(HW)] = 1.0

    eye = np.eye(B, dtype=np.float32)
    return dict(
        pool_bd=jnp.asarray(np.kron(eye, pool), jnp.bfloat16),
        up_bd=jnp.asarray(np.kron(eye, up), jnp.bfloat16),
        mask_full=jnp.asarray(np.tile(mask_full, (1, B)), jnp.float32),
        mask_half=jnp.asarray(np.tile(mask_half, (1, B)), jnp.float32),
    )


# ------------------------------ fused UNet kernel ------------------------------
def _fused_unet_kernel(H, W, B,
                       x_ref, b1_ref, b2_ref, b3_ref, b4_ref,
                       w1_ref, w2_ref, w3_ref, w4_ref,
                       pool_ref, up_ref, maskf_ref, maskh_ref,
                       o_ref):
    """One UNet head, whole batch folded into the lane axis.

    Activations are [C, B*H*W].  Each 3x3 conv is ONE MXU matmul (bf16 operands,
    f32 accumulation); the 9-tap im2col stack is built with XLU lane rotations
    plus precomputed zero-boundary masks (which also kill cross-image wrap).
    """
    HW = H * W
    L = B * HW
    Wh = W // 2
    Lh = B * (HW // 4)

    def conv3x3(h, width, length, mask_ref, w, bias, act):
        pieces = []
        for k in range(9):
            dy, dx = k // 3 - 1, k % 3 - 1
            off = dy * width + dx
            if off == 0:
                pieces.append(h)
            else:
                rolled = pltpu.roll(h, shift=(-off) % length, axis=1)
                pieces.append(rolled * mask_ref[k:k + 1, :])
        stk = jnp.concatenate(pieces, axis=0).astype(jnp.bfloat16)  # [9*Cin, len]
        out = jnp.dot(w, stk, preferred_element_type=jnp.float32) + bias
        if act:
            out = out * jax.nn.sigmoid(out)                         # SiLU (f32)
        return out

    x = x_ref[...]                                                   # [8,  L]

    # conv1 (+ folded time bias) + SiLU
    h1 = conv3x3(x, W, L, maskf_ref, w1_ref[0], b1_ref[0], True)     # [C1, L]

    # 2x2 average pool as one block-diagonal matmul on the lane dim
    h1d = jnp.dot(h1.astype(jnp.bfloat16), pool_ref[...],
                  preferred_element_type=jnp.float32)                # [C1, Lh]

    # conv2 at half resolution (+ folded time bias) + SiLU — roll+mask im2col
    h2 = conv3x3(h1d, Wh, Lh, maskh_ref, w2_ref[0], b2_ref[0], True)  # [C2, Lh]

    # nearest 2x upsample as one block-diagonal matmul
    h2u = jnp.dot(h2.astype(jnp.bfloat16), up_ref[...],
                  preferred_element_type=jnp.float32)                # [C2, L]

    # conv3 + SiLU + skip connection from h1
    h3 = conv3x3(h2u, W, L, maskf_ref, w3_ref[0], b3_ref[0], True) + h1

    # conv4 (linear output head)
    o_ref[0] = conv3x3(h3, W, L, maskf_ref, w4_ref[0], b4_ref[0], False)


# -------------------------------- wrapper --------------------------------------
def _im2col_weight(w, cin_pad=None):
    """[9, cin, cout] -> [cout, 9*cin(_pad)] bf16 (MXU operand layout)."""
    if cin_pad is not None and cin_pad > w.shape[1]:
        w = jnp.pad(w, ((0, 0), (0, cin_pad - w.shape[1]), (0, 0)))
    k, cin, cout = w.shape
    return w.transpose(2, 0, 1).reshape(cout, k * cin).astype(jnp.bfloat16)


def unet_series_forward(ts_samples, temb, unet_params_list, sc):
    """All n_repeat UNet heads in ONE pallas_call; grid=(n_repeat,).

    ts_samples: [B, H, W, 3], temb: [B, T_DIM] -> [n_repeat, B, H, W, 3]
    """
    B, H, W, _ = ts_samples.shape
    assert H % 2 == 0 and W % 2 == 0
    HW = H * W
    HW4 = (H // 2) * (W // 2)
    L = B * HW
    Lh = B * HW4
    R = len(unet_params_list)

    # ---- per-repeat parameter prep (tiny, plain XLA) ----
    w1c, w2c, w3c, w4c = [], [], [], []
    b1a, b2a, b3a, b4a = [], [], [], []
    for p in unet_params_list:
        # tiny time-projection linears folded into per-(batch, channel) biases
        t1 = temb @ p["wt1"] + p["bt1"]                         # [B, C1]
        t2 = temb @ p["wt2"] + p["bt2"]                         # [B, C2]
        b1a.append(jnp.repeat((t1 + p["b1"]).T, HW, axis=1))    # [C1, L]
        b2a.append(jnp.repeat((t2 + p["b2"]).T, HW4, axis=1))   # [C2, Lh]
        b3a.append(p["b3"].reshape(C1, 1))
        b4a.append(p["b4"].reshape(IMG_C, 1))
        w1c.append(_im2col_weight(p["w1"], CIN_PAD))
        w2c.append(_im2col_weight(p["w2"]))
        w3c.append(_im2col_weight(p["w3"]))
        w4c.append(_im2col_weight(p["w4"]))
    w1c, w2c, w3c, w4c = map(jnp.stack, (w1c, w2c, w3c, w4c))
    b1a, b2a, b3a, b4a = map(jnp.stack, (b1a, b2a, b3a, b4a))

    # channels-first, batch folded into the lane axis: [CIN_PAD, B*HW]
    x_cf = ts_samples.transpose(3, 0, 1, 2).reshape(IMG_C, L)
    x_cf = jnp.pad(x_cf, ((0, CIN_PAD - IMG_C), (0, 0)))

    const = lambda r: (0, 0)
    per_r = lambda r: (r, 0, 0)

    kernel = functools.partial(_fused_unet_kernel, H, W, B)
    out = pl.pallas_call(
        kernel,
        out_shape=jax.ShapeDtypeStruct((R, IMG_C, L), jnp.float32),
        grid=(R,),
        in_specs=[
            pl.BlockSpec((CIN_PAD, L), const),             # x (shared by repeats)
            pl.BlockSpec((1, C1, L), per_r),               # bias1 (+ temb)
            pl.BlockSpec((1, C2, Lh), per_r),              # bias2 (+ temb)
            pl.BlockSpec((1, C1, 1), per_r),               # bias3
            pl.BlockSpec((1, IMG_C, 1), per_r),            # bias4
            pl.BlockSpec((1, C1, 9 * CIN_PAD), per_r),     # w1 im2col (bf16)
            pl.BlockSpec((1, C2, 9 * C1), per_r),          # w2 im2col
            pl.BlockSpec((1, C1, 9 * C2), per_r),          # w3 im2col
            pl.BlockSpec((1, IMG_C, 9 * C1), per_r),       # w4 im2col
            pl.BlockSpec((L, Lh), const),                  # block-diag pool
            pl.BlockSpec((Lh, L), const),                  # block-diag upsample
            pl.BlockSpec((9, L), const),                   # full-res tap masks
            pl.BlockSpec((9, Lh), const),                  # half-res tap masks
        ],
        out_specs=pl.BlockSpec((1, IMG_C, L), per_r),
        compiler_params=pltpu.CompilerParams(
            dimension_semantics=("parallel",)),            # repeats split on v7x TCs
    )(x_cf, b1a, b2a, b3a, b4a, w1c, w2c, w3c, w4c,
      sc["pool_bd"], sc["up_bd"], sc["mask_full"], sc["mask_half"])

    # [R, IMG_C, B*HW] -> [R, B, H, W, IMG_C]
    return out.reshape(R, IMG_C, B, H, W).transpose(0, 2, 3, 4, 1)


# ------------------------------- plain-JAX glue --------------------------------
def sinusoidal_time_embedding(time_steps, dim):
    """SinusoidalPosition1DEncoder with custom position ids = time step values.

    time_steps: [B] int -> returns [B, 1, dim] (caller squeezes axis 1)."""
    pos = time_steps.reshape(-1, 1).astype(jnp.float32)              # [B, 1]
    div = jnp.exp(
        jnp.arange(0, dim, 2, dtype=jnp.float32) * (-math.log(10000.0) / dim)
    )                                                                 # [dim/2]
    ang = pos * div[None, :]                                          # [B, dim/2]
    pe = jnp.zeros((pos.shape[0], 1, dim), jnp.float32)
    pe = pe.at[:, 0, 0::2].set(jnp.sin(ang))
    pe = pe.at[:, 0, 1::2].set(jnp.cos(ang))
    return pe


# ---------------------------- GeneralizedDiffusionHead -------------------------
class BaseDiffusionHeadOutput(NamedTuple):
    prediction_type: str
    predictions: jnp.ndarray


def generalized_diffusion_head_forward(
    params,
    ts_samples,
    time_steps,
    prediction_type="epsilon",
    return_series_outputs=False,
):
    # time_steps.reshape(-1, 1) -> sinusoidal embed -> squeeze(1) -> Identity proj
    temb = sinusoidal_time_embedding(time_steps, T_DIM)[:, 0, :]     # [B, T_DIM]
    # time_projector is nn.Identity()

    B, H, W, _ = ts_samples.shape
    sc = make_spatial_constants(H, W, B)

    # All repeats computed in one fused kernel: [n_repeat, B, H, W, 3]
    series = unet_series_forward(ts_samples, temb, params["unet"], sc)

    if return_series_outputs:
        predictions = series                              # [n_repeat, B, H, W, 3]
    else:
        predictions = series[-1][None]                    # last head, [1, B, H, W, 3]
    return BaseDiffusionHeadOutput(prediction_type=prediction_type,
                                   predictions=predictions)


# -------------------------------- param init -----------------------------------
def init_params(key, n_repeat=1):
    def conv_w(k, cin, cout):
        return jax.random.normal(k, (9, cin, cout), jnp.float32) / math.sqrt(9 * cin)

    def lin_w(k, din, dout):
        return jax.random.normal(k, (din, dout), jnp.float32) / math.sqrt(din)

    unets = []
    for r in range(n_repeat):
        ks = jax.random.split(jax.random.fold_in(key, r), 6)
        unets.append(dict(
            wt1=lin_w(ks[0], T_DIM, C1), bt1=jnp.zeros((1, C1), jnp.float32),
            wt2=lin_w(ks[1], T_DIM, C2), bt2=jnp.zeros((1, C2), jnp.float32),
            w1=conv_w(ks[2], IMG_C, C1), b1=jnp.zeros((1, C1), jnp.float32),
            w2=conv_w(ks[3], C1, C2),    b2=jnp.zeros((1, C2), jnp.float32),
            w3=conv_w(ks[4], C2, C1),    b3=jnp.zeros((1, C1), jnp.float32),
            w4=conv_w(ks[5], C1, IMG_C), b4=jnp.zeros((1, IMG_C), jnp.float32),
        ))
    return {"unet": unets}


# ----------------------------------- main ---------------------------------------
if __name__ == "__main__":
    key = jax.random.PRNGKey(0)
    k_x, k_p = jax.random.split(key)

    B, H, W = 2, 16, 16
    ts_samples = jax.random.normal(k_x, (B, H, W, IMG_C), jnp.float32)
    time_steps = jnp.array([3, 17], dtype=jnp.int32)      # [bs]

    params = init_params(k_p, n_repeat=1)

    out = generalized_diffusion_head_forward(params, ts_samples, time_steps)
    jax.block_until_ready(out.predictions)

    assert out.predictions.shape == (1, B, H, W, IMG_C)
    assert bool(jnp.all(jnp.isfinite(out.predictions)))
    std = float(jnp.std(out.predictions))
    assert 1e-3 < std < 1e3        # sanity: output is non-degenerate
    print("KERNEL_OK")
</pallas_src>

<mosaic_0001>
module attributes {stable_mosaic.version = 11 : i64} {
  func.func @_fused_unet_kernel(%arg0: i32, %arg1: memref<8x512xf32, #tpu.memory_space<vmem>>, %arg2: memref<1x16x512xf32, #tpu.memory_space<vmem>>, %arg3: memref<1x32x128xf32, #tpu.memory_space<vmem>>, %arg4: memref<1x16x1xf32, #tpu.memory_space<vmem>>, %arg5: memref<1x3x1xf32, #tpu.memory_space<vmem>>, %arg6: memref<1x16x72xbf16, #tpu.memory_space<vmem>>, %arg7: memref<1x32x144xbf16, #tpu.memory_space<vmem>>, %arg8: memref<1x16x288xbf16, #tpu.memory_space<vmem>>, %arg9: memref<1x3x144xbf16, #tpu.memory_space<vmem>>, %arg10: memref<512x128xbf16, #tpu.memory_space<vmem>>, %arg11: memref<128x512xbf16, #tpu.memory_space<vmem>>, %arg12: memref<9x512xf32, #tpu.memory_space<vmem>>, %arg13: memref<9x128xf32, #tpu.memory_space<vmem>>, %arg14: memref<1x3x512xf32, #tpu.memory_space<vmem>>) attributes {dimension_semantics = [#tpu.dimension_semantics<parallel>], iteration_bounds = array<i64: 1>, scalar_prefetch = 0 : i64, scratch_operands = 0 : i64, tpu.core_type = #tpu.core_type<tc>, window_params = [{pipeline_mode = #tpu.pipeline_mode<synchronous>, transform_indices = @transform_0, window_bounds = array<i64: 8, 512>}, {transform_indices = @transform_1, window_bounds = array<i64: 1, 16, 512>}, {transform_indices = @transform_2, window_bounds = array<i64: 1, 32, 128>}, {transform_indices = @transform_3, window_bounds = array<i64: 1, 16, 1>}, {transform_indices = @transform_4, window_bounds = array<i64: 1, 3, 1>}, {transform_indices = @transform_5, window_bounds = array<i64: 1, 16, 72>}, {transform_indices = @transform_6, window_bounds = array<i64: 1, 32, 144>}, {transform_indices = @transform_7, window_bounds = array<i64: 1, 16, 288>}, {transform_indices = @transform_8, window_bounds = array<i64: 1, 3, 144>}, {pipeline_mode = #tpu.pipeline_mode<synchronous>, transform_indices = @transform_9, window_bounds = array<i64: 512, 128>}, {pipeline_mode = #tpu.pipeline_mode<synchronous>, transform_indices = @transform_10, window_bounds = array<i64: 128, 512>}, {pipeline_mode = #tpu.pipeline_mode<synchronous>, transform_indices = @transform_11, window_bounds = array<i64: 9, 512>}, {pipeline_mode = #tpu.pipeline_mode<synchronous>, transform_indices = @transform_12, window_bounds = array<i64: 9, 128>}, {transform_indices = @transform_13, window_bounds = array<i64: 1, 3, 512>}]} {
    %c0 = arith.constant 0 : index
    %c0_0 = arith.constant 0 : index
    %0 = vector.load %arg1[%c0, %c0_0] : memref<8x512xf32, #tpu.memory_space<vmem>>, vector<8x512xf32>
    %c0_1 = arith.constant 0 : index
    %c0_2 = arith.constant 0 : index
    %c0_3 = arith.constant 0 : index
    %1 = vector.load %arg6[%c0_1, %c0_2, %c0_3] : memref<1x16x72xbf16, #tpu.memory_space<vmem>>, vector<1x16x72xbf16>
    %2 = vector.shape_cast %1 : vector<1x16x72xbf16> to vector<16x72xbf16>
    %c0_4 = arith.constant 0 : index
    %c0_5 = arith.constant 0 : index
    %c0_6 = arith.constant 0 : index
    %3 = vector.load %arg2[%c0_4, %c0_5, %c0_6] : memref<1x16x512xf32, #tpu.memory_space<vmem>>, vector<1x16x512xf32>
    %4 = vector.shape_cast %3 : vector<1x16x512xf32> to vector<16x512xf32>
    %c17_i32 = arith.constant 17 : i32
    %5 = tpu.dynamic_rotate %0 by %c17_i32 dim 1 : vector<8x512xf32>, i32 -> vector<8x512xf32>
    %c0_7 = arith.constant 0 : index
    %c0_8 = arith.constant 0 : index
    %6 = vector.load %arg12[%c0_7, %c0_8] : memref<9x512xf32, #tpu.memory_space<vmem>>, vector<1x512xf32>
    %7 = vector.broadcast %6 : vector<1x512xf32> to vector<8x512xf32>
    %8 = arith.mulf %5, %7 : vector<8x512xf32>
    %c16_i32 = arith.constant 16 : i32
    %9 = tpu.dynamic_rotate %0 by %c16_i32 dim 1 : vector<8x512xf32>, i32 -> vector<8x512xf32>
    %c1 = arith.constant 1 : index
    %c0_9 = arith.constant 0 : index
    %10 = vector.load %arg12[%c1, %c0_9] : memref<9x512xf32, #tpu.memory_space<vmem>>, vector<1x512xf32>
    %11 = vector.broadcast %10 : vector<1x512xf32> to vector<8x512xf32>
    %12 = arith.mulf %9, %11 : vector<8x512xf32>
    %c15_i32 = arith.constant 15 : i32
    %13 = tpu.dynamic_rotate %0 by %c15_i32 dim 1 : vector<8x512xf32>, i32 -> vector<8x512xf32>
    %c2 = arith.constant 2 : index
    %c0_10 = arith.constant 0 : index
    %14 = vector.load %arg12[%c2, %c0_10] : memref<9x512xf32, #tpu.memory_space<vmem>>, vector<1x512xf32>
    %15 = vector.broadcast %14 : vector<1x512xf32> to vector<8x512xf32>
    %16 = arith.mulf %13, %15 : vector<8x512xf32>
    %c1_i32 = arith.constant 1 : i32
    %17 = tpu.dynamic_rotate %0 by %c1_i32 dim 1 : vector<8x512xf32>, i32 -> vector<8x512xf32>
    %c3 = arith.constant 3 : index
    %c0_11 = arith.constant 0 : index
    %18 = vector.load %arg12[%c3, %c0_11] : memref<9x512xf32, #tpu.memory_space<vmem>>, vector<1x512xf32>
    %19 = vector.broadcast %18 : vector<1x512xf32> to vector<8x512xf32>
    %20 = arith.mulf %17, %19 : vector<8x512xf32>
    %c511_i32 = arith.constant 511 : i32
    %21 = tpu.dynamic_rotate %0 by %c511_i32 dim 1 : vector<8x512xf32>, i32 -> vector<8x512xf32>
    %c5 = arith.constant 5 : index
    %c0_12 = arith.constant 0 : index
    %22 = vector.load %arg12[%c5, %c0_12] : memref<9x512xf32, #tpu.memory_space<vmem>>, vector<1x512xf32>
    %23 = vector.broadcast %22 : vector<1x512xf32> to vector<8x512xf32>
    %24 = arith.mulf %21, %23 : vector<8x512xf32>
    %c497_i32 = arith.constant 497 : i32
    %25 = tpu.dynamic_rotate %0 by %c497_i32 dim 1 : vector<8x512xf32>, i32 -> vector<8x512xf32>
    %c6 = arith.constant 6 : index
    %c0_13 = arith.constant 0 : index
    %26 = vector.load %arg12[%c6, %c0_13] : memref<9x512xf32, #tpu.memory_space<vmem>>, vector<1x512xf32>
    %27 = vector.broadcast %26 : vector<1x512xf32> to vector<8x512xf32>
    %28 = arith.mulf %25, %27 : vector<8x512xf32>
    %c496_i32 = arith.constant 496 : i32
    %29 = tpu.dynamic_rotate %0 by %c496_i32 dim 1 : vector<8x512xf32>, i32 -> vector<8x512xf32>
    %c7 = arith.constant 7 : index
    %c0_14 = arith.constant 0 : index
    %30 = vector.load %arg12[%c7, %c0_14] : memref<9x512xf32, #tpu.memory_space<vmem>>, vector<1x512xf32>
    %31 = vector.broadcast %30 : vector<1x512xf32> to vector<8x512xf32>
    %32 = arith.mulf %29, %31 : vector<8x512xf32>
    %c495_i32 = arith.constant 495 : i32
    %33 = tpu.dynamic_rotate %0 by %c495_i32 dim 1 : vector<8x512xf32>, i32 -> vector<8x512xf32>
    %c8 = arith.constant 8 : index
    %c0_15 = arith.constant 0 : index
    %34 = vector.load %arg12[%c8, %c0_15] : memref<9x512xf32, #tpu.memory_space<vmem>>, vector<1x512xf32>
    %35 = vector.broadcast %34 : vector<1x512xf32> to vector<8x512xf32>
    %36 = arith.mulf %33, %35 : vector<8x512xf32>
    %37 = tpu.concatenate %8, %12, %16, %20, %0, %24, %28, %32, %36 in 0 : vector<8x512xf32>, vector<8x512xf32>, vector<8x512xf32>, vector<8x512xf32>, vector<8x512xf32>, vector<8x512xf32>, vector<8x512xf32>, vector<8x512xf32>, vector<8x512xf32> -> vector<72x512xf32>
    %38 = arith.truncf %37 : vector<72x512xf32> to vector<72x512xbf16>
    %cst = arith.constant dense<0.000000e+00> : vector<16x512xf32>
    %39 = tpu.matmul %2, %38, %cst {dimension_numbers = #tpu.dot_dimension_numbers<[1], [0], [0], [1], [0, 0, 1, 1], [], []>} : vector<16x72xbf16>, vector<72x512xbf16>, vector<16x512xf32> -> vector<16x512xf32>
    %40 = arith.addf %39, %4 : vector<16x512xf32>
    %41 = arith.negf %40 : vector<16x512xf32>
    %42 = math.exp %41 : vector<16x512xf32>
    %cst_16 = arith.constant 1.000000e+00 : f32
    %43 = vector.broadcast %cst_16 : f32 to vector<16x512xf32>
    %44 = arith.addf %43, %42 : vector<16x512xf32>
    %45 = arith.divf %43, %44 : vector<16x512xf32>
    %46 = arith.mulf %40, %45 : vector<16x512xf32>
    %47 = arith.truncf %46 : vector<16x512xf32> to vector<16x512xbf16>
    %c0_17 = arith.constant 0 : index
    %c0_18 = arith.constant 0 : index
    %48 = vector.load %arg10[%c0_17, %c0_18] : memref<512x128xbf16, #tpu.memory_space<vmem>>, vector<512x128xbf16>
    %cst_19 = arith.constant dense<0.000000e+00> : vector<16x128xf32>
    %49 = tpu.matmul %47, %48, %cst_19 {dimension_numbers = #tpu.dot_dimension_numbers<[1], [0], [0], [1], [0, 0, 1, 1], [], []>} : vector<16x512xbf16>, vector<512x128xbf16>, vector<16x128xf32> -> vector<16x128xf32>
    %c0_20 = arith.constant 0 : index
    %c0_21 = arith.constant 0 : index
    %c0_22 = arith.constant 0 : index
    %50 = vector.load %arg7[%c0_20, %c0_21, %c0_22] : memref<1x32x144xbf16, #tpu.memory_space<vmem>>, vector<1x32x144xbf16>
    %51 = vector.shape_cast %50 : vector<1x32x144xbf16> to vector<32x144xbf16>
    %c0_23 = arith.constant 0 : index
    %c0_24 = arith.constant 0 : index
    %c0_25 = arith.constant 0 : index
    %52 = vector.load %arg3[%c0_23, %c0_24, %c0_25] : memref<1x32x128xf32, #tpu.memory_space<vmem>>, vector<1x32x128xf32>
    %53 = vector.shape_cast %52 : vector<1x32x128xf32> to vector<32x128xf32>
    %c9_i32 = arith.constant 9 : i32
    %54 = tpu.dynamic_rotate %49 by %c9_i32 dim 1 : vector<16x128xf32>, i32 -> vector<16x128xf32>
    %c0_26 = arith.constant 0 : index
    %c0_27 = arith.constant 0 : index
    %55 = vector.load %arg13[%c0_26, %c0_27] : memref<9x128xf32, #tpu.memory_space<vmem>>, vector<1x128xf32>
    %56 = vector.broadcast %55 : vector<1x128xf32> to vector<16x128xf32>
    %57 = arith.mulf %54, %56 : vector<16x128xf32>
    %c8_i32 = arith.constant 8 : i32
    %58 = tpu.dynamic_rotate %49 by %c8_i32 dim 1 : vector<16x128xf32>, i32 -> vector<16x128xf32>
    %c1_28 = arith.constant 1 : index
    %c0_29 = arith.constant 0 : index
    %59 = vector.load %arg13[%c1_28, %c0_29] : memref<9x128xf32, #tpu.memory_space<vmem>>, vector<1x128xf32>
    %60 = vector.broadcast %59 : vector<1x128xf32> to vector<16x128xf32>
    %61 = arith.mulf %58, %60 : vector<16x128xf32>
    %c7_i32 = arith.constant 7 : i32
    %62 = tpu.dynamic_rotate %49 by %c7_i32 dim 1 : vector<16x128xf32>, i32 -> vector<16x128xf32>
    %c2_30 = arith.constant 2 : index
    %c0_31 = arith.constant 0 : index
    %63 = vector.load %arg13[%c2_30, %c0_31] : memref<9x128xf32, #tpu.memory_space<vmem>>, vector<1x128xf32>
    %64 = vector.broadcast %63 : vector<1x128xf32> to vector<16x128xf32>
    %65 = arith.mulf %62, %64 : vector<16x128xf32>
    %c1_i32_32 = arith.constant 1 : i32
    %66 = tpu.dynamic_rotate %49 by %c1_i32_32 dim 1 : vector<16x128xf32>, i32 -> vector<16x128xf32>
    %c3_33 = arith.constant 3 : index
    %c0_34 = arith.constant 0 : index
    %67 = vector.load %arg13[%c3_33, %c0_34] : memref<9x128xf32, #tpu.memory_space<vmem>>, vector<1x128xf32>
    %68 = vector.broadcast %67 : vector<1x128xf32> to vector<16x128xf32>
    %69 = arith.mulf %66, %68 : vector<16x128xf32>
    %c127_i32 = arith.constant 127 : i32
    %70 = tpu.dynamic_rotate %49 by %c127_i32 dim 1 : vector<16x128xf32>, i32 -> vector<16x128xf32>
    %c5_35 = arith.constant 5 : index
    %c0_36 = arith.constant 0 : index
    %71 = vector.load %arg13[%c5_35, %c0_36] : memref<9x128xf32, #tpu.memory_space<vmem>>, vector<1x128xf32>
    %72 = vector.broadcast %71 : vector<1x128xf32> to vector<16x128xf32>
    %73 = arith.mulf %70, %72 : vector<16x128xf32>
    %c121_i32 = arith.constant 121 : i32
    %74 = tpu.dynamic_rotate %49 by %c121_i32 dim 1 : vector<16x128xf32>, i32 -> vector<16x128xf32>
    %c6_37 = arith.constant 6 : index
    %c0_38 = arith.constant 0 : index
    %75 = vector.load %arg13[%c6_37, %c0_38] : memref<9x128xf32, #tpu.memory_space<vmem>>, vector<1x128xf32>
    %76 = vector.broadcast %75 : vector<1x128xf32> to vector<16x128xf32>
    %77 = arith.mulf %74, %76 : vector<16x128xf32>
    %c120_i32 = arith.constant 120 : i32
    %78 = tpu.dynamic_rotate %49 by %c120_i32 dim 1 : vector<16x128xf32>, i32 -> vector<16x128xf32>
    %c7_39 = arith.constant 7 : index
    %c0_40 = arith.constant 0 : index
    %79 = vector.load %arg13[%c7_39, %c0_40] : memref<9x128xf32, #tpu.memory_space<vmem>>, vector<1x128xf32>
    %80 = vector.broadcast %79 : vector<1x128xf32> to vector<16x128xf32>
    %81 = arith.mulf %78, %80 : vector<16x128xf32>
    %c119_i32 = arith.constant 119 : i32
    %82 = tpu.dynamic_rotate %49 by %c119_i32 dim 1 : vector<16x128xf32>, i32 -> vector<16x128xf32>
    %c8_41 = arith.constant 8 : index
    %c0_42 = arith.constant 0 : index
    %83 = vector.load %arg13[%c8_41, %c0_42] : memref<9x128xf32, #tpu.memory_space<vmem>>, vector<1x128xf32>
    %84 = vector.broadcast %83 : vector<1x128xf32> to vector<16x128xf32>
    %85 = arith.mulf %82, %84 : vector<16x128xf32>
    %86 = tpu.concatenate %57, %61, %65, %69, %49, %73, %77, %81, %85 in 0 : vector<16x128xf32>, vector<16x128xf32>, vector<16x128xf32>, vector<16x128xf32>, vector<16x128xf32>, vector<16x128xf32>, vector<16x128xf32>, vector<16x128xf32>, vector<16x128xf32> -> vector<144x128xf32>
    %87 = arith.truncf %86 : vector<144x128xf32> to vector<144x128xbf16>
    %cst_43 = arith.constant dense<0.000000e+00> : vector<32x128xf32>
    %88 = tpu.matmul %51, %87, %cst_43 {dimension_numbers = #tpu.dot_dimension_numbers<[1], [0], [0], [1], [0, 0, 1, 1], [], []>} : vector<32x144xbf16>, vector<144x128xbf16>, vector<32x128xf32> -> vector<32x128xf32>
    %89 = arith.addf %88, %53 : vector<32x128xf32>
    %90 = arith.negf %89 : vector<32x128xf32>
    %91 = math.exp %90 : vector<32x128xf32>
    %cst_44 = arith.constant 1.000000e+00 : f32
    %92 = vector.broadcast %cst_44 : f32 to vector<32x128xf32>
    %93 = arith.addf %92, %91 : vector<32x128xf32>
    %94 = arith.divf %92, %93 : vector<32x128xf32>
    %95 = arith.mulf %89, %94 : vector<32x128xf32>
    %96 = arith.truncf %95 : vector<32x128xf32> to vector<32x128xbf16>
    %c0_45 = arith.constant 0 : index
    %c0_46 = arith.constant 0 : index
    %97 = vector.load %arg11[%c0_45, %c0_46] : memref<128x512xbf16, #tpu.memory_space<vmem>>, vector<128x512xbf16>
    %cst_47 = arith.constant dense<0.000000e+00> : vector<32x512xf32>
    %98 = tpu.matmul %96, %97, %cst_47 {dimension_numbers = #tpu.dot_dimension_numbers<[1], [0], [0], [1], [0, 0, 1, 1], [], []>} : vector<32x128xbf16>, vector<128x512xbf16>, vector<32x512xf32> -> vector<32x512xf32>
    %c0_48 = arith.constant 0 : index
    %c0_49 = arith.constant 0 : index
    %c0_50 = arith.constant 0 : index
    %99 = vector.load %arg8[%c0_48, %c0_49, %c0_50] : memref<1x16x288xbf16, #tpu.memory_space<vmem>>, vector<1x16x288xbf16>
    %100 = vector.shape_cast %99 : vector<1x16x288xbf16> to vector<16x288xbf16>
    %c0_51 = arith.constant 0 : index
    %c0_52 = arith.constant 0 : index
    %c0_53 = arith.constant 0 : index
    %101 = vector.load %arg4[%c0_51, %c0_52, %c0_53] : memref<1x16x1xf32, #tpu.memory_space<vmem>>, vector<1x16x1xf32>
    %102 = vector.shape_cast %101 : vector<1x16x1xf32> to vector<16x1xf32>
    %c17_i32_54 = arith.constant 17 : i32
    %103 = tpu.dynamic_rotate %98 by %c17_i32_54 dim 1 : vector<32x512xf32>, i32 -> vector<32x512xf32>
    %c0_55 = arith.constant 0 : index
    %c0_56 = arith.constant 0 : index
    %104 = vector.load %arg12[%c0_55, %c0_56] : memref<9x512xf32, #tpu.memory_space<vmem>>, vector<1x512xf32>
    %105 = vector.broadcast %104 : vector<1x512xf32> to vector<32x512xf32>
    %106 = arith.mulf %103, %105 : vector<32x512xf32>
    %c16_i32_57 = arith.constant 16 : i32
    %107 = tpu.dynamic_rotate %98 by %c16_i32_57 dim 1 : vector<32x512xf32>, i32 -> vector<32x512xf32>
    %c1_58 = arith.constant 1 : index
    %c0_59 = arith.constant 0 : index
    %108 = vector.load %arg12[%c1_58, %c0_59] : memref<9x512xf32, #tpu.memory_space<vmem>>, vector<1x512xf32>
    %109 = vector.broadcast %108 : vector<1x512xf32> to vector<32x512xf32>
    %110 = arith.mulf %107, %109 : vector<32x512xf32>
    %c15_i32_60 = arith.constant 15 : i32
    %111 = tpu.dynamic_rotate %98 by %c15_i32_60 dim 1 : vector<32x512xf32>, i32 -> vector<32x512xf32>
    %c2_61 = arith.constant 2 : index
    %c0_62 = arith.constant 0 : index
    %112 = vector.load %arg12[%c2_61, %c0_62] : memref<9x512xf32, #tpu.memory_space<vmem>>, vector<1x512xf32>
    %113 = vector.broadcast %112 : vector<1x512xf32> to vector<32x512xf32>
    %114 = arith.mulf %111, %113 : vector<32x512xf32>
    %c1_i32_63 = arith.constant 1 : i32
    %115 = tpu.dynamic_rotate %98 by %c1_i32_63 dim 1 : vector<32x512xf32>, i32 -> vector<32x512xf32>
    %c3_64 = arith.constant 3 : index
    %c0_65 = arith.constant 0 : index
    %116 = vector.load %arg12[%c3_64, %c0_65] : memref<9x512xf32, #tpu.memory_space<vmem>>, vector<1x512xf32>
    %117 = vector.broadcast %116 : vector<1x512xf32> to vector<32x512xf32>
    %118 = arith.mulf %115, %117 : vector<32x512xf32>
    %c511_i32_66 = arith.constant 511 : i32
    %119 = tpu.dynamic_rotate %98 by %c511_i32_66 dim 1 : vector<32x512xf32>, i32 -> vector<32x512xf32>
    %c5_67 = arith.constant 5 : index
    %c0_68 = arith.constant 0 : index
    %120 = vector.load %arg12[%c5_67, %c0_68] : memref<9x512xf32, #tpu.memory_space<vmem>>, vector<1x512xf32>
    %121 = vector.broadcast %120 : vector<1x512xf32> to vector<32x512xf32>
    %122 = arith.mulf %119, %121 : vector<32x512xf32>
    %c497_i32_69 = arith.constant 497 : i32
    %123 = tpu.dynamic_rotate %98 by %c497_i32_69 dim 1 : vector<32x512xf32>, i32 -> vector<32x512xf32>
    %c6_70 = arith.constant 6 : index
    %c0_71 = arith.constant 0 : index
    %124 = vector.load %arg12[%c6_70, %c0_71] : memref<9x512xf32, #tpu.memory_space<vmem>>, vector<1x512xf32>
    %125 = vector.broadcast %124 : vector<1x512xf32> to vector<32x512xf32>
    %126 = arith.mulf %123, %125 : vector<32x512xf32>
    %c496_i32_72 = arith.constant 496 : i32
    %127 = tpu.dynamic_rotate %98 by %c496_i32_72 dim 1 : vector<32x512xf32>, i32 -> vector<32x512xf32>
    %c7_73 = arith.constant 7 : index
    %c0_74 = arith.constant 0 : index
    %128 = vector.load %arg12[%c7_73, %c0_74] : memref<9x512xf32, #tpu.memory_space<vmem>>, vector<1x512xf32>
    %129 = vector.broadcast %128 : vector<1x512xf32> to vector<32x512xf32>
    %130 = arith.mulf %127, %129 : vector<32x512xf32>
    %c495_i32_75 = arith.constant 495 : i32
    %131 = tpu.dynamic_rotate %98 by %c495_i32_75 dim 1 : vector<32x512xf32>, i32 -> vector<32x512xf32>
    %c8_76 = arith.constant 8 : index
    %c0_77 = arith.constant 0 : index
    %132 = vector.load %arg12[%c8_76, %c0_77] : memref<9x512xf32, #tpu.memory_space<vmem>>, vector<1x512xf32>
    %133 = vector.broadcast %132 : vector<1x512xf32> to vector<32x512xf32>
    %134 = arith.mulf %131, %133 : vector<32x512xf32>
    %135 = tpu.concatenate %106, %110, %114, %118, %98, %122, %126, %130, %134 in 0 : vector<32x512xf32>, vector<32x512xf32>, vector<32x512xf32>, vector<32x512xf32>, vector<32x512xf32>, vector<32x512xf32>, vector<32x512xf32>, vector<32x512xf32>, vector<32x512xf32> -> vector<288x512xf32>
    %136 = arith.truncf %135 : vector<288x512xf32> to vector<288x512xbf16>
    %cst_78 = arith.constant dense<0.000000e+00> : vector<16x512xf32>
    %137 = tpu.matmul %100, %136, %cst_78 {dimension_numbers = #tpu.dot_dimension_numbers<[1], [0], [0], [1], [0, 0, 1, 1], [], []>} : vector<16x288xbf16>, vector<288x512xbf16>, vector<16x512xf32> -> vector<16x512xf32>
    %138 = vector.broadcast %102 : vector<16x1xf32> to vector<16x512xf32>
    %139 = arith.addf %137, %138 : vector<16x512xf32>
    %140 = arith.negf %139 : vector<16x512xf32>
    %141 = math.exp %140 : vector<16x512xf32>
    %cst_79 = arith.constant 1.000000e+00 : f32
    %142 = vector.broadcast %cst_79 : f32 to vector<16x512xf32>
    %143 = arith.addf %142, %141 : vector<16x512xf32>
    %144 = arith.divf %142, %143 : vector<16x512xf32>
    %145 = arith.mulf %139, %144 : vector<16x512xf32>
    %146 = arith.addf %145, %46 : vector<16x512xf32>
    %c0_80 = arith.constant 0 : index
    %c0_81 = arith.constant 0 : index
    %c0_82 = arith.constant 0 : index
    %147 = vector.load %arg9[%c0_80, %c0_81, %c0_82] : memref<1x3x144xbf16, #tpu.memory_space<vmem>>, vector<1x3x144xbf16>
    %148 = vector.shape_cast %147 : vector<1x3x144xbf16> to vector<3x144xbf16>
    %c0_83 = arith.constant 0 : index
    %c0_84 = arith.constant 0 : index
    %c0_85 = arith.constant 0 : index
    %149 = vector.load %arg5[%c0_83, %c0_84, %c0_85] : memref<1x3x1xf32, #tpu.memory_space<vmem>>, vector<1x3x1xf32>
    %150 = vector.shape_cast %149 : vector<1x3x1xf32> to vector<3x1xf32>
    %c17_i32_86 = arith.constant 17 : i32
    %151 = tpu.dynamic_rotate %146 by %c17_i32_86 dim 1 : vector<16x512xf32>, i32 -> vector<16x512xf32>
    %c0_87 = arith.constant 0 : index
    %c0_88 = arith.constant 0 : index
    %152 = vector.load %arg12[%c0_87, %c0_88] : memref<9x512xf32, #tpu.memory_space<vmem>>, vector<1x512xf32>
    %153 = vector.broadcast %152 : vector<1x512xf32> to vector<16x512xf32>
    %154 = arith.mulf %151, %153 : vector<16x512xf32>
    %c16_i32_89 = arith.constant 16 : i32
    %155 = tpu.dynamic_rotate %146 by %c16_i32_89 dim 1 : vector<16x512xf32>, i32 -> vector<16x512xf32>
    %c1_90 = arith.constant 1 : index
    %c0_91 = arith.constant 0 : index
    %156 = vector.load %arg12[%c1_90, %c0_91] : memref<9x512xf32, #tpu.memory_space<vmem>>, vector<1x512xf32>
    %157 = vector.broadcast %156 : vector<1x512xf32> to vector<16x512xf32>
    %158 = arith.mulf %155, %157 : vector<16x512xf32>
    %c15_i32_92 = arith.constant 15 : i32
    %159 = tpu.dynamic_rotate %146 by %c15_i32_92 dim 1 : vector<16x512xf32>, i32 -> vector<16x512xf32>
    %c2_93 = arith.constant 2 : index
    %c0_94 = arith.constant 0 : index
    %160 = vector.load %arg12[%c2_93, %c0_94] : memref<9x512xf32, #tpu.memory_space<vmem>>, vector<1x512xf32>
    %161 = vector.broadcast %160 : vector<1x512xf32> to vector<16x512xf32>
    %162 = arith.mulf %159, %161 : vector<16x512xf32>
    %c1_i32_95 = arith.constant 1 : i32
    %163 = tpu.dynamic_rotate %146 by %c1_i32_95 dim 1 : vector<16x512xf32>, i32 -> vector<16x512xf32>
    %c3_96 = arith.constant 3 : index
    %c0_97 = arith.constant 0 : index
    %164 = vector.load %arg12[%c3_96, %c0_97] : memref<9x512xf32, #tpu.memory_space<vmem>>, vector<1x512xf32>
    %165 = vector.broadcast %164 : vector<1x512xf32> to vector<16x512xf32>
    %166 = arith.mulf %163, %165 : vector<16x512xf32>
    %c511_i32_98 = arith.constant 511 : i32
    %167 = tpu.dynamic_rotate %146 by %c511_i32_98 dim 1 : vector<16x512xf32>, i32 -> vector<16x512xf32>
    %c5_99 = arith.constant 5 : index
    %c0_100 = arith.constant 0 : index
    %168 = vector.load %arg12[%c5_99, %c0_100] : memref<9x512xf32, #tpu.memory_space<vmem>>, vector<1x512xf32>
    %169 = vector.broadcast %168 : vector<1x512xf32> to vector<16x512xf32>
    %170 = arith.mulf %167, %169 : vector<16x512xf32>
    %c497_i32_101 = arith.constant 497 : i32
    %171 = tpu.dynamic_rotate %146 by %c497_i32_101 dim 1 : vector<16x512xf32>, i32 -> vector<16x512xf32>
    %c6_102 = arith.constant 6 : index
    %c0_103 = arith.constant 0 : index
    %172 = vector.load %arg12[%c6_102, %c0_103] : memref<9x512xf32, #tpu.memory_space<vmem>>, vector<1x512xf32>
    %173 = vector.broadcast %172 : vector<1x512xf32> to vector<16x512xf32>
    %174 = arith.mulf %171, %173 : vector<16x512xf32>
    %c496_i32_104 = arith.constant 496 : i32
    %175 = tpu.dynamic_rotate %146 by %c496_i32_104 dim 1 : vector<16x512xf32>, i32 -> vector<16x512xf32>
    %c7_105 = arith.constant 7 : index
    %c0_106 = arith.constant 0 : index
    %176 = vector.load %arg12[%c7_105, %c0_106] : memref<9x512xf32, #tpu.memory_space<vmem>>, vector<1x512xf32>
    %177 = vector.broadcast %176 : vector<1x512xf32> to vector<16x512xf32>
    %178 = arith.mulf %175, %177 : vector<16x512xf32>
    %c495_i32_107 = arith.constant 495 : i32
    %179 = tpu.dynamic_rotate %146 by %c495_i32_107 dim 1 : vector<16x512xf32>, i32 -> vector<16x512xf32>
    %c8_108 = arith.constant 8 : index
    %c0_109 = arith.constant 0 : index
    %180 = vector.load %arg12[%c8_108, %c0_109] : memref<9x512xf32, #tpu.memory_space<vmem>>, vector<1x512xf32>
    %181 = vector.broadcast %180 : vector<1x512xf32> to vector<16x512xf32>
    %182 = arith.mulf %179, %181 : vector<16x512xf32>
    %183 = tpu.concatenate %154, %158, %162, %166, %146, %170, %174, %178, %182 in 0 : vector<16x512xf32>, vector<16x512xf32>, vector<16x512xf32>, vector<16x512xf32>, vector<16x512xf32>, vector<16x512xf32>, vector<16x512xf32>, vector<16x512xf32>, vector<16x512xf32> -> vector<144x512xf32>
    %184 = arith.truncf %183 : vector<144x512xf32> to vector<144x512xbf16>
    %cst_110 = arith.constant dense<0.000000e+00> : vector<3x512xf32>
    %185 = tpu.matmul %148, %184, %cst_110 {dimension_numbers = #tpu.dot_dimension_numbers<[1], [0], [0], [1], [0, 0, 1, 1], [], []>} : vector<3x144xbf16>, vector<144x512xbf16>, vector<3x512xf32> -> vector<3x512xf32>
    %186 = vector.broadcast %150 : vector<3x1xf32> to vector<3x512xf32>
    %187 = arith.addf %185, %186 : vector<3x512xf32>
    %c0_111 = arith.constant 0 : index
    %c0_112 = arith.constant 0 : index
    %c0_113 = arith.constant 0 : index
    %188 = vector.load %arg14[%c0_111, %c0_112, %c0_113] : memref<1x3x512xf32, #tpu.memory_space<vmem>>, vector<1x3x512xf32>
    %189 = vector.shape_cast %188 : vector<1x3x512xf32> to vector<3x512xf32>
    %190 = vector.shape_cast %187 : vector<3x512xf32> to vector<1x3x512xf32>
    tpu.vector_store %arg14[%c0_111, %c0_112, %c0_113], %190 {strides = array<i32>} : memref<1x3x512xf32, #tpu.memory_space<vmem>>, vector<1x3x512xf32>,
    return
  }
  func.func @transform_0(%arg0: i32) -> (i32, i32) {
    %c0_i32 = arith.constant 0 : i32
    %c0_i32_0 = arith.constant 0 : i32
    %c0_i32_1 = arith.constant 0 : i32
    return %c0_i32, %c0_i32_0 : i32, i32
  }
  func.func @transform_1(%arg0: i32) -> (i32, i32, i32) {
    %c0_i32 = arith.constant 0 : i32
    %c0_i32_0 = arith.constant 0 : i32
    %c0_i32_1 = arith.constant 0 : i32
    return %arg0, %c0_i32, %c0_i32_0 : i32, i32, i32
  }
  func.func @transform_2(%arg0: i32) -> (i32, i32, i32) {
    %c0_i32 = arith.constant 0 : i32
    %c0_i32_0 = arith.constant 0 : i32
    %c0_i32_1 = arith.constant 0 : i32
    return %arg0, %c0_i32, %c0_i32_0 : i32, i32, i32
  }
  func.func @transform_3(%arg0: i32) -> (i32, i32, i32) {
    %c0_i32 = arith.constant 0 : i32
    %c0_i32_0 = arith.constant 0 : i32
    %c0_i32_1 = arith.constant 0 : i32
    return %arg0, %c0_i32, %c0_i32_0 : i32, i32, i32
  }
  func.func @transform_4(%arg0: i32) -> (i32, i32, i32) {
    %c0_i32 = arith.constant 0 : i32
    %c0_i32_0 = arith.constant 0 : i32
    %c0_i32_1 = arith.constant 0 : i32
    return %arg0, %c0_i32, %c0_i32_0 : i32, i32, i32
  }
  func.func @transform_5(%arg0: i32) -> (i32, i32, i32) {
    %c0_i32 = arith.constant 0 : i32
    %c0_i32_0 = arith.constant 0 : i32
    %c0_i32_1 = arith.constant 0 : i32
    return %arg0, %c0_i32, %c0_i32_0 : i32, i32, i32
  }
  func.func @transform_6(%arg0: i32) -> (i32, i32, i32) {
    %c0_i32 = arith.constant 0 : i32
    %c0_i32_0 = arith.constant 0 : i32
    %c0_i32_1 = arith.constant 0 : i32
    return %arg0, %c0_i32, %c0_i32_0 : i32, i32, i32
  }
  func.func @transform_7(%arg0: i32) -> (i32, i32, i32) {
    %c0_i32 = arith.constant 0 : i32
    %c0_i32_0 = arith.constant 0 : i32
    %c0_i32_1 = arith.constant 0 : i32
    return %arg0, %c0_i32, %c0_i32_0 : i32, i32, i32
  }
  func.func @transform_8(%arg0: i32) -> (i32, i32, i32) {
    %c0_i32 = arith.constant 0 : i32
    %c0_i32_0 = arith.constant 0 : i32
    %c0_i32_1 = arith.constant 0 : i32
    return %arg0, %c0_i32, %c0_i32_0 : i32, i32, i32
  }
  func.func @transform_9(%arg0: i32) -> (i32, i32) {
    %c0_i32 = arith.constant 0 : i32
    %c0_i32_0 = arith.constant 0 : i32
    %c0_i32_1 = arith.constant 0 : i32
    return %c0_i32, %c0_i32_0 : i32, i32
  }
  func.func @transform_10(%arg0: i32) -> (i32, i32) {
    %c0_i32 = arith.constant 0 : i32
    %c0_i32_0 = arith.constant 0 : i32
    %c0_i32_1 = arith.constant 0 : i32
    return %c0_i32, %c0_i32_0 : i32, i32
  }
  func.func @transform_11(%arg0: i32) -> (i32, i32) {
    %c0_i32 = arith.constant 0 : i32
    %c0_i32_0 = arith.constant 0 : i32
    %c0_i32_1 = arith.constant 0 : i32
    return %c0_i32, %c0_i32_0 : i32, i32
  }
  func.func @transform_12(%arg0: i32) -> (i32, i32) {
    %c0_i32 = arith.constant 0 : i32
    %c0_i32_0 = arith.constant 0 : i32
    %c0_i32_1 = arith.constant 0 : i32
    return %c0_i32, %c0_i32_0 : i32, i32
  }
  func.func @transform_13(%arg0: i32) -> (i32, i32, i32) {
    %c0_i32 = arith.constant 0 : i32
    %c0_i32_0 = arith.constant 0 : i32
    %c0_i32_1 = arith.constant 0 : i32
    return %arg0, %c0_i32, %c0_i32_0 : i32, i32, i32
  }
}

</mosaic_0001>

<llo_original>
// kernel: tpu_custom_call.1
$region0: #{tpu_custom_call.1}
  #allocation0 [shape = 'u32[]', space=smem, size = 0x4, offset = 0x4, fixed_abs, tag = 'smem constant byte address 0x4 - core index']
  #allocation1 [shape = 'u32[144,128]{1,0:T(1,128)}', space=vmem, size = 0x12000, scoped, tag = 'internal scratch']
  %s0 = inlined_call_operand.hbm [shape: f32[8,512], index: 0, kind: input, shape index: {}]
  %s1 = inlined_call_operand.hbm [shape: f32[1,16,512], index: 1, kind: input, shape index: {}]
  %s2 = inlined_call_operand.hbm [shape: f32[1,32,128], index: 2, kind: input, shape index: {}]
  %s3 = inlined_call_operand.vmem [shape: f32[1,16,1], index: 3, kind: input, shape index: {}]
  %s4 = inlined_call_operand.vmem [shape: f32[1,3,1], index: 4, kind: input, shape index: {}]
  %s5 = inlined_call_operand.hbm [shape: bf16[1,16,72], index: 5, kind: input, shape index: {}]
  %s6 = inlined_call_operand.vmem [shape: bf16[1,32,144], index: 6, kind: input, shape index: {}]
  %s7 = inlined_call_operand.hbm [shape: bf16[1,16,288], index: 7, kind: input, shape index: {}]
  %s8 = inlined_call_operand.vmem [shape: bf16[1,3,144], index: 8, kind: input, shape index: {}]
  %s9 = inlined_call_operand.hbm [shape: bf16[512,128], index: 9, kind: input, shape index: {}]
  %s10 = inlined_call_operand.hbm [shape: bf16[128,512], index: 10, kind: input, shape index: {}]
  %s11 = inlined_call_operand.hbm [shape: f32[9,512], index: 11, kind: input, shape index: {}]
  %s12 = inlined_call_operand.vmem [shape: f32[9,128], index: 12, kind: input, shape index: {}]
  %s13 = inlined_call_operand.vmem [shape: f32[1,3,512], index: 13, kind: output, shape index: {}]
  %s14 = sld [smem:[#allocation0]]
  $region94: #{tpu_custom_call.1} parent=0
    _
  %s16 = ssub.s32 1, %s14
  %s17 = scalar_select 0, %s16, %s14
  $region1: #{tpu_custom_call.1} parent=0
    #allocation2 [shape = 'u8[16384]{0}', space=vmem, size = 0x4000, scoped, tag = 'input window, operand 0, single buffered']
    #allocation3 [shape = 's32[1]{0}', space=sflag, size = 0x4, scoped, tag = 'scoped memory for tpu_custom_call.1']
    #allocation4 [shape = 'u8[32768]{0}', space=vmem, size = 0x8000, scoped, tag = 'input window, operand 1, single buffered']
    #allocation5 [shape = 's32[1]{0}', space=sflag, size = 0x4, scoped, tag = 'scoped memory for tpu_custom_call.1']
    #allocation6 [shape = 'u8[16384]{0}', space=vmem, size = 0x4000, scoped, tag = 'input window, operand 2, single buffered']
    #allocation7 [shape = 'u8[4096]{0}', space=vmem, size = 0x1000, scoped, tag = 'input window, operand 5, single buffered']
    #allocation8 [shape = 's32[1]{0}', space=sflag, size = 0x4, scoped, tag = 'scoped memory for tpu_custom_call.1']
    #allocation9 [shape = 'u8[12288]{0}', space=vmem, size = 0x3000, scoped, tag = 'input window, operand 7, single buffered']
    #allocation10 [shape = 'u8[131072]{0}', space=vmem, size = 0x20000, scoped, tag = 'input window, operand 9, single buffered']
    #allocation11 [shape = 's32[1]{0}', space=sflag, size = 0x4, scoped, tag = 'scoped memory for tpu_custom_call.1']
    #allocation12 [shape = 'u8[131072]{0}', space=vmem, size = 0x20000, scoped, tag = 'input window, operand 10, single buffered']
    #allocation13 [shape = 'u8[32768]{0}', space=vmem, size = 0x8000, scoped, tag = 'input window, operand 11, single buffered']
    #allocation14 [shape = 's32[1]{0}', space=sflag, size = 0x4, scoped, tag = 'scoped memory for tpu_custom_call.1']
    %18 = vsyncpa [#allocation3], 0
    %19 = vsyncpa [#allocation5], 0
    %20 = vsyncpa [#allocation8], 0
    %21 = vsyncpa [#allocation11], 0
    %22 = vsyncpa [#allocation14], 0
    // Predicated region
    $region2: #{tpu_custom_call.1} parent=1 // pred_check
      _
    $region3: #{tpu_custom_call.1} parent=1 // pred_check_branch
      %24 = sbr.rel (0) target = $region5
    $region4: #{tpu_custom_call.1} parent=1 // pred_region
      %s26 = ssub.s32 512, 512
      %27 = vsyncadd [#allocation3], %s26
      %s29 = sshll.u32 [#allocation2], 4
      %s30 = int_to_ptr.vmem [resolvable:$true] %s29
      %32 = dma.hbm_to_vmem [thread:$0]  %s0, 512, %s30, [#allocation3]
    $region5: #{tpu_custom_call.1} parent=1 // pred_fallthru
      _
    // Predicated region
    $region6: #{tpu_custom_call.1} parent=1 // pred_check
      _
    $region7: #{tpu_custom_call.1} parent=1 // pred_check_branch
      %34 = sbr.rel (0) target = $region9
    $region8: #{tpu_custom_call.1} parent=1 // pred_region
      %s36 = ssub.s32 1024, 1024
      %37 = vsyncadd [#allocation5], %s36
      %s38 = sshll.u32 [#allocation4], 4
      %s39 = int_to_ptr.vmem [resolvable:$true] %s38
      %44 = dma.hbm_to_vmem [thread:$0]  %s1, 1024, %s39, [#allocation5], 512, 512, 32
    $region9: #{tpu_custom_call.1} parent=1 // pred_fallthru
      _
    // Predicated region
    $region10: #{tpu_custom_call.1} parent=1 // pred_check
      _
    $region11: #{tpu_custom_call.1} parent=1 // pred_check_branch
      %46 = sbr.rel (0) target = $region13
    $region12: #{tpu_custom_call.1} parent=1 // pred_region
      %s48 = ssub.s32 512, 512
      %49 = vsyncadd [#allocation5], %s48
      %s50 = sshll.u32 [#allocation6], 4
      %s51 = int_to_ptr.vmem [resolvable:$true] %s50
      %56 = dma.hbm_to_vmem [thread:$0]  %s2, 512, %s51, [#allocation5], 128, 128, 8
    $region13: #{tpu_custom_call.1} parent=1 // pred_fallthru
      _
    // Predicated region
    $region14: #{tpu_custom_call.1} parent=1 // pred_check
      _
    $region15: #{tpu_custom_call.1} parent=1 // pred_check_branch
      %58 = sbr.rel (0) target = $region17
    $region16: #{tpu_custom_call.1} parent=1 // pred_region
      _
    $region17: #{tpu_custom_call.1} parent=1 // pred_fallthru
      _
    // Predicated region
    $region18: #{tpu_custom_call.1} parent=1 // pred_check
      _
    $region19: #{tpu_custom_call.1} parent=1 // pred_check_branch
      %60 = sbr.rel (0) target = $region21
    $region20: #{tpu_custom_call.1} parent=1 // pred_region
      _
    $region21: #{tpu_custom_call.1} parent=1 // pred_fallthru
      _
    // Predicated region
    $region22: #{tpu_custom_call.1} parent=1 // pred_check
      _
    $region23: #{tpu_custom_call.1} parent=1 // pred_check_branch
      %62 = sbr.rel (0) target = $region25
    $region24: #{tpu_custom_call.1} parent=1 // pred_region
      %s64 = ssub.s32 128, 128
      %65 = vsyncadd [#allocation8], %s64
      %s66 = sshll.u32 [#allocation7], 4
      %s67 = int_to_ptr.vmem [resolvable:$true] %s66
      %72 = dma.hbm_to_vmem [thread:$0]  %s5, 128, %s67, [#allocation8], 64, 64, 4
    $region25: #{tpu_custom_call.1} parent=1 // pred_fallthru
      _
    // Predicated region
    $region26: #{tpu_custom_call.1} parent=1 // pred_check
      _
    $region27: #{tpu_custom_call.1} parent=1 // pred_check_branch
      %74 = sbr.rel (0) target = $region29
    $region28: #{tpu_custom_call.1} parent=1 // pred_region
      _
    $region29: #{tpu_custom_call.1} parent=1 // pred_fallthru
      _
    // Predicated region
    $region30: #{tpu_custom_call.1} parent=1 // pred_check
      _
    $region31: #{tpu_custom_call.1} parent=1 // pred_check_branch
      %76 = sbr.rel (0) target = $region33
    $region32: #{tpu_custom_call.1} parent=1 // pred_region
      %s78 = ssub.s32 384, 384
      %79 = vsyncadd [#allocation8], %s78
      %s80 = sshll.u32 [#allocation9], 4
      %s81 = int_to_ptr.vmem [resolvable:$true] %s80
      %86 = dma.hbm_to_vmem [thread:$0]  %s7, 384, %s81, [#allocation8], 192, 192, 12
    $region33: #{tpu_custom_call.1} parent=1 // pred_fallthru
      _
    // Predicated region
    $region34: #{tpu_custom_call.1} parent=1 // pred_check
      _
    $region35: #{tpu_custom_call.1} parent=1 // pred_check_branch
      %88 = sbr.rel (0) target = $region37
    $region36: #{tpu_custom_call.1} parent=1 // pred_region
      _
    $region37: #{tpu_custom_call.1} parent=1 // pred_fallthru
      _
    // Predicated region
    $region38: #{tpu_custom_call.1} parent=1 // pred_check
      _
    $region39: #{tpu_custom_call.1} parent=1 // pred_check_branch
      %90 = sbr.rel (0) target = $region41
    $region40: #{tpu_custom_call.1} parent=1 // pred_region
      %s92 = ssub.s32 4096, 4096
      %93 = vsyncadd [#allocation11], %s92
      %s94 = sshll.u32 [#allocation10], 4
      %s95 = int_to_ptr.vmem [resolvable:$true] %s94
      %100 = dma.hbm_to_vmem [thread:$0]  %s9, 4096, %s95, [#allocation11], 64, 64, 4
    $region41: #{tpu_custom_call.1} parent=1 // pred_fallthru
      _
    // Predicated region
    $region42: #{tpu_custom_call.1} parent=1 // pred_check
      _
    $region43: #{tpu_custom_call.1} parent=1 // pred_check_branch
      %102 = sbr.rel (0) target = $region45
    $region44: #{tpu_custom_call.1} parent=1 // pred_region
      %s104 = ssub.s32 4096, 4096
      %105 = vsyncadd [#allocation11], %s104
      %s106 = sshll.u32 [#allocation12], 4
      %s107 = int_to_ptr.vmem [resolvable:$true] %s106
      %112 = dma.hbm_to_vmem [thread:$0]  %s10, 4096, %s107, [#allocation11], 256, 256, 16
    $region45: #{tpu_custom_call.1} parent=1 // pred_fallthru
      _
    // Predicated region
    $region46: #{tpu_custom_call.1} parent=1 // pred_check
      _
    $region47: #{tpu_custom_call.1} parent=1 // pred_check_branch
      %114 = sbr.rel (0) target = $region49
    $region48: #{tpu_custom_call.1} parent=1 // pred_region
      %s116 = ssub.s32 1024, 1024
      %117 = vsyncadd [#allocation14], %s116
      %s118 = sshll.u32 [#allocation13], 4
      %s119 = int_to_ptr.vmem [resolvable:$true] %s118
      %124 = dma.hbm_to_vmem [thread:$0]  %s11, 1024, %s119, [#allocation14], 512, 512, 32
    $region49: #{tpu_custom_call.1} parent=1 // pred_fallthru
      _
    // Predicated region
    $region50: #{tpu_custom_call.1} parent=1 // pred_check
      _
    $region51: #{tpu_custom_call.1} parent=1 // pred_check_branch
      %126 = sbr.rel (0) target = $region53
    $region52: #{tpu_custom_call.1} parent=1 // pred_region
      _
    $region53: #{tpu_custom_call.1} parent=1 // pred_fallthru
      _
    // Predicated region
    $region54: #{tpu_custom_call.1} parent=1 // pred_check
      _
    $region55: #{tpu_custom_call.1} parent=1 // pred_check_branch
      %128 = sbr.rel (0) target = $region57
    $region56: #{tpu_custom_call.1} parent=1 // pred_region
      %129 = dma.done [#allocation3], 512
    $region57: #{tpu_custom_call.1} parent=1 // pred_fallthru
      _
    // Predicated region
    $region58: #{tpu_custom_call.1} parent=1 // pred_check
      _
    $region59: #{tpu_custom_call.1} parent=1 // pred_check_branch
      %131 = sbr.rel (0) target = $region61
    $region60: #{tpu_custom_call.1} parent=1 // pred_region
      %132 = dma.done [#allocation5], 1024
    $region61: #{tpu_custom_call.1} parent=1 // pred_fallthru
      _
    // Predicated region
    $region62: #{tpu_custom_call.1} parent=1 // pred_check
      _
    $region63: #{tpu_custom_call.1} parent=1 // pred_check_branch
      %134 = sbr.rel (0) target = $region65
    $region64: #{tpu_custom_call.1} parent=1 // pred_region
      %135 = dma.done [#allocation5], 512
    $region65: #{tpu_custom_call.1} parent=1 // pred_fallthru
      _
    // Predicated region
    $region66: #{tpu_custom_call.1} parent=1 // pred_check
      _
    $region67: #{tpu_custom_call.1} parent=1 // pred_check_branch
      %137 = sbr.rel (0) target = $region69
    $region68: #{tpu_custom_call.1} parent=1 // pred_region
      %138 = dma.done [#allocation8], 128
    $region69: #{tpu_custom_call.1} parent=1 // pred_fallthru
      _
    // Predicated region
    $region70: #{tpu_custom_call.1} parent=1 // pred_check
      _
    $region71: #{tpu_custom_call.1} parent=1 // pred_check_branch
      %140 = sbr.rel (0) target = $region73
    $region72: #{tpu_custom_call.1} parent=1 // pred_region
      %141 = dma.done [#allocation8], 384
    $region73: #{tpu_custom_call.1} parent=1 // pred_fallthru
      _
    // Predicated region
    $region74: #{tpu_custom_call.1} parent=1 // pred_check
      _
    $region75: #{tpu_custom_call.1} parent=1 // pred_check_branch
      %143 = sbr.rel (0) target = $region77
    $region76: #{tpu_custom_call.1} parent=1 // pred_region
      %144 = dma.done [#allocation11], 4096
    $region77: #{tpu_custom_call.1} parent=1 // pred_fallthru
      _
    // Predicated region
    $region78: #{tpu_custom_call.1} parent=1 // pred_check
      _
    $region79: #{tpu_custom_call.1} parent=1 // pred_check_branch
      %146 = sbr.rel (0) target = $region81
    $region80: #{tpu_custom_call.1} parent=1 // pred_region
      %147 = dma.done [#allocation11], 4096
    $region81: #{tpu_custom_call.1} parent=1 // pred_fallthru
      _
    // Predicated region
    $region82: #{tpu_custom_call.1} parent=1 // pred_check
      _
    $region83: #{tpu_custom_call.1} parent=1 // pred_check_branch
      %149 = sbr.rel (0) target = $region85
    $region84: #{tpu_custom_call.1} parent=1 // pred_region
      %150 = dma.done [#allocation14], 1024
    $region85: #{tpu_custom_call.1} parent=1 // pred_fallthru
      _
    %v152 = vld [vmem:[#allocation2] sm:$0xff]
    %v153 = vld [vmem:[#allocation2 + $0x8] sm:$0xff]
    %v154 = vld [vmem:[#allocation2 + $0x10] sm:$0xff]
    %v155 = vld [vmem:[#allocation2 + $0x18] sm:$0xff]
    %v156 = vld [vmem:[#allocation7] sm:$0xf]
    %v157 = vld [vmem:[#allocation7 + $0x4] sm:$0xf]
    %v158 = vld [vmem:[#allocation4] sm:$0xff]
    %v159 = vld [vmem:[#allocation4 + $0x8] sm:$0xff]
    %v160 = vld [vmem:[#allocation4 + $0x10] sm:$0xff]
    %v161 = vld [vmem:[#allocation4 + $0x18] sm:$0xff]
    %v162 = vld [vmem:[#allocation4 + $0x20] sm:$0xff]
    %v163 = vld [vmem:[#allocation4 + $0x28] sm:$0xff]
    %v164 = vld [vmem:[#allocation4 + $0x30] sm:$0xff]
    %v165 = vld [vmem:[#allocation4 + $0x38] sm:$0xff]
    %166 = vrot.lane.b32.xlu0 %v152, 17
    %v167 = vpop.permute.xlu0 %166
    %168 = vrot.lane.b32.xlu0 %v153, 17
    %v169 = vpop.permute.xlu0 %168
    %170 = vrot.lane.b32.xlu0 %v154, 17
    %v171 = vpop.permute.xlu0 %170
    %172 = vrot.lane.b32.xlu0 %v155, 17
    %v173 = vpop.permute.xlu0 %172
    %v174 = vlaneseq
    %v175 = vand.u32 %v174, 127
    %vm176 = vcmp.lt.s32.totalorder %v175, 17
    %v177 = vsel %vm176, %v171, %v173
    %v178 = vsel %vm176, %v169, %v171
    %v179 = vsel %vm176, %v167, %v169
    %v180 = vsel %vm176, %v173, %v167
    %v181 = vld [vmem:[#allocation13] ss:$8 sm:$0xf]
    %v183 = vlaneseq
    %v184 = vshrl.u32 %v183, 7
    %v185 = vsub.s32 0, %v184
    %v186 = vrot.slane %v181, %v185
    %v187 = vlaneseq
    %v188 = vshrl.u32 %v187, 7
    %v189 = vsub.s32 1, %v188
    %v190 = vrot.slane %v181, %v189
    %v191 = vlaneseq
    %v192 = vshrl.u32 %v191, 7
    %v193 = vsub.s32 2, %v192
    %v194 = vrot.slane %v181, %v193
    %v195 = vlaneseq
    %v196 = vshrl.u32 %v195, 7
    %v197 = vsub.s32 3, %v196
    %v198 = vrot.slane %v181, %v197
    %v203 = vmul.f32 %v180, %v186
    %v204 = vmul.f32 %v179, %v190
    %v205 = vmul.f32 %v178, %v194
    %v206 = vmul.f32 %v177, %v198
    %207 = vrot.lane.b32.xlu0 %v152, 16
    %v208 = vpop.permute.xlu0 %207
    %209 = vrot.lane.b32.xlu0 %v153, 16
    %v210 = vpop.permute.xlu0 %209
    %211 = vrot.lane.b32.xlu0 %v154, 16
    %v212 = vpop.permute.xlu0 %211
    %213 = vrot.lane.b32.xlu0 %v155, 16
    %v214 = vpop.permute.xlu0 %213
    %vm215 = vcmp.lt.s32.totalorder %v175, 16
    %v216 = vsel %vm215, %v212, %v214
    %v217 = vsel %vm215, %v210, %v212
    %v218 = vsel %vm215, %v208, %v210
    %v219 = vsel %vm215, %v214, %v208
    %s220 = scalar_lea.vmem [#allocation13], 1
    %v221 = vld [vmem:[%s220] ss:$8 sm:$0xf]
    %v223 = vlaneseq
    %v224 = vshrl.u32 %v223, 7
    %v225 = vsub.s32 0, %v224
    %v226 = vrot.slane %v221, %v225
    %v227 = vlaneseq
    %v228 = vshrl.u32 %v227, 7
    %v229 = vsub.s32 1, %v228
    %v230 = vrot.slane %v221, %v229
    %v231 = vlaneseq
    %v232 = vshrl.u32 %v231, 7
    %v233 = vsub.s32 2, %v232
    %v234 = vrot.slane %v221, %v233
    %v235 = vlaneseq
    %v236 = vshrl.u32 %v235, 7
    %v237 = vsub.s32 3, %v236
    %v238 = vrot.slane %v221, %v237
    %v243 = vmul.f32 %v219, %v226
    %v244 = vmul.f32 %v218, %v230
    %v245 = vmul.f32 %v217, %v234
    %v246 = vmul.f32 %v216, %v238
    %247 = vrot.lane.b32.xlu0 %v152, 15
    %v248 = vpop.permute.xlu0 %247
    %249 = vrot.lane.b32.xlu0 %v153, 15
    %v250 = vpop.permute.xlu0 %249
    %251 = vrot.lane.b32.xlu0 %v154, 15
    %v252 = vpop.permute.xlu0 %251
    %253 = vrot.lane.b32.xlu0 %v155, 15
    %v254 = vpop.permute.xlu0 %253
    %vm255 = vcmp.lt.s32.totalorder %v175, 15
    %v256 = vsel %vm255, %v252, %v254
    %v257 = vsel %vm255, %v250, %v252
    %v258 = vsel %vm255, %v248, %v250
    %v259 = vsel %vm255, %v254, %v248
    %s260 = scalar_lea.vmem [#allocation13], 2
    %v261 = vld [vmem:[%s260] ss:$8 sm:$0xf]
    %v263 = vlaneseq
    %v264 = vshrl.u32 %v263, 7
    %v265 = vsub.s32 0, %v264
    %v266 = vrot.slane %v261, %v265
    %v267 = vlaneseq
    %v268 = vshrl.u32 %v267, 7
    %v269 = vsub.s32 1, %v268
    %v270 = vrot.slane %v261, %v269
    %v271 = vlaneseq
    %v272 = vshrl.u32 %v271, 7
    %v273 = vsub.s32 2, %v272
    %v274 = vrot.slane %v261, %v273
    %v275 = vlaneseq
    %v276 = vshrl.u32 %v275, 7
    %v277 = vsub.s32 3, %v276
    %v278 = vrot.slane %v261, %v277
    %v283 = vmul.f32 %v259, %v266
    %v284 = vmul.f32 %v258, %v270
    %v285 = vmul.f32 %v257, %v274
    %v286 = vmul.f32 %v256, %v278
    %287 = vrot.lane.b32.xlu0 %v152, 1
    %v288 = vpop.permute.xlu0 %287
    %289 = vrot.lane.b32.xlu0 %v153, 1
    %v290 = vpop.permute.xlu0 %289
    %291 = vrot.lane.b32.xlu0 %v154, 1
    %v292 = vpop.permute.xlu0 %291
    %293 = vrot.lane.b32.xlu0 %v155, 1
    %v294 = vpop.permute.xlu0 %293
    %vm295 = vcmp.lt.s32.totalorder %v175, 1
    %v296 = vsel %vm295, %v292, %v294
    %v297 = vsel %vm295, %v290, %v292
    %v298 = vsel %vm295, %v288, %v290
    %v299 = vsel %vm295, %v294, %v288
    %s300 = scalar_lea.vmem [#allocation13], 3
    %v301 = vld [vmem:[%s300] ss:$8 sm:$0xf]
    %v303 = vlaneseq
    %v304 = vshrl.u32 %v303, 7
    %v305 = vsub.s32 0, %v304
    %v306 = vrot.slane %v301, %v305
    %v307 = vlaneseq
    %v308 = vshrl.u32 %v307, 7
    %v309 = vsub.s32 1, %v308
    %v310 = vrot.slane %v301, %v309
    %v311 = vlaneseq
    %v312 = vshrl.u32 %v311, 7
    %v313 = vsub.s32 2, %v312
    %v314 = vrot.slane %v301, %v313
    %v315 = vlaneseq
    %v316 = vshrl.u32 %v315, 7
    %v317 = vsub.s32 3, %v316
    %v318 = vrot.slane %v301, %v317
    %v323 = vmul.f32 %v299, %v306
    %v324 = vmul.f32 %v298, %v310
    %v325 = vmul.f32 %v297, %v314
    %v326 = vmul.f32 %v296, %v318
    %327 = vrot.lane.b32.xlu0 %v152, 127
    %v328 = vpop.permute.xlu0 %327
    %329 = vrot.lane.b32.xlu0 %v153, 127
    %v330 = vpop.permute.xlu0 %329
    %331 = vrot.lane.b32.xlu0 %v154, 127
    %v332 = vpop.permute.xlu0 %331
    %333 = vrot.lane.b32.xlu0 %v155, 127
    %v334 = vpop.permute.xlu0 %333
    %vm335 = vcmp.lt.s32.totalorder %v175, 127
    %v336 = vsel %vm335, %v332, %v334
    %v337 = vsel %vm335, %v330, %v332
    %v338 = vsel %vm335, %v328, %v330
    %v339 = vsel %vm335, %v334, %v328
    %s340 = scalar_lea.vmem [#allocation13], 5
    %v341 = vld [vmem:[%s340] ss:$8 sm:$0xf]
    %v343 = vlaneseq
    %v344 = vshrl.u32 %v343, 7
    %v345 = vsub.s32 0, %v344
    %v346 = vrot.slane %v341, %v345
    %v347 = vlaneseq
    %v348 = vshrl.u32 %v347, 7
    %v349 = vsub.s32 1, %v348
    %v350 = vrot.slane %v341, %v349
    %v351 = vlaneseq
    %v352 = vshrl.u32 %v351, 7
    %v353 = vsub.s32 2, %v352
    %v354 = vrot.slane %v341, %v353
    %v355 = vlaneseq
    %v356 = vshrl.u32 %v355, 7
    %v357 = vsub.s32 3, %v356
    %v358 = vrot.slane %v341, %v357
    %v363 = vmul.f32 %v338, %v346
    %v364 = vmul.f32 %v337, %v350
    %v365 = vmul.f32 %v336, %v354
    %v366 = vmul.f32 %v339, %v358
    %367 = vrot.lane.b32.xlu0 %v152, 113
    %v368 = vpop.permute.xlu0 %367
    %369 = vrot.lane.b32.xlu0 %v153, 113
    %v370 = vpop.permute.xlu0 %369
    %371 = vrot.lane.b32.xlu0 %v154, 113
    %v372 = vpop.permute.xlu0 %371
    %373 = vrot.lane.b32.xlu0 %v155, 113
    %v374 = vpop.permute.xlu0 %373
    %vm375 = vcmp.lt.s32.totalorder %v175, 113
    %v376 = vsel %vm375, %v372, %v374
    %v377 = vsel %vm375, %v370, %v372
    %v378 = vsel %vm375, %v368, %v370
    %v379 = vsel %vm375, %v374, %v368
    %s380 = scalar_lea.vmem [#allocation13], 6
    %v381 = vld [vmem:[%s380] ss:$8 sm:$0xf]
    %v383 = vlaneseq
    %v384 = vshrl.u32 %v383, 7
    %v385 = vsub.s32 0, %v384
    %v386 = vrot.slane %v381, %v385
    %v387 = vlaneseq
    %v388 = vshrl.u32 %v387, 7
    %v389 = vsub.s32 1, %v388
    %v390 = vrot.slane %v381, %v389
    %v391 = vlaneseq
    %v392 = vshrl.u32 %v391, 7
    %v393 = vsub.s32 2, %v392
    %v394 = vrot.slane %v381, %v393
    %v395 = vlaneseq
    %v396 = vshrl.u32 %v395, 7
    %v397 = vsub.s32 3, %v396
    %v398 = vrot.slane %v381, %v397
    %v403 = vmul.f32 %v378, %v386
    %v404 = vmul.f32 %v377, %v390
    %v405 = vmul.f32 %v376, %v394
    %v406 = vmul.f32 %v379, %v398
    %407 = vrot.lane.b32.xlu0 %v152, 112
    %v408 = vpop.permute.xlu0 %407
    %409 = vrot.lane.b32.xlu0 %v153, 112
    %v410 = vpop.permute.xlu0 %409
    %411 = vrot.lane.b32.xlu0 %v154, 112
    %v412 = vpop.permute.xlu0 %411
    %413 = vrot.lane.b32.xlu0 %v155, 112
    %v414 = vpop.permute.xlu0 %413
    %vm415 = vcmp.lt.s32.totalorder %v175, 112
    %v416 = vsel %vm415, %v412, %v414
    %v417 = vsel %vm415, %v410, %v412
    %v418 = vsel %vm415, %v408, %v410
    %v419 = vsel %vm415, %v414, %v408
    %s420 = scalar_lea.vmem [#allocation13], 7
    %v421 = vld [vmem:[%s420] ss:$8 sm:$0xf]
    %v423 = vlaneseq
    %v424 = vshrl.u32 %v423, 7
    %v425 = vsub.s32 0, %v424
    %v426 = vrot.slane %v421, %v425
    %v427 = vlaneseq
    %v428 = vshrl.u32 %v427, 7
    %v429 = vsub.s32 1, %v428
    %v430 = vrot.slane %v421, %v429
    %v431 = vlaneseq
    %v432 = vshrl.u32 %v431, 7
    %v433 = vsub.s32 2, %v432
    %v434 = vrot.slane %v421, %v433
    %v435 = vlaneseq
    %v436 = vshrl.u32 %v435, 7
    %v437 = vsub.s32 3, %v436
    %v438 = vrot.slane %v421, %v437
    %v443 = vmul.f32 %v418, %v426
    %v444 = vmul.f32 %v417, %v430
    %v445 = vmul.f32 %v416, %v434
    %v446 = vmul.f32 %v419, %v438
    %447 = vrot.lane.b32.xlu0 %v152, 111
    %v448 = vpop.permute.xlu0 %447
    %449 = vrot.lane.b32.xlu0 %v153, 111
    %v450 = vpop.permute.xlu0 %449
    %451 = vrot.lane.b32.xlu0 %v154, 111
    %v452 = vpop.permute.xlu0 %451
    %453 = vrot.lane.b32.xlu0 %v155, 111
    %v454 = vpop.permute.xlu0 %453
    %vm455 = vcmp.lt.s32.totalorder %v175, 111
    %v456 = vsel %vm455, %v452, %v454
    %v457 = vsel %vm455, %v450, %v452
    %v458 = vsel %vm455, %v448, %v450
    %v459 = vsel %vm455, %v454, %v448
    %s460 = scalar_lea.vmem [#allocation13], 32
    %v461 = vld [vmem:[%s460] ss:$8 sm:$0xf]
    %v463 = vlaneseq
    %v464 = vshrl.u32 %v463, 7
    %v465 = vsub.s32 0, %v464
    %v466 = vrot.slane %v461, %v465
    %v467 = vlaneseq
    %v468 = vshrl.u32 %v467, 7
    %v469 = vsub.s32 1, %v468
    %v470 = vrot.slane %v461, %v469
    %v471 = vlaneseq
    %v472 = vshrl.u32 %v471, 7
    %v473 = vsub.s32 2, %v472
    %v474 = vrot.slane %v461, %v473
    %v475 = vlaneseq
    %v476 = vshrl.u32 %v475, 7
    %v477 = vsub.s32 3, %v476
    %v478 = vrot.slane %v461, %v477
    %v483 = vmul.f32 %v458, %v466
    %v484 = vmul.f32 %v457, %v470
    %v485 = vmul.f32 %v456, %v474
    %v486 = vmul.f32 %v459, %v478
    %v487 = vpack.c.bf16 %v243, %v203
    %v488 = vpack.c.bf16 %v244, %v204
    %v489 = vpack.c.bf16 %v245, %v205
    %v490 = vpack.c.bf16 %v246, %v206
    %v491 = vpack.c.bf16 %v323, %v283
    %v492 = vpack.c.bf16 %v324, %v284
    %v493 = vpack.c.bf16 %v325, %v285
    %v494 = vpack.c.bf16 %v326, %v286
    %v495 = vpack.c.bf16 %v363, %v152
    %v496 = vpack.c.bf16 %v364, %v153
    %v497 = vpack.c.bf16 %v365, %v154
    %v498 = vpack.c.bf16 %v366, %v155
    %v499 = vpack.c.bf16 %v443, %v403
    %v500 = vpack.c.bf16 %v444, %v404
    %v501 = vpack.c.bf16 %v445, %v405
    %v502 = vpack.c.bf16 %v446, %v406
    %v503 = vpack.c.bf16 %v483, %v483
    %v504 = vpack.c.bf16 %v484, %v484
    %v505 = vpack.c.bf16 %v485, %v485
    %v506 = vpack.c.bf16 %v486, %v486
    %v509 = vunpack.c.l.b16 %v156
    %v510 = vunpack.c.l.b16 %v157
    %v511 = vpack.c.b16 %v510, %v509
    %vm512 = vcmask 588800
    %v514 = vsel %vm512, %v511, 0
    %vm516 = vcmask 1043456
    %v518 = vsel %vm516, %v503, 0
    %v521 = vsel %vm516, %v504, 0
    %v524 = vsel %vm516, %v505, 0
    %v527 = vsel %vm516, %v506, 0
    %529 = vmatprep.subr.bf16.mxu0 %v488
    %530 = vmatpush1.bf16.msra.mxu0 %v487
    %531 = vmatprep.subr.bf16.mxu0 %v492
    %532 = vmatpush1.bf16.msra.mxu0 %v491
    %533 = vmatprep.subr.bf16.mxu0 %v496
    %534 = vmatpush1.bf16.msra.mxu0 %v495
    %535 = vmatprep.subr.bf16.mxu0 %v500
    %536 = vmatpush1.bf16.msra.mxu0 %v499
    %537 = vmatprep.subr.bf16.mxu0 %v521
    %538 = vmatpush1.bf16.msra.mxu0 %v518
    %539 = vmatprep.subr.bf16.mxu0 0
    %540 = vmatpush1.bf16.msra.mxu0 0
    %541 = vmatprep.subr.bf16.mxu0 0
    %542 = vmatpush1.bf16.msra.mxu0 0
    %543 = vmatprep.subr.bf16.mxu0 0
    %544 = vmatpush1.bf16.msra.mxu0 0
    %545 = vmatprep.subr.bf16.mxu0 0
    %546 = vmatpush1.bf16.msra.mxu0 0
    %547 = vmatprep.subr.bf16.mxu0 0
    %548 = vmatpush1.bf16.msra.mxu0 0
    %549 = vmatprep.subr.bf16.mxu0 0
    %550 = vmatpush1.bf16.msra.mxu0 0
    %551 = vmatprep.subr.bf16.mxu0 0
    %552 = vmatpush1.bf16.msra.mxu0 0
    %553 = vmatprep.subr.bf16.mxu0 0
    %554 = vmatpush1.bf16.msra.mxu0 0
    %555 = vmatprep.subr.bf16.mxu0 0
    %556 = vmatpush1.bf16.msra.mxu0 0
    %557 = vmatprep.subr.bf16.mxu0 0
    %558 = vmatpush1.bf16.msra.mxu0 0
    %559 = vmatprep.subr.bf16.mxu0 0
    %560 = vmatpush1.bf16.msra.mxu0 0
    %561 = vmatprep.mubr.bf16.mxu0 0
    %562 = vmatmul.mubr.bf16.gmra.mrb[0].mxu0 %v514
    %v563 = vpop.f32.mrb[0].mxu0
    %v564 = vadd.f32 %v158, %v563
    %v565 = vpop.f32.mrb[0].mxu0
    %v566 = vadd.f32 %v159, %v565
    %v567 = vpop.f32.mrb[0].mxu0
    %v568 = vadd.f32 %v162, %v567
    %v569 = vpop.f32.mrb[0].mxu0
    %v570 = vadd.f32 %v163, %v569
    %571 = vdwg.mxu0
    %572 = vmatprep.subr.bf16.mxu0 %v490
    %573 = vmatpush1.bf16.msra.mxu0 %v489
    %574 = vmatprep.subr.bf16.mxu0 %v494
    %575 = vmatpush1.bf16.msra.mxu0 %v493
    %576 = vmatprep.subr.bf16.mxu0 %v498
    %577 = vmatpush1.bf16.msra.mxu0 %v497
    %578 = vmatprep.subr.bf16.mxu0 %v502
    %579 = vmatpush1.bf16.msra.mxu0 %v501
    %580 = vmatprep.subr.bf16.mxu0 %v527
    %581 = vmatpush1.bf16.msra.mxu0 %v524
    %582 = vmatprep.subr.bf16.mxu0 0
    %583 = vmatpush1.bf16.msra.mxu0 0
    %584 = vmatprep.subr.bf16.mxu0 0
    %585 = vmatpush1.bf16.msra.mxu0 0
    %586 = vmatprep.subr.bf16.mxu0 0
    %587 = vmatpush1.bf16.msra.mxu0 0
    %588 = vmatprep.subr.bf16.mxu0 0
    %589 = vmatpush1.bf16.msra.mxu0 0
    %590 = vmatprep.subr.bf16.mxu0 0
    %591 = vmatpush1.bf16.msra.mxu0 0
    %592 = vmatprep.subr.bf16.mxu0 0
    %593 = vmatpush1.bf16.msra.mxu0 0
    %594 = vmatprep.subr.bf16.mxu0 0
    %595 = vmatpush1.bf16.msra.mxu0 0
    %596 = vmatprep.subr.bf16.mxu0 0
    %597 = vmatpush1.bf16.msra.mxu0 0
    %598 = vmatprep.subr.bf16.mxu0 0
    %599 = vmatpush1.bf16.msra.mxu0 0
    %600 = vmatprep.subr.bf16.mxu0 0
    %601 = vmatpush1.bf16.msra.mxu0 0
    %602 = vmatprep.subr.bf16.mxu0 0
    %603 = vmatpush1.bf16.msra.mxu0 0
    %604 = vmatprep.mubr.bf16.mxu0 0
    %605 = vmatmul.mubr.bf16.gmra.mrb[0].mxu0 %v514
    %v606 = vpop.f32.mrb[0].mxu0
    %v607 = vadd.f32 %v160, %v606
    %v608 = vpop.f32.mrb[0].mxu0
    %v609 = vadd.f32 %v161, %v608
    %v610 = vpop.f32.mrb[0].mxu0
    %v611 = vadd.f32 %v164, %v610
    %v612 = vpop.f32.mrb[0].mxu0
    %v613 = vadd.f32 %v165, %v612
    %614 = vdwg.mxu0
    %v615 = vxor.u32 %v564, 2147483648
    %v616 = vxor.u32 %v566, 2147483648
    %v617 = vxor.u32 %v607, 2147483648
    %v618 = vxor.u32 %v609, 2147483648
    %v619 = vxor.u32 %v568, 2147483648
    %v620 = vxor.u32 %v570, 2147483648
    %v621 = vxor.u32 %v611, 2147483648
    %v622 = vxor.u32 %v613, 2147483648
    %v623 = vmul.f32 %v615, 1.442695
    %v624 = vpow.pop %v623
    %v625 = vmul.f32 %v616, 1.442695
    %v626 = vpow.pop %v625
    %v627 = vmul.f32 %v617, 1.442695
    %v628 = vpow.pop %v627
    %v629 = vmul.f32 %v618, 1.442695
    %v630 = vpow.pop %v629
    %v631 = vmul.f32 %v619, 1.442695
    %v632 = vpow.pop %v631
    %v633 = vmul.f32 %v620, 1.442695
    %v634 = vpow.pop %v633
    %v635 = vmul.f32 %v621, 1.442695
    %v636 = vpow.pop %v635
    %v637 = vmul.f32 %v622, 1.442695
    %v638 = vpow.pop %v637
    %v639 = vadd.f32 %v624, 1.0
    %v640 = vadd.f32 %v626, 1.0
    %v641 = vadd.f32 %v628, 1.0
    %v642 = vadd.f32 %v630, 1.0
    %v643 = vadd.f32 %v632, 1.0
    %v644 = vadd.f32 %v634, 1.0
    %v645 = vadd.f32 %v636, 1.0
    %v646 = vadd.f32 %v638, 1.0
    %v647 = vrcp.pop %v639
    %v648 = vmul.f32 1.0, %v647
    %v649 = vrcp.pop %v640
    %v650 = vmul.f32 1.0, %v649
    %v651 = vrcp.pop %v641
    %v652 = vmul.f32 1.0, %v651
    %v653 = vrcp.pop %v642
    %v654 = vmul.f32 1.0, %v653
    %v655 = vrcp.pop %v643
    %v656 = vmul.f32 1.0, %v655
    %v657 = vrcp.pop %v644
    %v658 = vmul.f32 1.0, %v657
    %v659 = vrcp.pop %v645
    %v660 = vmul.f32 1.0, %v659
    %v661 = vrcp.pop %v646
    %v662 = vmul.f32 1.0, %v661
    %v663 = vmul.f32 %v564, %v648
    %v664 = vmul.f32 %v566, %v650
    %v665 = vmul.f32 %v607, %v652
    %v666 = vmul.f32 %v609, %v654
    %v667 = vmul.f32 %v568, %v656
    %v668 = vmul.f32 %v570, %v658
    %v669 = vmul.f32 %v611, %v660
    %v670 = vmul.f32 %v613, %v662
    %v671 = vpack.c.bf16 %v667, %v663
    %v672 = vpack.c.bf16 %v668, %v664
    %v673 = vpack.c.bf16 %v669, %v665
    %v674 = vpack.c.bf16 %v670, %v666
    %v675 = vld [vmem:[#allocation10] sm:$0xf]
    %v676 = vld [vmem:[#allocation10 + $0x4] sm:$0xf]
    %v677 = vld [vmem:[#allocation10 + $0x8] sm:$0xf]
    %v678 = vld [vmem:[#allocation10 + $0xc] sm:$0xf]
    %v679 = vld [vmem:[#allocation10 + $0x10] sm:$0xf]
    %v680 = vld [vmem:[#allocation10 + $0x14] sm:$0xf]
    %v681 = vld [vmem:[#allocation10 + $0x18] sm:$0xf]
    %v682 = vld [vmem:[#allocation10 + $0x1c] sm:$0xf]
    %v683 = vld [vmem:[#allocation10 + $0x20] sm:$0xf]
    %v684 = vld [vmem:[#allocation10 + $0x24] sm:$0xf]
    %v685 = vld [vmem:[#allocation10 + $0x28] sm:$0xf]
    %v686 = vld [vmem:[#allocation10 + $0x2c] sm:$0xf]
    %v687 = vld [vmem:[#allocation10 + $0x30] sm:$0xf]
    %v688 = vld [vmem:[#allocation10 + $0x34] sm:$0xf]
    %v689 = vld [vmem:[#allocation10 + $0x38] sm:$0xf]
    %v690 = vld [vmem:[#allocation10 + $0x3c] sm:$0xf]
    %v691 = vld [vmem:[#allocation10 + $0x40] sm:$0xf]
    %v692 = vld [vmem:[#allocation10 + $0x44] sm:$0xf]
    %v693 = vld [vmem:[#allocation10 + $0x48] sm:$0xf]
    %v694 = vld [vmem:[#allocation10 + $0x4c] sm:$0xf]
    %v695 = vld [vmem:[#allocation10 + $0x50] sm:$0xf]
    %v696 = vld [vmem:[#allocation10 + $0x54] sm:$0xf]
    %v697 = vld [vmem:[#allocation10 + $0x58] sm:$0xf]
    %v698 = vld [vmem:[#allocation10 + $0x5c] sm:$0xf]
    %v699 = vld [vmem:[#allocation10 + $0x60] sm:$0xf]
    %v700 = vld [vmem:[#allocation10 + $0x64] sm:$0xf]
    %v701 = vld [vmem:[#allocation10 + $0x68] sm:$0xf]
    %v702 = vld [vmem:[#allocation10 + $0x6c] sm:$0xf]
    %v703 = vld [vmem:[#allocation10 + $0x70] sm:$0xf]
    %v704 = vld [vmem:[#allocation10 + $0x74] sm:$0xf]
    %v705 = vld [vmem:[#allocation10 + $0x78] sm:$0xf]
    %v706 = vld [vmem:[#allocation10 + $0x7c] sm:$0xf]
    %v707 = vld [vmem:[#allocation10 + $0x80] sm:$0xf]
    %v708 = vld [vmem:[#allocation10 + $0x84] sm:$0xf]
    %v709 = vld [vmem:[#allocation10 + $0x88] sm:$0xf]
    %v710 = vld [vmem:[#allocation10 + $0x8c] sm:$0xf]
    %v711 = vld [vmem:[#allocation10 + $0x90] sm:$0xf]
    %v712 = vld [vmem:[#allocation10 + $0x94] sm:$0xf]
    %v713 = vld [vmem:[#allocation10 + $0x98] sm:$0xf]
    %v714 = vld [vmem:[#allocation10 + $0x9c] sm:$0xf]
    %v715 = vld [vmem:[#allocation10 + $0xa0] sm:$0xf]
    %v716 = vld [vmem:[#allocation10 + $0xa4] sm:$0xf]
    %v717 = vld [vmem:[#allocation10 + $0xa8] sm:$0xf]
    %v718 = vld [vmem:[#allocation10 + $0xac] sm:$0xf]
    %v719 = vld [vmem:[#allocation10 + $0xb0] sm:$0xf]
    %v720 = vld [vmem:[#allocation10 + $0xb4] sm:$0xf]
    %v721 = vld [vmem:[#allocation10 + $0xb8] sm:$0xf]
    %v722 = vld [vmem:[#allocation10 + $0xbc] sm:$0xf]
    %v723 = vld [vmem:[#allocation10 + $0xc0] sm:$0xf]
    %v724 = vld [vmem:[#allocation10 + $0xc4] sm:$0xf]
    %v725 = vld [vmem:[#allocation10 + $0xc8] sm:$0xf]
    %v726 = vld [vmem:[#allocation10 + $0xcc] sm:$0xf]
    %v727 = vld [vmem:[#allocation10 + $0xd0] sm:$0xf]
    %v728 = vld [vmem:[#allocation10 + $0xd4] sm:$0xf]
    %v729 = vld [vmem:[#allocation10 + $0xd8] sm:$0xf]
    %v730 = vld [vmem:[#allocation10 + $0xdc] sm:$0xf]
    %v731 = vld [vmem:[#allocation10 + $0xe0] sm:$0xf]
    %v732 = vld [vmem:[#allocation10 + $0xe4] sm:$0xf]
    %v733 = vld [vmem:[#allocation10 + $0xe8] sm:$0xf]
    %v734 = vld [vmem:[#allocation10 + $0xec] sm:$0xf]
    %v735 = vld [vmem:[#allocation10 + $0xf0] sm:$0xf]
    %v736 = vld [vmem:[#allocation10 + $0xf4] sm:$0xf]
    %v737 = vld [vmem:[#allocation10 + $0xf8] sm:$0xf]
    %v738 = vld [vmem:[#allocation10 + $0xfc] sm:$0xf]
    %v803 = vunpack.c.l.b16 %v675
    %v804 = vunpack.c.l.b16 %v676
    %v805 = vunpack.c.l.b16 %v677
    %v806 = vunpack.c.l.b16 %v678
    %v807 = vunpack.c.l.b16 %v679
    %v808 = vunpack.c.l.b16 %v680
    %v809 = vunpack.c.l.b16 %v681
    %v810 = vunpack.c.l.b16 %v682
    %v811 = vunpack.c.l.b16 %v683
    %v812 = vunpack.c.l.b16 %v684
    %v813 = vunpack.c.l.b16 %v685
    %v814 = vunpack.c.l.b16 %v686
    %v815 = vunpack.c.l.b16 %v687
    %v816 = vunpack.c.l.b16 %v688
    %v817 = vunpack.c.l.b16 %v689
    %v818 = vunpack.c.l.b16 %v690
    %v819 = vunpack.c.l.b16 %v691
    %v820 = vunpack.c.l.b16 %v692
    %v821 = vunpack.c.l.b16 %v693
    %v822 = vunpack.c.l.b16 %v694
    %v823 = vunpack.c.l.b16 %v695
    %v824 = vunpack.c.l.b16 %v696
    %v825 = vunpack.c.l.b16 %v697
    %v826 = vunpack.c.l.b16 %v698
    %v827 = vunpack.c.l.b16 %v699
    %v828 = vunpack.c.l.b16 %v700
    %v829 = vunpack.c.l.b16 %v701
    %v830 = vunpack.c.l.b16 %v702
    %v831 = vunpack.c.l.b16 %v703
    %v832 = vunpack.c.l.b16 %v704
    %v833 = vunpack.c.l.b16 %v705
    %v834 = vunpack.c.l.b16 %v706
    %v835 = vunpack.c.l.b16 %v707
    %v836 = vunpack.c.l.b16 %v708
    %v837 = vunpack.c.l.b16 %v709
    %v838 = vunpack.c.l.b16 %v710
    %v839 = vunpack.c.l.b16 %v711
    %v840 = vunpack.c.l.b16 %v712
    %v841 = vunpack.c.l.b16 %v713
    %v842 = vunpack.c.l.b16 %v714
    %v843 = vunpack.c.l.b16 %v715
    %v844 = vunpack.c.l.b16 %v716
    %v845 = vunpack.c.l.b16 %v717
    %v846 = vunpack.c.l.b16 %v718
    %v847 = vunpack.c.l.b16 %v719
    %v848 = vunpack.c.l.b16 %v720
    %v849 = vunpack.c.l.b16 %v721
    %v850 = vunpack.c.l.b16 %v722
    %v851 = vunpack.c.l.b16 %v723
    %v852 = vunpack.c.l.b16 %v724
    %v853 = vunpack.c.l.b16 %v725
    %v854 = vunpack.c.l.b16 %v726
    %v855 = vunpack.c.l.b16 %v727
    %v856 = vunpack.c.l.b16 %v728
    %v857 = vunpack.c.l.b16 %v729
    %v858 = vunpack.c.l.b16 %v730
    %v859 = vunpack.c.l.b16 %v731
    %v860 = vunpack.c.l.b16 %v732
    %v861 = vunpack.c.l.b16 %v733
    %v862 = vunpack.c.l.b16 %v734
    %v863 = vunpack.c.l.b16 %v735
    %v864 = vunpack.c.l.b16 %v736
    %v865 = vunpack.c.l.b16 %v737
    %v866 = vunpack.c.l.b16 %v738
    %v867 = vpack.c.b16 %v804, %v803
    %v868 = vpack.c.b16 %v806, %v805
    %v869 = vpack.c.b16 %v808, %v807
    %v870 = vpack.c.b16 %v810, %v809
    %v871 = vpack.c.b16 %v812, %v811
    %v872 = vpack.c.b16 %v814, %v813
    %v873 = vpack.c.b16 %v816, %v815
    %v874 = vpack.c.b16 %v818, %v817
    %v875 = vpack.c.b16 %v820, %v819
    %v876 = vpack.c.b16 %v822, %v821
    %v877 = vpack.c.b16 %v824, %v823
    %v878 = vpack.c.b16 %v826, %v825
    %v879 = vpack.c.b16 %v828, %v827
    %v880 = vpack.c.b16 %v830, %v829
    %v881 = vpack.c.b16 %v832, %v831
    %v882 = vpack.c.b16 %v834, %v833
    %v883 = vpack.c.b16 %v836, %v835
    %v884 = vpack.c.b16 %v838, %v837
    %v885 = vpack.c.b16 %v840, %v839
    %v886 = vpack.c.b16 %v842, %v841
    %v887 = vpack.c.b16 %v844, %v843
    %v888 = vpack.c.b16 %v846, %v845
    %v889 = vpack.c.b16 %v848, %v847
    %v890 = vpack.c.b16 %v850, %v849
    %v891 = vpack.c.b16 %v852, %v851
    %v892 = vpack.c.b16 %v854, %v853
    %v893 = vpack.c.b16 %v856, %v855
    %v894 = vpack.c.b16 %v858, %v857
    %v895 = vpack.c.b16 %v860, %v859
    %v896 = vpack.c.b16 %v862, %v861
    %v897 = vpack.c.b16 %v864, %v863
    %v898 = vpack.c.b16 %v866, %v865
    %931 = vmatprep.subr.bf16.mxu0 0
    %932 = vmatpush1.bf16.msra.mxu0 %v867
    %933 = vmatprep.subr.bf16.mxu0 0
    %934 = vmatpush1.bf16.msra.mxu0 %v868
    %935 = vmatprep.subr.bf16.mxu0 0
    %936 = vmatpush1.bf16.msra.mxu0 %v869
    %937 = vmatprep.subr.bf16.mxu0 0
    %938 = vmatpush1.bf16.msra.mxu0 %v870
    %939 = vmatprep.subr.bf16.mxu0 0
    %940 = vmatpush1.bf16.msra.mxu0 %v871
    %941 = vmatprep.subr.bf16.mxu0 0
    %942 = vmatpush1.bf16.msra.mxu0 %v872
    %943 = vmatprep.subr.bf16.mxu0 0
    %944 = vmatpush1.bf16.msra.mxu0 %v873
    %945 = vmatprep.subr.bf16.mxu0 0
    %946 = vmatpush1.bf16.msra.mxu0 %v874
    %947 = vmatprep.subr.bf16.mxu0 0
    %948 = vmatpush1.bf16.msra.mxu0 %v875
    %949 = vmatprep.subr.bf16.mxu0 0
    %950 = vmatpush1.bf16.msra.mxu0 %v876
    %951 = vmatprep.subr.bf16.mxu0 0
    %952 = vmatpush1.bf16.msra.mxu0 %v877
    %953 = vmatprep.subr.bf16.mxu0 0
    %954 = vmatpush1.bf16.msra.mxu0 %v878
    %955 = vmatprep.subr.bf16.mxu0 0
    %956 = vmatpush1.bf16.msra.mxu0 %v879
    %957 = vmatprep.subr.bf16.mxu0 0
    %958 = vmatpush1.bf16.msra.mxu0 %v880
    %959 = vmatprep.subr.bf16.mxu0 0
    %960 = vmatpush1.bf16.msra.mxu0 %v881
    %961 = vmatprep.subr.bf16.mxu0 0
    %962 = vmatpush1.bf16.msra.mxu0 %v882
    %963 = vmatprep.mubr.bf16.mxu0 %v672
    %964 = vmatmul.mubr.bf16.gmra.mrb[0].mxu0 %v671
    %v965 = vpop.f32.mrb[0].mxu0
    %v966 = vadd.f32 0.0, %v965
    %v967 = vpop.f32.mrb[0].mxu0
    %v968 = vpop.f32.mrb[0].mxu0
    %v969 = vadd.f32 0.0, %v968
    %v970 = vpop.f32.mrb[0].mxu0
    %971 = vdwg.mxu0
    %972 = vmatprep.subr.bf16.mxu0 0
    %973 = vmatpush1.bf16.msra.mxu0 %v883
    %974 = vmatprep.subr.bf16.mxu0 0
    %975 = vmatpush1.bf16.msra.mxu0 %v884
    %976 = vmatprep.subr.bf16.mxu0 0
    %977 = vmatpush1.bf16.msra.mxu0 %v885
    %978 = vmatprep.subr.bf16.mxu0 0
    %979 = vmatpush1.bf16.msra.mxu0 %v886
    %980 = vmatprep.subr.bf16.mxu0 0
    %981 = vmatpush1.bf16.msra.mxu0 %v887
    %982 = vmatprep.subr.bf16.mxu0 0
    %983 = vmatpush1.bf16.msra.mxu0 %v888
    %984 = vmatprep.subr.bf16.mxu0 0
    %985 = vmatpush1.bf16.msra.mxu0 %v889
    %986 = vmatprep.subr.bf16.mxu0 0
    %987 = vmatpush1.bf16.msra.mxu0 %v890
    %988 = vmatprep.subr.bf16.mxu0 0
    %989 = vmatpush1.bf16.msra.mxu0 %v891
    %990 = vmatprep.subr.bf16.mxu0 0
    %991 = vmatpush1.bf16.msra.mxu0 %v892
    %992 = vmatprep.subr.bf16.mxu0 0
    %993 = vmatpush1.bf16.msra.mxu0 %v893
    %994 = vmatprep.subr.bf16.mxu0 0
    %995 = vmatpush1.bf16.msra.mxu0 %v894
    %996 = vmatprep.subr.bf16.mxu0 0
    %997 = vmatpush1.bf16.msra.mxu0 %v895
    %998 = vmatprep.subr.bf16.mxu0 0
    %999 = vmatpush1.bf16.msra.mxu0 %v896
    %1000 = vmatprep.subr.bf16.mxu0 0
    %1001 = vmatpush1.bf16.msra.mxu0 %v897
    %1002 = vmatprep.subr.bf16.mxu0 0
    %1003 = vmatpush1.bf16.msra.mxu0 %v898
    %1004 = vmatprep.mubr.bf16.mxu0 %v674
    %1005 = vmatmul.mubr.bf16.gmra.mrb[0].mxu0 %v673
    %v1006 = vpop.f32.mrb[0].mxu0
    %v1007 = vadd.f32 %v966, %v1006
    %v1008 = vpop.f32.mrb[0].mxu0
    %v1009 = vpop.f32.mrb[0].mxu0
    %v1010 = vadd.f32 %v969, %v1009
    %v1011 = vpop.f32.mrb[0].mxu0
    %1012 = vdwg.mxu0
    %v1013 = vld [vmem:[%s6] sm:$0xff]
    %v1014 = vld [vmem:[%s6 + $0x8] sm:$0xff]
    %v1015 = vld [vmem:[%s6 + $0x10] sm:$0xff]
    %v1016 = vld [vmem:[%s6 + $0x18] sm:$0xff]
    %v1017 = vld [vmem:[#allocation6] sm:$0xff]
    %v1018 = vld [vmem:[#allocation6 + $0x8] sm:$0xff]
    %v1019 = vld [vmem:[#allocation6 + $0x10] sm:$0xff]
    %v1020 = vld [vmem:[#allocation6 + $0x18] sm:$0xff]
    %1021 = vrot.lane.b32.xlu0 %v1007, 9
    %v1022 = vpop.permute.xlu0 %1021
    %1023 = vrot.lane.b32.xlu0 %v1010, 9
    %v1024 = vpop.permute.xlu0 %1023
    %v1025 = vld [vmem:[%s12] sm:$0x1]
    %v1026 = vlaneseq
    %v1027 = vshrl.u32 %v1026, 7
    %v1028 = vsub.s32 0, %v1027
    %v1029 = vrot.slane %v1025, %v1028
    %v1030 = vmul.f32 %v1022, %v1029
    %v1031 = vmul.f32 %v1024, %v1029
    %1032 = vrot.lane.b32.xlu0 %v1007, 8
    %v1033 = vpop.permute.xlu0 %1032
    %1034 = vrot.lane.b32.xlu0 %v1010, 8
    %v1035 = vpop.permute.xlu0 %1034
    %v1036 = vld [vmem:[%s12 + $0x1] sm:$0x1]
    %v1037 = vlaneseq
    %v1038 = vshrl.u32 %v1037, 7
    %v1039 = vsub.s32 0, %v1038
    %v1040 = vrot.slane %v1036, %v1039
    %v1041 = vmul.f32 %v1033, %v1040
    %v1042 = vmul.f32 %v1035, %v1040
    %1043 = vrot.lane.b32.xlu0 %v1007, 7
    %v1044 = vpop.permute.xlu0 %1043
    %1045 = vrot.lane.b32.xlu0 %v1010, 7
    %v1046 = vpop.permute.xlu0 %1045
    %v1047 = vld [vmem:[%s12 + $0x2] sm:$0x1]
    %v1048 = vlaneseq
    %v1049 = vshrl.u32 %v1048, 7
    %v1050 = vsub.s32 0, %v1049
    %v1051 = vrot.slane %v1047, %v1050
    %v1052 = vmul.f32 %v1044, %v1051
    %v1053 = vmul.f32 %v1046, %v1051
    %1054 = vrot.lane.b32.xlu0 %v1007, 1
    %v1055 = vpop.permute.xlu0 %1054
    %1056 = vrot.lane.b32.xlu0 %v1010, 1
    %v1057 = vpop.permute.xlu0 %1056
    %v1058 = vld [vmem:[%s12 + $0x3] sm:$0x1]
    %v1059 = vlaneseq
    %v1060 = vshrl.u32 %v1059, 7
    %v1061 = vsub.s32 0, %v1060
    %v1062 = vrot.slane %v1058, %v1061
    %v1063 = vmul.f32 %v1055, %v1062
    %v1064 = vmul.f32 %v1057, %v1062
    %1065 = vrot.lane.b32.xlu0 %v1007, 127
    %v1066 = vpop.permute.xlu0 %1065
    %1067 = vrot.lane.b32.xlu0 %v1010, 127
    %v1068 = vpop.permute.xlu0 %1067
    %v1069 = vld [vmem:[%s12 + $0x5] sm:$0x1]
    %v1070 = vlaneseq
    %v1071 = vshrl.u32 %v1070, 7
    %v1072 = vsub.s32 0, %v1071
    %v1073 = vrot.slane %v1069, %v1072
    %v1074 = vmul.f32 %v1066, %v1073
    %v1075 = vmul.f32 %v1068, %v1073
    %1076 = vrot.lane.b32.xlu0 %v1007, 121
    %v1077 = vpop.permute.xlu0 %1076
    %1078 = vrot.lane.b32.xlu0 %v1010, 121
    %v1079 = vpop.permute.xlu0 %1078
    %v1080 = vld [vmem:[%s12 + $0x6] sm:$0x1]
    %v1081 = vlaneseq
    %v1082 = vshrl.u32 %v1081, 7
    %v1083 = vsub.s32 0, %v1082
    %v1084 = vrot.slane %v1080, %v1083
    %v1085 = vmul.f32 %v1077, %v1084
    %v1086 = vmul.f32 %v1079, %v1084
    %1087 = vrot.lane.b32.xlu0 %v1007, 120
    %v1088 = vpop.permute.xlu0 %1087
    %1089 = vrot.lane.b32.xlu0 %v1010, 120
    %v1090 = vpop.permute.xlu0 %1089
    %v1091 = vld [vmem:[%s12 + $0x7] sm:$0x1]
    %v1092 = vlaneseq
    %v1093 = vshrl.u32 %v1092, 7
    %v1094 = vsub.s32 0, %v1093
    %v1095 = vrot.slane %v1091, %v1094
    %v1096 = vmul.f32 %v1088, %v1095
    %v1097 = vmul.f32 %v1090, %v1095
    %1098 = vrot.lane.b32.xlu0 %v1007, 119
    %v1099 = vpop.permute.xlu0 %1098
    %1100 = vrot.lane.b32.xlu0 %v1010, 119
    %v1101 = vpop.permute.xlu0 %1100
    %v1102 = vld [vmem:[%s12 + $0x8] sm:$0x1]
    %v1103 = vlaneseq
    %v1104 = vshrl.u32 %v1103, 7
    %v1105 = vsub.s32 0, %v1104
    %v1106 = vrot.slane %v1102, %v1105
    %v1107 = vmul.f32 %v1099, %v1106
    %v1108 = vmul.f32 %v1101, %v1106
    %v1109 = vpack.c.bf16 %v1031, %v1030
    %v1110 = vpack.c.bf16 %v1042, %v1041
    %v1111 = vpack.c.bf16 %v1053, %v1052
    %v1112 = vpack.c.bf16 %v1064, %v1063
    %v1113 = vpack.c.bf16 %v1010, %v1007
    %v1114 = vpack.c.bf16 %v1075, %v1074
    %v1115 = vpack.c.bf16 %v1086, %v1085
    %v1116 = vpack.c.bf16 %v1097, %v1096
    %v1117 = vpack.c.bf16 %v1108, %v1107
    %v1122 = vunpack.c.l.b16 %v1013
    %v1123 = vunpack.c.h.b16 %v1013
    %v1124 = vunpack.c.l.b16 %v1014
    %v1125 = vunpack.c.h.b16 %v1014
    %v1126 = vunpack.c.l.b16 %v1015
    %v1127 = vunpack.c.h.b16 %v1015
    %v1128 = vunpack.c.l.b16 %v1016
    %v1129 = vunpack.c.h.b16 %v1016
    %v1130 = vpack.c.b16 %v1124, %v1122
    %v1131 = vpack.c.b16 %v1125, %v1123
    %v1132 = vpack.c.b16 %v1128, %v1126
    %v1133 = vpack.c.b16 %v1129, %v1127
    %vm1136 = vcmask 130048
    %v1138 = vsel %vm1136, %v1131, 0
    %v1141 = vsel %vm1136, %v1133, 0
    %1143 = vmatprep.subr.bf16.mxu0 0
    %1144 = vmatpush1.bf16.msra.mxu0 %v1109
    %1145 = vmatprep.subr.bf16.mxu0 0
    %1146 = vmatpush1.bf16.msra.mxu0 %v1110
    %1147 = vmatprep.subr.bf16.mxu0 0
    %1148 = vmatpush1.bf16.msra.mxu0 %v1111
    %1149 = vmatprep.subr.bf16.mxu0 0
    %1150 = vmatpush1.bf16.msra.mxu0 %v1112
    %1151 = vmatprep.subr.bf16.mxu0 0
    %1152 = vmatpush1.bf16.msra.mxu0 %v1113
    %1153 = vmatprep.subr.bf16.mxu0 0
    %1154 = vmatpush1.bf16.msra.mxu0 %v1114
    %1155 = vmatprep.subr.bf16.mxu0 0
    %1156 = vmatpush1.bf16.msra.mxu0 %v1115
    %1157 = vmatprep.subr.bf16.mxu0 0
    %1158 = vmatpush1.bf16.msra.mxu0 %v1116
    %1159 = vmatprep.subr.bf16.mxu0 0
    %1160 = vmatpush1.bf16.msra.mxu0 %v1117
    %1161 = vmatprep.subr.bf16.mxu0 0
    %1162 = vmatpush1.bf16.msra.mxu0 0
    %1163 = vmatprep.subr.bf16.mxu0 0
    %1164 = vmatpush1.bf16.msra.mxu0 0
    %1165 = vmatprep.subr.bf16.mxu0 0
    %1166 = vmatpush1.bf16.msra.mxu0 0
    %1167 = vmatprep.subr.bf16.mxu0 0
    %1168 = vmatpush1.bf16.msra.mxu0 0
    %1169 = vmatprep.subr.bf16.mxu0 0
    %1170 = vmatpush1.bf16.msra.mxu0 0
    %1171 = vmatprep.subr.bf16.mxu0 0
    %1172 = vmatpush1.bf16.msra.mxu0 0
    %1173 = vmatprep.subr.bf16.mxu0 0
    %1174 = vmatpush1.bf16.msra.mxu0 0
    %1175 = vmatprep.mubr.bf16.mxu0 %v1138
    %1176 = vmatmul.mubr.bf16.gmra.mrb[0].mxu0 %v1130
    %v1177 = vpop.f32.mrb[0].mxu0
    %v1178 = vadd.f32 %v1017, %v1177
    %v1179 = vpop.f32.mrb[0].mxu0
    %v1180 = vpop.f32.mrb[0].mxu0
    %v1181 = vadd.f32 %v1018, %v1180
    %v1182 = vpop.f32.mrb[0].mxu0
    %1183 = vmatprep.mubr.bf16.mxu0 %v1141
    %1184 = vmatmul.mubr.bf16.gmra.mrb[0].mxu0 %v1132
    %v1185 = vpop.f32.mrb[0].mxu0
    %v1186 = vadd.f32 %v1019, %v1185
    %v1187 = vpop.f32.mrb[0].mxu0
    %v1188 = vpop.f32.mrb[0].mxu0
    %v1189 = vadd.f32 %v1020, %v1188
    %v1190 = vpop.f32.mrb[0].mxu0
    %1191 = vdwg.mxu0
    %v1192 = vxor.u32 %v1178, 2147483648
    %v1193 = vxor.u32 %v1181, 2147483648
    %v1194 = vxor.u32 %v1186, 2147483648
    %v1195 = vxor.u32 %v1189, 2147483648
    %v1196 = vmul.f32 %v1192, 1.442695
    %v1197 = vpow.pop %v1196
    %v1198 = vmul.f32 %v1193, 1.442695
    %v1199 = vpow.pop %v1198
    %v1200 = vmul.f32 %v1194, 1.442695
    %v1201 = vpow.pop %v1200
    %v1202 = vmul.f32 %v1195, 1.442695
    %v1203 = vpow.pop %v1202
    %v1204 = vadd.f32 %v1197, 1.0
    %v1205 = vadd.f32 %v1199, 1.0
    %v1206 = vadd.f32 %v1201, 1.0
    %v1207 = vadd.f32 %v1203, 1.0
    %v1208 = vrcp.pop %v1204
    %v1209 = vmul.f32 1.0, %v1208
    %v1210 = vrcp.pop %v1205
    %v1211 = vmul.f32 1.0, %v1210
    %v1212 = vrcp.pop %v1206
    %v1213 = vmul.f32 1.0, %v1212
    %v1214 = vrcp.pop %v1207
    %v1215 = vmul.f32 1.0, %v1214
    %v1216 = vmul.f32 %v1178, %v1209
    %v1217 = vmul.f32 %v1181, %v1211
    %v1218 = vmul.f32 %v1186, %v1213
    %v1219 = vmul.f32 %v1189, %v1215
    %v1220 = vpack.c.bf16 %v1217, %v1216
    %v1221 = vpack.c.bf16 %v1219, %v1218
    %v1222 = vld [vmem:[#allocation12] sm:$0xff]
    %v1223 = vld [vmem:[#allocation12 + $0x8] sm:$0xff]
    %v1224 = vld [vmem:[#allocation12 + $0x10] sm:$0xff]
    %v1225 = vld [vmem:[#allocation12 + $0x18] sm:$0xff]
    %v1226 = vld [vmem:[#allocation12 + $0x20] sm:$0xff]
    %v1227 = vld [vmem:[#allocation12 + $0x28] sm:$0xff]
    %v1228 = vld [vmem:[#allocation12 + $0x30] sm:$0xff]
    %v1229 = vld [vmem:[#allocation12 + $0x38] sm:$0xff]
    %v1230 = vld [vmem:[#allocation12 + $0x40] sm:$0xff]
    %v1231 = vld [vmem:[#allocation12 + $0x48] sm:$0xff]
    %v1232 = vld [vmem:[#allocation12 + $0x50] sm:$0xff]
    %v1233 = vld [vmem:[#allocation12 + $0x58] sm:$0xff]
    %v1234 = vld [vmem:[#allocation12 + $0x60] sm:$0xff]
    %v1235 = vld [vmem:[#allocation12 + $0x68] sm:$0xff]
    %v1236 = vld [vmem:[#allocation12 + $0x70] sm:$0xff]
    %v1237 = vld [vmem:[#allocation12 + $0x78] sm:$0xff]
    %v1238 = vld [vmem:[#allocation12 + $0x80] sm:$0xff]
    %v1239 = vld [vmem:[#allocation12 + $0x88] sm:$0xff]
    %v1240 = vld [vmem:[#allocation12 + $0x90] sm:$0xff]
    %v1241 = vld [vmem:[#allocation12 + $0x98] sm:$0xff]
    %v1242 = vld [vmem:[#allocation12 + $0xa0] sm:$0xff]
    %v1243 = vld [vmem:[#allocation12 + $0xa8] sm:$0xff]
    %v1244 = vld [vmem:[#allocation12 + $0xb0] sm:$0xff]
    %v1245 = vld [vmem:[#allocation12 + $0xb8] sm:$0xff]
    %v1246 = vld [vmem:[#allocation12 + $0xc0] sm:$0xff]
    %v1247 = vld [vmem:[#allocation12 + $0xc8] sm:$0xff]
    %v1248 = vld [vmem:[#allocation12 + $0xd0] sm:$0xff]
    %v1249 = vld [vmem:[#allocation12 + $0xd8] sm:$0xff]
    %v1250 = vld [vmem:[#allocation12 + $0xe0] sm:$0xff]
    %v1251 = vld [vmem:[#allocation12 + $0xe8] sm:$0xff]
    %v1252 = vld [vmem:[#allocation12 + $0xf0] sm:$0xff]
    %v1253 = vld [vmem:[#allocation12 + $0xf8] sm:$0xff]
    %v1286 = vunpack.c.l.b16 %v1222
    %v1287 = vunpack.c.h.b16 %v1222
    %v1288 = vunpack.c.l.b16 %v1223
    %v1289 = vunpack.c.h.b16 %v1223
    %v1290 = vunpack.c.l.b16 %v1224
    %v1291 = vunpack.c.h.b16 %v1224
    %v1292 = vunpack.c.l.b16 %v1225
    %v1293 = vunpack.c.h.b16 %v1225
    %v1294 = vunpack.c.l.b16 %v1226
    %v1295 = vunpack.c.h.b16 %v1226
    %v1296 = vunpack.c.l.b16 %v1227
    %v1297 = vunpack.c.h.b16 %v1227
    %v1298 = vunpack.c.l.b16 %v1228
    %v1299 = vunpack.c.h.b16 %v1228
    %v1300 = vunpack.c.l.b16 %v1229
    %v1301 = vunpack.c.h.b16 %v1229
    %v1302 = vunpack.c.l.b16 %v1230
    %v1303 = vunpack.c.h.b16 %v1230
    %v1304 = vunpack.c.l.b16 %v1231
    %v1305 = vunpack.c.h.b16 %v1231
    %v1306 = vunpack.c.l.b16 %v1232
    %v1307 = vunpack.c.h.b16 %v1232
    %v1308 = vunpack.c.l.b16 %v1233
    %v1309 = vunpack.c.h.b16 %v1233
    %v1310 = vunpack.c.l.b16 %v1234
    %v1311 = vunpack.c.h.b16 %v1234
    %v1312 = vunpack.c.l.b16 %v1235
    %v1313 = vunpack.c.h.b16 %v1235
    %v1314 = vunpack.c.l.b16 %v1236
    %v1315 = vunpack.c.h.b16 %v1236
    %v1316 = vunpack.c.l.b16 %v1237
    %v1317 = vunpack.c.h.b16 %v1237
    %v1318 = vunpack.c.l.b16 %v1238
    %v1319 = vunpack.c.h.b16 %v1238
    %v1320 = vunpack.c.l.b16 %v1239
    %v1321 = vunpack.c.h.b16 %v1239
    %v1322 = vunpack.c.l.b16 %v1240
    %v1323 = vunpack.c.h.b16 %v1240
    %v1324 = vunpack.c.l.b16 %v1241
    %v1325 = vunpack.c.h.b16 %v1241
    %v1326 = vunpack.c.l.b16 %v1242
    %v1327 = vunpack.c.h.b16 %v1242
    %v1328 = vunpack.c.l.b16 %v1243
    %v1329 = vunpack.c.h.b16 %v1243
    %v1330 = vunpack.c.l.b16 %v1244
    %v1331 = vunpack.c.h.b16 %v1244
    %v1332 = vunpack.c.l.b16 %v1245
    %v1333 = vunpack.c.h.b16 %v1245
    %v1334 = vunpack.c.l.b16 %v1246
    %v1335 = vunpack.c.h.b16 %v1246
    %v1336 = vunpack.c.l.b16 %v1247
    %v1337 = vunpack.c.h.b16 %v1247
    %v1338 = vunpack.c.l.b16 %v1248
    %v1339 = vunpack.c.h.b16 %v1248
    %v1340 = vunpack.c.l.b16 %v1249
    %v1341 = vunpack.c.h.b16 %v1249
    %v1342 = vunpack.c.l.b16 %v1250
    %v1343 = vunpack.c.h.b16 %v1250
    %v1344 = vunpack.c.l.b16 %v1251
    %v1345 = vunpack.c.h.b16 %v1251
    %v1346 = vunpack.c.l.b16 %v1252
    %v1347 = vunpack.c.h.b16 %v1252
    %v1348 = vunpack.c.l.b16 %v1253
    %v1349 = vunpack.c.h.b16 %v1253
    %v1350 = vpack.c.b16 %v1290, %v1286
    %v1351 = vpack.c.b16 %v1291, %v1287
    %v1352 = vpack.c.b16 %v1292, %v1288
    %v1353 = vpack.c.b16 %v1293, %v1289
    %v1354 = vpack.c.b16 %v1298, %v1294
    %v1355 = vpack.c.b16 %v1299, %v1295
    %v1356 = vpack.c.b16 %v1300, %v1296
    %v1357 = vpack.c.b16 %v1301, %v1297
    %v1358 = vpack.c.b16 %v1306, %v1302
    %v1359 = vpack.c.b16 %v1307, %v1303
    %v1360 = vpack.c.b16 %v1308, %v1304
    %v1361 = vpack.c.b16 %v1309, %v1305
    %v1362 = vpack.c.b16 %v1314, %v1310
    %v1363 = vpack.c.b16 %v1315, %v1311
    %v1364 = vpack.c.b16 %v1316, %v1312
    %v1365 = vpack.c.b16 %v1317, %v1313
    %v1366 = vpack.c.b16 %v1322, %v1318
    %v1367 = vpack.c.b16 %v1323, %v1319
    %v1368 = vpack.c.b16 %v1324, %v1320
    %v1369 = vpack.c.b16 %v1325, %v1321
    %v1370 = vpack.c.b16 %v1330, %v1326
    %v1371 = vpack.c.b16 %v1331, %v1327
    %v1372 = vpack.c.b16 %v1332, %v1328
    %v1373 = vpack.c.b16 %v1333, %v1329
    %v1374 = vpack.c.b16 %v1338, %v1334
    %v1375 = vpack.c.b16 %v1339, %v1335
    %v1376 = vpack.c.b16 %v1340, %v1336
    %v1377 = vpack.c.b16 %v1341, %v1337
    %v1378 = vpack.c.b16 %v1346, %v1342
    %v1379 = vpack.c.b16 %v1347, %v1343
    %v1380 = vpack.c.b16 %v1348, %v1344
    %v1381 = vpack.c.b16 %v1349, %v1345
    %1414 = vmatprep.subr.bf16.mxu0 %v1351
    %1415 = vmatpush1.bf16.msra.mxu0 %v1350
    %1416 = vmatprep.subr.bf16.mxu0 %v1355
    %1417 = vmatpush1.bf16.msra.mxu0 %v1354
    %1418 = vmatprep.subr.bf16.mxu0 %v1359
    %1419 = vmatpush1.bf16.msra.mxu0 %v1358
    %1420 = vmatprep.subr.bf16.mxu0 %v1363
    %1421 = vmatpush1.bf16.msra.mxu0 %v1362
    %1422 = vmatprep.subr.bf16.mxu0 %v1367
    %1423 = vmatpush1.bf16.msra.mxu0 %v1366
    %1424 = vmatprep.subr.bf16.mxu0 %v1371
    %1425 = vmatpush1.bf16.msra.mxu0 %v1370
    %1426 = vmatprep.subr.bf16.mxu0 %v1375
    %1427 = vmatpush1.bf16.msra.mxu0 %v1374
    %1428 = vmatprep.subr.bf16.mxu0 %v1379
    %1429 = vmatpush1.bf16.msra.mxu0 %v1378
    %1430 = vmatprep.subr.bf16.mxu0 0
    %1431 = vmatpush1.bf16.msra.mxu0 0
    %1432 = vmatprep.subr.bf16.mxu0 0
    %1433 = vmatpush1.bf16.msra.mxu0 0
    %1434 = vmatprep.subr.bf16.mxu0 0
    %1435 = vmatpush1.bf16.msra.mxu0 0
    %1436 = vmatprep.subr.bf16.mxu0 0
    %1437 = vmatpush1.bf16.msra.mxu0 0
    %1438 = vmatprep.subr.bf16.mxu0 0
    %1439 = vmatpush1.bf16.msra.mxu0 0
    %1440 = vmatprep.subr.bf16.mxu0 0
    %1441 = vmatpush1.bf16.msra.mxu0 0
    %1442 = vmatprep.subr.bf16.mxu0 0
    %1443 = vmatpush1.bf16.msra.mxu0 0
    %1444 = vmatprep.subr.bf16.mxu0 0
    %1445 = vmatpush1.bf16.msra.mxu0 0
    %1446 = vmatprep.mubr.bf16.mxu0 0
    %1447 = vmatmul.mubr.bf16.gmra.mrb[0].mxu0 %v1220
    %v1448 = vpop.f32.mrb[0].mxu0
    %v1449 = vadd.f32 0.0, %v1448
    %v1450 = vpop.f32.mrb[0].mxu0
    %v1451 = vadd.f32 0.0, %v1450
    %v1452 = vpop.f32.mrb[0].mxu0
    %v1453 = vadd.f32 0.0, %v1452
    %v1454 = vpop.f32.mrb[0].mxu0
    %v1455 = vadd.f32 0.0, %v1454
    %1456 = vmatprep.mubr.bf16.mxu0 0
    %1457 = vmatmul.mubr.bf16.gmra.mrb[0].mxu0 %v1221
    %v1458 = vpop.f32.mrb[0].mxu0
    %v1459 = vadd.f32 0.0, %v1458
    %v1460 = vpop.f32.mrb[0].mxu0
    %v1461 = vadd.f32 0.0, %v1460
    %v1462 = vpop.f32.mrb[0].mxu0
    %v1463 = vadd.f32 0.0, %v1462
    %v1464 = vpop.f32.mrb[0].mxu0
    %v1465 = vadd.f32 0.0, %v1464
    %1466 = vdwg.mxu0
    %1467 = vmatprep.subr.bf16.mxu0 %v1353
    %1468 = vmatpush1.bf16.msra.mxu0 %v1352
    %1469 = vmatprep.subr.bf16.mxu0 %v1357
    %1470 = vmatpush1.bf16.msra.mxu0 %v1356
    %1471 = vmatprep.subr.bf16.mxu0 %v1361
    %1472 = vmatpush1.bf16.msra.mxu0 %v1360
    %1473 = vmatprep.subr.bf16.mxu0 %v1365
    %1474 = vmatpush1.bf16.msra.mxu0 %v1364
    %1475 = vmatprep.subr.bf16.mxu0 %v1369
    %1476 = vmatpush1.bf16.msra.mxu0 %v1368
    %1477 = vmatprep.subr.bf16.mxu0 %v1373
    %1478 = vmatpush1.bf16.msra.mxu0 %v1372
    %1479 = vmatprep.subr.bf16.mxu0 %v1377
    %1480 = vmatpush1.bf16.msra.mxu0 %v1376
    %1481 = vmatprep.subr.bf16.mxu0 %v1381
    %1482 = vmatpush1.bf16.msra.mxu0 %v1380
    %1483 = vmatprep.subr.bf16.mxu0 0
    %1484 = vmatpush1.bf16.msra.mxu0 0
    %1485 = vmatprep.subr.bf16.mxu0 0
    %1486 = vmatpush1.bf16.msra.mxu0 0
    %1487 = vmatprep.subr.bf16.mxu0 0
    %1488 = vmatpush1.bf16.msra.mxu0 0
    %1489 = vmatprep.subr.bf16.mxu0 0
    %1490 = vmatpush1.bf16.msra.mxu0 0
    %1491 = vmatprep.subr.bf16.mxu0 0
    %1492 = vmatpush1.bf16.msra.mxu0 0
    %1493 = vmatprep.subr.bf16.mxu0 0
    %1494 = vmatpush1.bf16.msra.mxu0 0
    %1495 = vmatprep.subr.bf16.mxu0 0
    %1496 = vmatpush1.bf16.msra.mxu0 0
    %1497 = vmatprep.subr.bf16.mxu0 0
    %1498 = vmatpush1.bf16.msra.mxu0 0
    %1499 = vmatprep.mubr.bf16.mxu0 0
    %1500 = vmatmul.mubr.bf16.gmra.mrb[0].mxu0 %v1220
    %v1501 = vpop.f32.mrb[0].mxu0
    %v1502 = vadd.f32 0.0, %v1501
    %v1503 = vpop.f32.mrb[0].mxu0
    %v1504 = vadd.f32 0.0, %v1503
    %v1505 = vpop.f32.mrb[0].mxu0
    %v1506 = vadd.f32 0.0, %v1505
    %v1507 = vpop.f32.mrb[0].mxu0
    %v1508 = vadd.f32 0.0, %v1507
    %1509 = vmatprep.mubr.bf16.mxu0 0
    %1510 = vmatmul.mubr.bf16.gmra.mrb[0].mxu0 %v1221
    %v1511 = vpop.f32.mrb[0].mxu0
    %v1512 = vadd.f32 0.0, %v1511
    %v1513 = vpop.f32.mrb[0].mxu0
    %v1514 = vadd.f32 0.0, %v1513
    %v1515 = vpop.f32.mrb[0].mxu0
    %v1516 = vadd.f32 0.0, %v1515
    %v1517 = vpop.f32.mrb[0].mxu0
    %v1518 = vadd.f32 0.0, %v1517
    %1519 = vdwg.mxu0
    %v1520 = vld [vmem:[#allocation9] sm:$0xff]
    %v1521 = vld [vmem:[#allocation9 + $0x8] sm:$0xf]
    %v1522 = vld [vmem:[#allocation9 + $0xc] sm:$0xff]
    %v1523 = vld [vmem:[#allocation9 + $0x14] sm:$0xf]
    %v1524 = vld [vmem:[%s3] sm:$0xff]
    %v1525 = vld [vmem:[%s3 + $0x8] sm:$0xff]
    %1526 = vrot.lane.b32.xlu0 %v1449, 17
    %v1527 = vpop.permute.xlu0 %1526
    %1528 = vrot.lane.b32.xlu0 %v1453, 17
    %v1529 = vpop.permute.xlu0 %1528
    %1530 = vrot.lane.b32.xlu0 %v1459, 17
    %v1531 = vpop.permute.xlu0 %1530
    %1532 = vrot.lane.b32.xlu0 %v1463, 17
    %v1533 = vpop.permute.xlu0 %1532
    %1534 = vrot.lane.b32.xlu0 %v1451, 17
    %v1535 = vpop.permute.xlu0 %1534
    %1536 = vrot.lane.b32.xlu0 %v1455, 17
    %v1537 = vpop.permute.xlu0 %1536
    %1538 = vrot.lane.b32.xlu0 %v1461, 17
    %v1539 = vpop.permute.xlu0 %1538
    %1540 = vrot.lane.b32.xlu0 %v1465, 17
    %v1541 = vpop.permute.xlu0 %1540
    %1542 = vrot.lane.b32.xlu0 %v1502, 17
    %v1543 = vpop.permute.xlu0 %1542
    %1544 = vrot.lane.b32.xlu0 %v1506, 17
    %v1545 = vpop.permute.xlu0 %1544
    %1546 = vrot.lane.b32.xlu0 %v1512, 17
    %v1547 = vpop.permute.xlu0 %1546
    %1548 = vrot.lane.b32.xlu0 %v1516, 17
    %v1549 = vpop.permute.xlu0 %1548
    %1550 = vrot.lane.b32.xlu0 %v1504, 17
    %v1551 = vpop.permute.xlu0 %1550
    %1552 = vrot.lane.b32.xlu0 %v1508, 17
    %v1553 = vpop.permute.xlu0 %1552
    %1554 = vrot.lane.b32.xlu0 %v1514, 17
    %v1555 = vpop.permute.xlu0 %1554
    %1556 = vrot.lane.b32.xlu0 %v1518, 17
    %v1557 = vpop.permute.xlu0 %1556
    %v1558 = vsel %vm176, %v1543, %v1551
    %v1559 = vsel %vm176, %v1545, %v1553
    %v1560 = vsel %vm176, %v1547, %v1555
    %v1561 = vsel %vm176, %v1549, %v1557
    %v1562 = vsel %vm176, %v1535, %v1543
    %v1563 = vsel %vm176, %v1537, %v1545
    %v1564 = vsel %vm176, %v1539, %v1547
    %v1565 = vsel %vm176, %v1541, %v1549
    %v1566 = vsel %vm176, %v1527, %v1535
    %v1567 = vsel %vm176, %v1529, %v1537
    %v1568 = vsel %vm176, %v1531, %v1539
    %v1569 = vsel %vm176, %v1533, %v1541
    %v1570 = vsel %vm176, %v1551, %v1527
    %v1571 = vsel %vm176, %v1553, %v1529
    %v1572 = vsel %vm176, %v1555, %v1531
    %v1573 = vsel %vm176, %v1557, %v1533
    %v1574 = vmul.f32 %v1570, %v186
    %v1575 = vmul.f32 %v1566, %v190
    %v1576 = vmul.f32 %v1562, %v194
    %v1577 = vmul.f32 %v1558, %v198
    %v1578 = vmul.f32 %v1571, %v186
    %v1579 = vmul.f32 %v1567, %v190
    %v1580 = vmul.f32 %v1563, %v194
    %v1581 = vmul.f32 %v1559, %v198
    %v1582 = vmul.f32 %v1572, %v186
    %v1583 = vmul.f32 %v1568, %v190
    %v1584 = vmul.f32 %v1564, %v194
    %v1585 = vmul.f32 %v1560, %v198
    %v1586 = vmul.f32 %v1573, %v186
    %v1587 = vmul.f32 %v1569, %v190
    %v1588 = vmul.f32 %v1565, %v194
    %v1589 = vmul.f32 %v1561, %v198
    %1590 = vrot.lane.b32.xlu0 %v1449, 16
    %v1591 = vpop.permute.xlu0 %1590
    %1592 = vrot.lane.b32.xlu0 %v1453, 16
    %v1593 = vpop.permute.xlu0 %1592
    %1594 = vrot.lane.b32.xlu0 %v1459, 16
    %v1595 = vpop.permute.xlu0 %1594
    %1596 = vrot.lane.b32.xlu0 %v1463, 16
    %v1597 = vpop.permute.xlu0 %1596
    %1598 = vrot.lane.b32.xlu0 %v1451, 16
    %v1599 = vpop.permute.xlu0 %1598
    %1600 = vrot.lane.b32.xlu0 %v1455, 16
    %v1601 = vpop.permute.xlu0 %1600
    %1602 = vrot.lane.b32.xlu0 %v1461, 16
    %v1603 = vpop.permute.xlu0 %1602
    %1604 = vrot.lane.b32.xlu0 %v1465, 16
    %v1605 = vpop.permute.xlu0 %1604
    %1606 = vrot.lane.b32.xlu0 %v1502, 16
    %v1607 = vpop.permute.xlu0 %1606
    %1608 = vrot.lane.b32.xlu0 %v1506, 16
    %v1609 = vpop.permute.xlu0 %1608
    %1610 = vrot.lane.b32.xlu0 %v1512, 16
    %v1611 = vpop.permute.xlu0 %1610
    %1612 = vrot.lane.b32.xlu0 %v1516, 16
    %v1613 = vpop.permute.xlu0 %1612
    %1614 = vrot.lane.b32.xlu0 %v1504, 16
    %v1615 = vpop.permute.xlu0 %1614
    %1616 = vrot.lane.b32.xlu0 %v1508, 16
    %v1617 = vpop.permute.xlu0 %1616
    %1618 = vrot.lane.b32.xlu0 %v1514, 16
    %v1619 = vpop.permute.xlu0 %1618
    %1620 = vrot.lane.b32.xlu0 %v1518, 16
    %v1621 = vpop.permute.xlu0 %1620
    %v1622 = vsel %vm215, %v1607, %v1615
    %v1623 = vsel %vm215, %v1609, %v1617
    %v1624 = vsel %vm215, %v1611, %v1619
    %v1625 = vsel %vm215, %v1613, %v1621
    %v1626 = vsel %vm215, %v1599, %v1607
    %v1627 = vsel %vm215, %v1601, %v1609
    %v1628 = vsel %vm215, %v1603, %v1611
    %v1629 = vsel %vm215, %v1605, %v1613
    %v1630 = vsel %vm215, %v1591, %v1599
    %v1631 = vsel %vm215, %v1593, %v1601
    %v1632 = vsel %vm215, %v1595, %v1603
    %v1633 = vsel %vm215, %v1597, %v1605
    %v1634 = vsel %vm215, %v1615, %v1591
    %v1635 = vsel %vm215, %v1617, %v1593
    %v1636 = vsel %vm215, %v1619, %v1595
    %v1637 = vsel %vm215, %v1621, %v1597
    %v1638 = vmul.f32 %v1634, %v226
    %v1639 = vmul.f32 %v1630, %v230
    %v1640 = vmul.f32 %v1626, %v234
    %v1641 = vmul.f32 %v1622, %v238
    %v1642 = vmul.f32 %v1635, %v226
    %v1643 = vmul.f32 %v1631, %v230
    %v1644 = vmul.f32 %v1627, %v234
    %v1645 = vmul.f32 %v1623, %v238
    %v1646 = vmul.f32 %v1636, %v226
    %v1647 = vmul.f32 %v1632, %v230
    %v1648 = vmul.f32 %v1628, %v234
    %v1649 = vmul.f32 %v1624, %v238
    %v1650 = vmul.f32 %v1637, %v226
    %v1651 = vmul.f32 %v1633, %v230
    %v1652 = vmul.f32 %v1629, %v234
    %v1653 = vmul.f32 %v1625, %v238
    %1654 = vrot.lane.b32.xlu0 %v1449, 15
    %v1655 = vpop.permute.xlu0 %1654
    %1656 = vrot.lane.b32.xlu0 %v1453, 15
    %v1657 = vpop.permute.xlu0 %1656
    %1658 = vrot.lane.b32.xlu0 %v1459, 15
    %v1659 = vpop.permute.xlu0 %1658
    %1660 = vrot.lane.b32.xlu0 %v1463, 15
    %v1661 = vpop.permute.xlu0 %1660
    %1662 = vrot.lane.b32.xlu0 %v1451, 15
    %v1663 = vpop.permute.xlu0 %1662
    %1664 = vrot.lane.b32.xlu0 %v1455, 15
    %v1665 = vpop.permute.xlu0 %1664
    %1666 = vrot.lane.b32.xlu0 %v1461, 15
    %v1667 = vpop.permute.xlu0 %1666
    %1668 = vrot.lane.b32.xlu0 %v1465, 15
    %v1669 = vpop.permute.xlu0 %1668
    %1670 = vrot.lane.b32.xlu0 %v1502, 15
    %v1671 = vpop.permute.xlu0 %1670
    %1672 = vrot.lane.b32.xlu0 %v1506, 15
    %v1673 = vpop.permute.xlu0 %1672
    %1674 = vrot.lane.b32.xlu0 %v1512, 15
    %v1675 = vpop.permute.xlu0 %1674
    %1676 = vrot.lane.b32.xlu0 %v1516, 15
    %v1677 = vpop.permute.xlu0 %1676
    %1678 = vrot.lane.b32.xlu0 %v1504, 15
    %v1679 = vpop.permute.xlu0 %1678
    %1680 = vrot.lane.b32.xlu0 %v1508, 15
    %v1681 = vpop.permute.xlu0 %1680
    %1682 = vrot.lane.b32.xlu0 %v1514, 15
    %v1683 = vpop.permute.xlu0 %1682
    %1684 = vrot.lane.b32.xlu0 %v1518, 15
    %v1685 = vpop.permute.xlu0 %1684
    %v1686 = vsel %vm255, %v1671, %v1679
    %v1687 = vsel %vm255, %v1673, %v1681
    %v1688 = vsel %vm255, %v1675, %v1683
    %v1689 = vsel %vm255, %v1677, %v1685
    %v1690 = vsel %vm255, %v1663, %v1671
    %v1691 = vsel %vm255, %v1665, %v1673
    %v1692 = vsel %vm255, %v1667, %v1675
    %v1693 = vsel %vm255, %v1669, %v1677
    %v1694 = vsel %vm255, %v1655, %v1663
    %v1695 = vsel %vm255, %v1657, %v1665
    %v1696 = vsel %vm255, %v1659, %v1667
    %v1697 = vsel %vm255, %v1661, %v1669
    %v1698 = vsel %vm255, %v1679, %v1655
    %v1699 = vsel %vm255, %v1681, %v1657
    %v1700 = vsel %vm255, %v1683, %v1659
    %v1701 = vsel %vm255, %v1685, %v1661
    %v1702 = vmul.f32 %v1698, %v266
    %v1703 = vmul.f32 %v1694, %v270
    %v1704 = vmul.f32 %v1690, %v274
    %v1705 = vmul.f32 %v1686, %v278
    %v1706 = vmul.f32 %v1699, %v266
    %v1707 = vmul.f32 %v1695, %v270
    %v1708 = vmul.f32 %v1691, %v274
    %v1709 = vmul.f32 %v1687, %v278
    %v1710 = vmul.f32 %v1700, %v266
    %v1711 = vmul.f32 %v1696, %v270
    %v1712 = vmul.f32 %v1692, %v274
    %v1713 = vmul.f32 %v1688, %v278
    %v1714 = vmul.f32 %v1701, %v266
    %v1715 = vmul.f32 %v1697, %v270
    %v1716 = vmul.f32 %v1693, %v274
    %v1717 = vmul.f32 %v1689, %v278
    %1718 = vrot.lane.b32.xlu0 %v1449, 1
    %v1719 = vpop.permute.xlu0 %1718
    %1720 = vrot.lane.b32.xlu0 %v1453, 1
    %v1721 = vpop.permute.xlu0 %1720
    %1722 = vrot.lane.b32.xlu0 %v1459, 1
    %v1723 = vpop.permute.xlu0 %1722
    %1724 = vrot.lane.b32.xlu0 %v1463, 1
    %v1725 = vpop.permute.xlu0 %1724
    %1726 = vrot.lane.b32.xlu0 %v1451, 1
    %v1727 = vpop.permute.xlu0 %1726
    %1728 = vrot.lane.b32.xlu0 %v1455, 1
    %v1729 = vpop.permute.xlu0 %1728
    %1730 = vrot.lane.b32.xlu0 %v1461, 1
    %v1731 = vpop.permute.xlu0 %1730
    %1732 = vrot.lane.b32.xlu0 %v1465, 1
    %v1733 = vpop.permute.xlu0 %1732
    %1734 = vrot.lane.b32.xlu0 %v1502, 1
    %v1735 = vpop.permute.xlu0 %1734
    %1736 = vrot.lane.b32.xlu0 %v1506, 1
    %v1737 = vpop.permute.xlu0 %1736
    %1738 = vrot.lane.b32.xlu0 %v1512, 1
    %v1739 = vpop.permute.xlu0 %1738
    %1740 = vrot.lane.b32.xlu0 %v1516, 1
    %v1741 = vpop.permute.xlu0 %1740
    %1742 = vrot.lane.b32.xlu0 %v1504, 1
    %v1743 = vpop.permute.xlu0 %1742
    %1744 = vrot.lane.b32.xlu0 %v1508, 1
    %v1745 = vpop.permute.xlu0 %1744
    %1746 = vrot.lane.b32.xlu0 %v1514, 1
    %v1747 = vpop.permute.xlu0 %1746
    %1748 = vrot.lane.b32.xlu0 %v1518, 1
    %v1749 = vpop.permute.xlu0 %1748
    %v1750 = vsel %vm295, %v1735, %v1743
    %v1751 = vsel %vm295, %v1737, %v1745
    %v1752 = vsel %vm295, %v1739, %v1747
    %v1753 = vsel %vm295, %v1741, %v1749
    %v1754 = vsel %vm295, %v1727, %v1735
    %v1755 = vsel %vm295, %v1729, %v1737
    %v1756 = vsel %vm295, %v1731, %v1739
    %v1757 = vsel %vm295, %v1733, %v1741
    %v1758 = vsel %vm295, %v1719, %v1727
    %v1759 = vsel %vm295, %v1721, %v1729
    %v1760 = vsel %vm295, %v1723, %v1731
    %v1761 = vsel %vm295, %v1725, %v1733
    %v1762 = vsel %vm295, %v1743, %v1719
    %v1763 = vsel %vm295, %v1745, %v1721
    %v1764 = vsel %vm295, %v1747, %v1723
    %v1765 = vsel %vm295, %v1749, %v1725
    %v1766 = vmul.f32 %v1762, %v306
    %v1767 = vmul.f32 %v1758, %v310
    %v1768 = vmul.f32 %v1754, %v314
    %v1769 = vmul.f32 %v1750, %v318
    %v1770 = vmul.f32 %v1763, %v306
    %v1771 = vmul.f32 %v1759, %v310
    %v1772 = vmul.f32 %v1755, %v314
    %v1773 = vmul.f32 %v1751, %v318
    %v1774 = vmul.f32 %v1764, %v306
    %v1775 = vmul.f32 %v1760, %v310
    %v1776 = vmul.f32 %v1756, %v314
    %v1777 = vmul.f32 %v1752, %v318
    %v1778 = vmul.f32 %v1765, %v306
    %v1779 = vmul.f32 %v1761, %v310
    %v1780 = vmul.f32 %v1757, %v314
    %v1781 = vmul.f32 %v1753, %v318
    %1782 = vrot.lane.b32.xlu0 %v1449, 127
    %v1783 = vpop.permute.xlu0 %1782
    %1784 = vrot.lane.b32.xlu0 %v1453, 127
    %v1785 = vpop.permute.xlu0 %1784
    %1786 = vrot.lane.b32.xlu0 %v1459, 127
    %v1787 = vpop.permute.xlu0 %1786
    %1788 = vrot.lane.b32.xlu0 %v1463, 127
    %v1789 = vpop.permute.xlu0 %1788
    %1790 = vrot.lane.b32.xlu0 %v1451, 127
    %v1791 = vpop.permute.xlu0 %1790
    %1792 = vrot.lane.b32.xlu0 %v1455, 127
    %v1793 = vpop.permute.xlu0 %1792
    %1794 = vrot.lane.b32.xlu0 %v1461, 127
    %v1795 = vpop.permute.xlu0 %1794
    %1796 = vrot.lane.b32.xlu0 %v1465, 127
    %v1797 = vpop.permute.xlu0 %1796
    %1798 = vrot.lane.b32.xlu0 %v1502, 127
    %v1799 = vpop.permute.xlu0 %1798
    %1800 = vrot.lane.b32.xlu0 %v1506, 127
    %v1801 = vpop.permute.xlu0 %1800
    %1802 = vrot.lane.b32.xlu0 %v1512, 127
    %v1803 = vpop.permute.xlu0 %1802
    %1804 = vrot.lane.b32.xlu0 %v1516, 127
    %v1805 = vpop.permute.xlu0 %1804
    %1806 = vrot.lane.b32.xlu0 %v1504, 127
    %v1807 = vpop.permute.xlu0 %1806
    %1808 = vrot.lane.b32.xlu0 %v1508, 127
    %v1809 = vpop.permute.xlu0 %1808
    %1810 = vrot.lane.b32.xlu0 %v1514, 127
    %v1811 = vpop.permute.xlu0 %1810
    %1812 = vrot.lane.b32.xlu0 %v1518, 127
    %v1813 = vpop.permute.xlu0 %1812
    %v1814 = vsel %vm335, %v1799, %v1807
    %v1815 = vsel %vm335, %v1801, %v1809
    %v1816 = vsel %vm335, %v1803, %v1811
    %v1817 = vsel %vm335, %v1805, %v1813
    %v1818 = vsel %vm335, %v1791, %v1799
    %v1819 = vsel %vm335, %v1793, %v1801
    %v1820 = vsel %vm335, %v1795, %v1803
    %v1821 = vsel %vm335, %v1797, %v1805
    %v1822 = vsel %vm335, %v1783, %v1791
    %v1823 = vsel %vm335, %v1785, %v1793
    %v1824 = vsel %vm335, %v1787, %v1795
    %v1825 = vsel %vm335, %v1789, %v1797
    %v1826 = vsel %vm335, %v1807, %v1783
    %v1827 = vsel %vm335, %v1809, %v1785
    %v1828 = vsel %vm335, %v1811, %v1787
    %v1829 = vsel %vm335, %v1813, %v1789
    %v1830 = vmul.f32 %v1822, %v346
    %v1831 = vmul.f32 %v1818, %v350
    %v1832 = vmul.f32 %v1814, %v354
    %v1833 = vmul.f32 %v1826, %v358
    %v1834 = vmul.f32 %v1823, %v346
    %v1835 = vmul.f32 %v1819, %v350
    %v1836 = vmul.f32 %v1815, %v354
    %v1837 = vmul.f32 %v1827, %v358
    %v1838 = vmul.f32 %v1824, %v346
    %v1839 = vmul.f32 %v1820, %v350
    %v1840 = vmul.f32 %v1816, %v354
    %v1841 = vmul.f32 %v1828, %v358
    %v1842 = vmul.f32 %v1825, %v346
    %v1843 = vmul.f32 %v1821, %v350
    %v1844 = vmul.f32 %v1817, %v354
    %v1845 = vmul.f32 %v1829, %v358
    %1846 = vrot.lane.b32.xlu0 %v1449, 113
    %v1847 = vpop.permute.xlu0 %1846
    %1848 = vrot.lane.b32.xlu0 %v1453, 113
    %v1849 = vpop.permute.xlu0 %1848
    %1850 = vrot.lane.b32.xlu0 %v1459, 113
    %v1851 = vpop.permute.xlu0 %1850
    %1852 = vrot.lane.b32.xlu0 %v1463, 113
    %v1853 = vpop.permute.xlu0 %1852
    %1854 = vrot.lane.b32.xlu0 %v1451, 113
    %v1855 = vpop.permute.xlu0 %1854
    %1856 = vrot.lane.b32.xlu0 %v1455, 113
    %v1857 = vpop.permute.xlu0 %1856
    %1858 = vrot.lane.b32.xlu0 %v1461, 113
    %v1859 = vpop.permute.xlu0 %1858
    %1860 = vrot.lane.b32.xlu0 %v1465, 113
    %v1861 = vpop.permute.xlu0 %1860
    %1862 = vrot.lane.b32.xlu0 %v1502, 113
    %v1863 = vpop.permute.xlu0 %1862
    %1864 = vrot.lane.b32.xlu0 %v1506, 113
    %v1865 = vpop.permute.xlu0 %1864
    %1866 = vrot.lane.b32.xlu0 %v1512, 113
    %v1867 = vpop.permute.xlu0 %1866
    %1868 = vrot.lane.b32.xlu0 %v1516, 113
    %v1869 = vpop.permute.xlu0 %1868
    %1870 = vrot.lane.b32.xlu0 %v1504, 113
    %v1871 = vpop.permute.xlu0 %1870
    %1872 = vrot.lane.b32.xlu0 %v1508, 113
    %v1873 = vpop.permute.xlu0 %1872
    %1874 = vrot.lane.b32.xlu0 %v1514, 113
    %v1875 = vpop.permute.xlu0 %1874
    %1876 = vrot.lane.b32.xlu0 %v1518, 113
    %v1877 = vpop.permute.xlu0 %1876
    %v1878 = vsel %vm375, %v1863, %v1871
    %v1879 = vsel %vm375, %v1865, %v1873
    %v1880 = vsel %vm375, %v1867, %v1875
    %v1881 = vsel %vm375, %v1869, %v1877
    %v1882 = vsel %vm375, %v1855, %v1863
    %v1883 = vsel %vm375, %v1857, %v1865
    %v1884 = vsel %vm375, %v1859, %v1867
    %v1885 = vsel %vm375, %v1861, %v1869
    %v1886 = vsel %vm375, %v1847, %v1855
    %v1887 = vsel %vm375, %v1849, %v1857
    %v1888 = vsel %vm375, %v1851, %v1859
    %v1889 = vsel %vm375, %v1853, %v1861
    %v1890 = vsel %vm375, %v1871, %v1847
    %v1891 = vsel %vm375, %v1873, %v1849
    %v1892 = vsel %vm375, %v1875, %v1851
    %v1893 = vsel %vm375, %v1877, %v1853
    %v1894 = vmul.f32 %v1886, %v386
    %v1895 = vmul.f32 %v1882, %v390
    %v1896 = vmul.f32 %v1878, %v394
    %v1897 = vmul.f32 %v1890, %v398
    %v1898 = vmul.f32 %v1887, %v386
    %v1899 = vmul.f32 %v1883, %v390
    %v1900 = vmul.f32 %v1879, %v394
    %v1901 = vmul.f32 %v1891, %v398
    %v1902 = vmul.f32 %v1888, %v386
    %v1903 = vmul.f32 %v1884, %v390
    %v1904 = vmul.f32 %v1880, %v394
    %v1905 = vmul.f32 %v1892, %v398
    %v1906 = vmul.f32 %v1889, %v386
    %v1907 = vmul.f32 %v1885, %v390
    %v1908 = vmul.f32 %v1881, %v394
    %v1909 = vmul.f32 %v1893, %v398
    %1910 = vrot.lane.b32.xlu0 %v1449, 112
    %v1911 = vpop.permute.xlu0 %1910
    %1912 = vrot.lane.b32.xlu0 %v1453, 112
    %v1913 = vpop.permute.xlu0 %1912
    %1914 = vrot.lane.b32.xlu0 %v1459, 112
    %v1915 = vpop.permute.xlu0 %1914
    %1916 = vrot.lane.b32.xlu0 %v1463, 112
    %v1917 = vpop.permute.xlu0 %1916
    %1918 = vrot.lane.b32.xlu0 %v1451, 112
    %v1919 = vpop.permute.xlu0 %1918
    %1920 = vrot.lane.b32.xlu0 %v1455, 112
    %v1921 = vpop.permute.xlu0 %1920
    %1922 = vrot.lane.b32.xlu0 %v1461, 112
    %v1923 = vpop.permute.xlu0 %1922
    %1924 = vrot.lane.b32.xlu0 %v1465, 112
    %v1925 = vpop.permute.xlu0 %1924
    %1926 = vrot.lane.b32.xlu0 %v1502, 112
    %v1927 = vpop.permute.xlu0 %1926
    %1928 = vrot.lane.b32.xlu0 %v1506, 112
    %v1929 = vpop.permute.xlu0 %1928
    %1930 = vrot.lane.b32.xlu0 %v1512, 112
    %v1931 = vpop.permute.xlu0 %1930
    %1932 = vrot.lane.b32.xlu0 %v1516, 112
    %v1933 = vpop.permute.xlu0 %1932
    %1934 = vrot.lane.b32.xlu0 %v1504, 112
    %v1935 = vpop.permute.xlu0 %1934
    %1936 = vrot.lane.b32.xlu0 %v1508, 112
    %v1937 = vpop.permute.xlu0 %1936
    %1938 = vrot.lane.b32.xlu0 %v1514, 112
    %v1939 = vpop.permute.xlu0 %1938
    %1940 = vrot.lane.b32.xlu0 %v1518, 112
    %v1941 = vpop.permute.xlu0 %1940
    %v1942 = vsel %vm415, %v1927, %v1935
    %v1943 = vsel %vm415, %v1929, %v1937
    %v1944 = vsel %vm415, %v1931, %v1939
    %v1945 = vsel %vm415, %v1933, %v1941
    %v1946 = vsel %vm415, %v1919, %v1927
    %v1947 = vsel %vm415, %v1921, %v1929
    %v1948 = vsel %vm415, %v1923, %v1931
    %v1949 = vsel %vm415, %v1925, %v1933
    %v1950 = vsel %vm415, %v1911, %v1919
    %v1951 = vsel %vm415, %v1913, %v1921
    %v1952 = vsel %vm415, %v1915, %v1923
    %v1953 = vsel %vm415, %v1917, %v1925
    %v1954 = vsel %vm415, %v1935, %v1911
    %v1955 = vsel %vm415, %v1937, %v1913
    %v1956 = vsel %vm415, %v1939, %v1915
    %v1957 = vsel %vm415, %v1941, %v1917
    %v1958 = vmul.f32 %v1950, %v426
    %v1959 = vmul.f32 %v1946, %v430
    %v1960 = vmul.f32 %v1942, %v434
    %v1961 = vmul.f32 %v1954, %v438
    %v1962 = vmul.f32 %v1951, %v426
    %v1963 = vmul.f32 %v1947, %v430
    %v1964 = vmul.f32 %v1943, %v434
    %v1965 = vmul.f32 %v1955, %v438
    %v1966 = vmul.f32 %v1952, %v426
    %v1967 = vmul.f32 %v1948, %v430
    %v1968 = vmul.f32 %v1944, %v434
    %v1969 = vmul.f32 %v1956, %v438
    %v1970 = vmul.f32 %v1953, %v426
    %v1971 = vmul.f32 %v1949, %v430
    %v1972 = vmul.f32 %v1945, %v434
    %v1973 = vmul.f32 %v1957, %v438
    %1974 = vrot.lane.b32.xlu0 %v1449, 111
    %v1975 = vpop.permute.xlu0 %1974
    %1976 = vrot.lane.b32.xlu0 %v1453, 111
    %v1977 = vpop.permute.xlu0 %1976
    %1978 = vrot.lane.b32.xlu0 %v1459, 111
    %v1979 = vpop.permute.xlu0 %1978
    %1980 = vrot.lane.b32.xlu0 %v1463, 111
    %v1981 = vpop.permute.xlu0 %1980
    %1982 = vrot.lane.b32.xlu0 %v1451, 111
    %v1983 = vpop.permute.xlu0 %1982
    %1984 = vrot.lane.b32.xlu0 %v1455, 111
    %v1985 = vpop.permute.xlu0 %1984
    %1986 = vrot.lane.b32.xlu0 %v1461, 111
    %v1987 = vpop.permute.xlu0 %1986
    %1988 = vrot.lane.b32.xlu0 %v1465, 111
    %v1989 = vpop.permute.xlu0 %1988
    %1990 = vrot.lane.b32.xlu0 %v1502, 111
    %v1991 = vpop.permute.xlu0 %1990
    %1992 = vrot.lane.b32.xlu0 %v1506, 111
    %v1993 = vpop.permute.xlu0 %1992
    %1994 = vrot.lane.b32.xlu0 %v1512, 111
    %v1995 = vpop.permute.xlu0 %1994
    %1996 = vrot.lane.b32.xlu0 %v1516, 111
    %v1997 = vpop.permute.xlu0 %1996
    %1998 = vrot.lane.b32.xlu0 %v1504, 111
    %v1999 = vpop.permute.xlu0 %1998
    %2000 = vrot.lane.b32.xlu0 %v1508, 111
    %v2001 = vpop.permute.xlu0 %2000
    %2002 = vrot.lane.b32.xlu0 %v1514, 111
    %v2003 = vpop.permute.xlu0 %2002
    %2004 = vrot.lane.b32.xlu0 %v1518, 111
    %v2005 = vpop.permute.xlu0 %2004
    %v2006 = vsel %vm455, %v1991, %v1999
    %v2007 = vsel %vm455, %v1993, %v2001
    %v2008 = vsel %vm455, %v1995, %v2003
    %v2009 = vsel %vm455, %v1997, %v2005
    %v2010 = vsel %vm455, %v1983, %v1991
    %v2011 = vsel %vm455, %v1985, %v1993
    %v2012 = vsel %vm455, %v1987, %v1995
    %v2013 = vsel %vm455, %v1989, %v1997
    %v2014 = vsel %vm455, %v1975, %v1983
    %v2015 = vsel %vm455, %v1977, %v1985
    %v2016 = vsel %vm455, %v1979, %v1987
    %v2017 = vsel %vm455, %v1981, %v1989
    %v2018 = vsel %vm455, %v1999, %v1975
    %v2019 = vsel %vm455, %v2001, %v1977
    %v2020 = vsel %vm455, %v2003, %v1979
    %v2021 = vsel %vm455, %v2005, %v1981
    %v2022 = vmul.f32 %v2014, %v466
    %v2023 = vmul.f32 %v2010, %v470
    %v2024 = vmul.f32 %v2006, %v474
    %v2025 = vmul.f32 %v2018, %v478
    %v2026 = vmul.f32 %v2015, %v466
    %v2027 = vmul.f32 %v2011, %v470
    %v2028 = vmul.f32 %v2007, %v474
    %v2029 = vmul.f32 %v2019, %v478
    %v2030 = vmul.f32 %v2016, %v466
    %v2031 = vmul.f32 %v2012, %v470
    %v2032 = vmul.f32 %v2008, %v474
    %v2033 = vmul.f32 %v2020, %v478
    %v2034 = vmul.f32 %v2017, %v466
    %v2035 = vmul.f32 %v2013, %v470
    %v2036 = vmul.f32 %v2009, %v474
    %v2037 = vmul.f32 %v2021, %v478
    %v2038 = vpack.c.bf16 %v1578, %v1574
    %v2039 = vpack.c.bf16 %v1579, %v1575
    %v2040 = vpack.c.bf16 %v1580, %v1576
    %v2041 = vpack.c.bf16 %v1581, %v1577
    %v2042 = vpack.c.bf16 %v1586, %v1582
    %v2043 = vpack.c.bf16 %v1587, %v1583
    %v2044 = vpack.c.bf16 %v1588, %v1584
    %v2045 = vpack.c.bf16 %v1589, %v1585
    %v2046 = vpack.c.bf16 %v1642, %v1638
    %v2047 = vpack.c.bf16 %v1643, %v1639
    %v2048 = vpack.c.bf16 %v1644, %v1640
    %v2049 = vpack.c.bf16 %v1645, %v1641
    %v2050 = vpack.c.bf16 %v1650, %v1646
    %v2051 = vpack.c.bf16 %v1651, %v1647
    %v2052 = vpack.c.bf16 %v1652, %v1648
    %v2053 = vpack.c.bf16 %v1653, %v1649
    %v2054 = vpack.c.bf16 %v1706, %v1702
    %v2055 = vpack.c.bf16 %v1707, %v1703
    %v2056 = vpack.c.bf16 %v1708, %v1704
    %v2057 = vpack.c.bf16 %v1709, %v1705
    %v2058 = vpack.c.bf16 %v1714, %v1710
    %v2059 = vpack.c.bf16 %v1715, %v1711
    %v2060 = vpack.c.bf16 %v1716, %v1712
    %v2061 = vpack.c.bf16 %v1717, %v1713
    %v2062 = vpack.c.bf16 %v1770, %v1766
    %v2063 = vpack.c.bf16 %v1771, %v1767
    %v2064 = vpack.c.bf16 %v1772, %v1768
    %v2065 = vpack.c.bf16 %v1773, %v1769
    %v2066 = vpack.c.bf16 %v1778, %v1774
    %v2067 = vpack.c.bf16 %v1779, %v1775
    %v2068 = vpack.c.bf16 %v1780, %v1776
    %v2069 = vpack.c.bf16 %v1781, %v1777
    %v2070 = vpack.c.bf16 %v1453, %v1449
    %v2071 = vpack.c.bf16 %v1455, %v1451
    %v2072 = vpack.c.bf16 %v1506, %v1502
    %v2073 = vpack.c.bf16 %v1508, %v1504
    %v2074 = vpack.c.bf16 %v1463, %v1459
    %v2075 = vpack.c.bf16 %v1465, %v1461
    %v2076 = vpack.c.bf16 %v1516, %v1512
    %v2077 = vpack.c.bf16 %v1518, %v1514
    %v2078 = vpack.c.bf16 %v1834, %v1830
    %v2079 = vpack.c.bf16 %v1835, %v1831
    %v2080 = vpack.c.bf16 %v1836, %v1832
    %v2081 = vpack.c.bf16 %v1837, %v1833
    %v2082 = vpack.c.bf16 %v1842, %v1838
    %v2083 = vpack.c.bf16 %v1843, %v1839
    %v2084 = vpack.c.bf16 %v1844, %v1840
    %v2085 = vpack.c.bf16 %v1845, %v1841
    %v2086 = vpack.c.bf16 %v1898, %v1894
    %v2087 = vpack.c.bf16 %v1899, %v1895
    %v2088 = vpack.c.bf16 %v1900, %v1896
    %v2089 = vpack.c.bf16 %v1901, %v1897
    %v2090 = vpack.c.bf16 %v1906, %v1902
    %v2091 = vpack.c.bf16 %v1907, %v1903
    %v2092 = vpack.c.bf16 %v1908, %v1904
    %v2093 = vpack.c.bf16 %v1909, %v1905
    %v2094 = vpack.c.bf16 %v1962, %v1958
    %v2095 = vpack.c.bf16 %v1963, %v1959
    %v2096 = vpack.c.bf16 %v1964, %v1960
    %v2097 = vpack.c.bf16 %v1965, %v1961
    %v2098 = vpack.c.bf16 %v1970, %v1966
    %v2099 = vpack.c.bf16 %v1971, %v1967
    %v2100 = vpack.c.bf16 %v1972, %v1968
    %v2101 = vpack.c.bf16 %v1973, %v1969
    %v2102 = vpack.c.bf16 %v2026, %v2022
    %v2103 = vpack.c.bf16 %v2027, %v2023
    %v2104 = vpack.c.bf16 %v2028, %v2024
    %v2105 = vpack.c.bf16 %v2029, %v2025
    %v2106 = vpack.c.bf16 %v2034, %v2030
    %v2107 = vpack.c.bf16 %v2035, %v2031
    %v2108 = vpack.c.bf16 %v2036, %v2032
    %v2109 = vpack.c.bf16 %v2037, %v2033
    %2111 = vset.pattern.permute.xlu0 0
    %2112 = vperm.xlu0 %2111, %v1524
    %v2113 = vpop.permute.xlu0 %2112
    %2116 = vset.pattern.permute.xlu0 0
    %2117 = vperm.xlu0 %2116, %v1525
    %v2118 = vpop.permute.xlu0 %2117
    %v2124 = vunpack.c.l.b16 %v1520
    %v2125 = vunpack.c.h.b16 %v1520
    %v2126 = vunpack.c.l.b16 %v1521
    %v2127 = vunpack.c.l.b16 %v1522
    %v2128 = vunpack.c.h.b16 %v1522
    %v2129 = vunpack.c.l.b16 %v1523
    %v2130 = vpack.c.b16 %v2127, %v2124
    %v2131 = vpack.c.b16 %v2128, %v2125
    %v2132 = vpack.c.b16 %v2129, %v2126
    %vm2135 = vcmask 261120
    %v2137 = vsel %vm2135, %v2132, 0
    %2139 = vmatprep.subr.bf16.mxu0 %v2039
    %2140 = vmatpush1.bf16.msra.mxu0 %v2038
    %2141 = vmatprep.subr.bf16.mxu0 %v2043
    %2142 = vmatpush1.bf16.msra.mxu0 %v2042
    %2143 = vmatprep.subr.bf16.mxu0 %v2047
    %2144 = vmatpush1.bf16.msra.mxu0 %v2046
    %2145 = vmatprep.subr.bf16.mxu0 %v2051
    %2146 = vmatpush1.bf16.msra.mxu0 %v2050
    %2147 = vmatprep.subr.bf16.mxu0 %v2055
    %2148 = vmatpush1.bf16.msra.mxu0 %v2054
    %2149 = vmatprep.subr.bf16.mxu0 %v2059
    %2150 = vmatpush1.bf16.msra.mxu0 %v2058
    %2151 = vmatprep.subr.bf16.mxu0 %v2063
    %2152 = vmatpush1.bf16.msra.mxu0 %v2062
    %2153 = vmatprep.subr.bf16.mxu0 %v2067
    %2154 = vmatpush1.bf16.msra.mxu0 %v2066
    %2155 = vmatprep.subr.bf16.mxu0 %v2071
    %2156 = vmatpush1.bf16.msra.mxu0 %v2070
    %2157 = vmatprep.subr.bf16.mxu0 %v2075
    %2158 = vmatpush1.bf16.msra.mxu0 %v2074
    %2159 = vmatprep.subr.bf16.mxu0 %v2079
    %2160 = vmatpush1.bf16.msra.mxu0 %v2078
    %2161 = vmatprep.subr.bf16.mxu0 %v2083
    %2162 = vmatpush1.bf16.msra.mxu0 %v2082
    %2163 = vmatprep.subr.bf16.mxu0 %v2087
    %2164 = vmatpush1.bf16.msra.mxu0 %v2086
    %2165 = vmatprep.subr.bf16.mxu0 %v2091
    %2166 = vmatpush1.bf16.msra.mxu0 %v2090
    %2167 = vmatprep.subr.bf16.mxu0 %v2095
    %2168 = vmatpush1.bf16.msra.mxu0 %v2094
    %2169 = vmatprep.subr.bf16.mxu0 %v2099
    %2170 = vmatpush1.bf16.msra.mxu0 %v2098
    %2171 = vmatprep.mubr.bf16.mxu0 %v2131
    %2172 = vmatmul.mubr.bf16.gmra.mrb[0].mxu0 %v2130
    %v2173 = vpop.f32.mrb[0].mxu0
    %v2174 = vadd.f32 %v2113, %v2173
    %v2175 = vpop.f32.mrb[0].mxu0
    %v2176 = vadd.f32 %v2113, %v2175
    %v2177 = vpop.f32.mrb[0].mxu0
    %v2178 = vadd.f32 %v2118, %v2177
    %v2179 = vpop.f32.mrb[0].mxu0
    %v2180 = vadd.f32 %v2118, %v2179
    %2181 = vdwg.mxu0
    %2182 = vmatprep.subr.bf16.mxu0 %v2103
    %2183 = vmatpush1.bf16.msra.mxu0 %v2102
    %2184 = vmatprep.subr.bf16.mxu0 %v2107
    %2185 = vmatpush1.bf16.msra.mxu0 %v2106
    %2186 = vmatprep.subr.bf16.mxu0 0
    %2187 = vmatpush1.bf16.msra.mxu0 0
    %2188 = vmatprep.subr.bf16.mxu0 0
    %2189 = vmatpush1.bf16.msra.mxu0 0
    %2190 = vmatprep.subr.bf16.mxu0 0
    %2191 = vmatpush1.bf16.msra.mxu0 0
    %2192 = vmatprep.subr.bf16.mxu0 0
    %2193 = vmatpush1.bf16.msra.mxu0 0
    %2194 = vmatprep.subr.bf16.mxu0 0
    %2195 = vmatpush1.bf16.msra.mxu0 0
    %2196 = vmatprep.subr.bf16.mxu0 0
    %2197 = vmatpush1.bf16.msra.mxu0 0
    %2198 = vmatprep.subr.bf16.mxu0 0
    %2199 = vmatpush1.bf16.msra.mxu0 0
    %2200 = vmatprep.subr.bf16.mxu0 0
    %2201 = vmatpush1.bf16.msra.mxu0 0
    %2202 = vmatprep.subr.bf16.mxu0 0
    %2203 = vmatpush1.bf16.msra.mxu0 0
    %2204 = vmatprep.subr.bf16.mxu0 0
    %2205 = vmatpush1.bf16.msra.mxu0 0
    %2206 = vmatprep.subr.bf16.mxu0 0
    %2207 = vmatpush1.bf16.msra.mxu0 0
    %2208 = vmatprep.subr.bf16.mxu0 0
    %2209 = vmatpush1.bf16.msra.mxu0 0
    %2210 = vmatprep.subr.bf16.mxu0 0
    %2211 = vmatpush1.bf16.msra.mxu0 0
    %2212 = vmatprep.subr.bf16.mxu0 0
    %2213 = vmatpush1.bf16.msra.mxu0 0
    %2214 = vmatprep.mubr.bf16.mxu0 0
    %2215 = vmatmul.mubr.bf16.gmra.mrb[0].mxu0 %v2137
    %v2216 = vpop.f32.mrb[0].mxu0
    %v2217 = vadd.f32 %v2174, %v2216
    %v2218 = vpop.f32.mrb[0].mxu0
    %v2219 = vadd.f32 %v2176, %v2218
    %v2220 = vpop.f32.mrb[0].mxu0
    %v2221 = vadd.f32 %v2178, %v2220
    %v2222 = vpop.f32.mrb[0].mxu0
    %v2223 = vadd.f32 %v2180, %v2222
    %2224 = vdwg.mxu0
    %2225 = vmatprep.subr.bf16.mxu0 %v2041
    %2226 = vmatpush1.bf16.msra.mxu0 %v2040
    %2227 = vmatprep.subr.bf16.mxu0 %v2045
    %2228 = vmatpush1.bf16.msra.mxu0 %v2044
    %2229 = vmatprep.subr.bf16.mxu0 %v2049
    %2230 = vmatpush1.bf16.msra.mxu0 %v2048
    %2231 = vmatprep.subr.bf16.mxu0 %v2053
    %2232 = vmatpush1.bf16.msra.mxu0 %v2052
    %2233 = vmatprep.subr.bf16.mxu0 %v2057
    %2234 = vmatpush1.bf16.msra.mxu0 %v2056
    %2235 = vmatprep.subr.bf16.mxu0 %v2061
    %2236 = vmatpush1.bf16.msra.mxu0 %v2060
    %2237 = vmatprep.subr.bf16.mxu0 %v2065
    %2238 = vmatpush1.bf16.msra.mxu0 %v2064
    %2239 = vmatprep.subr.bf16.mxu0 %v2069
    %2240 = vmatpush1.bf16.msra.mxu0 %v2068
    %2241 = vmatprep.subr.bf16.mxu0 %v2073
    %2242 = vmatpush1.bf16.msra.mxu0 %v2072
    %2243 = vmatprep.subr.bf16.mxu0 %v2077
    %2244 = vmatpush1.bf16.msra.mxu0 %v2076
    %2245 = vmatprep.subr.bf16.mxu0 %v2081
    %2246 = vmatpush1.bf16.msra.mxu0 %v2080
    %2247 = vmatprep.subr.bf16.mxu0 %v2085
    %2248 = vmatpush1.bf16.msra.mxu0 %v2084
    %2249 = vmatprep.subr.bf16.mxu0 %v2089
    %2250 = vmatpush1.bf16.msra.mxu0 %v2088
    %2251 = vmatprep.subr.bf16.mxu0 %v2093
    %2252 = vmatpush1.bf16.msra.mxu0 %v2092
    %2253 = vmatprep.subr.bf16.mxu0 %v2097
    %2254 = vmatpush1.bf16.msra.mxu0 %v2096
    %2255 = vmatprep.subr.bf16.mxu0 %v2101
    %2256 = vmatpush1.bf16.msra.mxu0 %v2100
    %2257 = vmatprep.mubr.bf16.mxu0 %v2131
    %2258 = vmatmul.mubr.bf16.gmra.mrb[0].mxu0 %v2130
    %v2259 = vpop.f32.mrb[0].mxu0
    %v2260 = vadd.f32 %v2113, %v2259
    %v2261 = vpop.f32.mrb[0].mxu0
    %v2262 = vadd.f32 %v2113, %v2261
    %v2263 = vpop.f32.mrb[0].mxu0
    %v2264 = vadd.f32 %v2118, %v2263
    %v2265 = vpop.f32.mrb[0].mxu0
    %v2266 = vadd.f32 %v2118, %v2265
    %2267 = vdwg.mxu0
    %2268 = vmatprep.subr.bf16.mxu0 %v2105
    %2269 = vmatpush1.bf16.msra.mxu0 %v2104
    %2270 = vmatprep.subr.bf16.mxu0 %v2109
    %2271 = vmatpush1.bf16.msra.mxu0 %v2108
    %2272 = vmatprep.subr.bf16.mxu0 0
    %2273 = vmatpush1.bf16.msra.mxu0 0
    %2274 = vmatprep.subr.bf16.mxu0 0
    %2275 = vmatpush1.bf16.msra.mxu0 0
    %2276 = vmatprep.subr.bf16.mxu0 0
    %2277 = vmatpush1.bf16.msra.mxu0 0
    %2278 = vmatprep.subr.bf16.mxu0 0
    %2279 = vmatpush1.bf16.msra.mxu0 0
    %2280 = vmatprep.subr.bf16.mxu0 0
    %2281 = vmatpush1.bf16.msra.mxu0 0
    %2282 = vmatprep.subr.bf16.mxu0 0
    %2283 = vmatpush1.bf16.msra.mxu0 0
    %2284 = vmatprep.subr.bf16.mxu0 0
    %2285 = vmatpush1.bf16.msra.mxu0 0
    %2286 = vmatprep.subr.bf16.mxu0 0
    %2287 = vmatpush1.bf16.msra.mxu0 0
    %2288 = vmatprep.subr.bf16.mxu0 0
    %2289 = vmatpush1.bf16.msra.mxu0 0
    %2290 = vmatprep.subr.bf16.mxu0 0
    %2291 = vmatpush1.bf16.msra.mxu0 0
    %2292 = vmatprep.subr.bf16.mxu0 0
    %2293 = vmatpush1.bf16.msra.mxu0 0
    %2294 = vmatprep.subr.bf16.mxu0 0
    %2295 = vmatpush1.bf16.msra.mxu0 0
    %2296 = vmatprep.subr.bf16.mxu0 0
    %2297 = vmatpush1.bf16.msra.mxu0 0
    %2298 = vmatprep.subr.bf16.mxu0 0
    %2299 = vmatpush1.bf16.msra.mxu0 0
    %2300 = vmatprep.mubr.bf16.mxu0 0
    %2301 = vmatmul.mubr.bf16.gmra.mrb[0].mxu0 %v2137
    %v2302 = vpop.f32.mrb[0].mxu0
    %v2303 = vadd.f32 %v2260, %v2302
    %v2304 = vpop.f32.mrb[0].mxu0
    %v2305 = vadd.f32 %v2262, %v2304
    %v2306 = vpop.f32.mrb[0].mxu0
    %v2307 = vadd.f32 %v2264, %v2306
    %v2308 = vpop.f32.mrb[0].mxu0
    %v2309 = vadd.f32 %v2266, %v2308
    %2310 = vdwg.mxu0
    %v2311 = vxor.u32 %v2217, 2147483648
    %v2312 = vxor.u32 %v2219, 2147483648
    %v2313 = vxor.u32 %v2303, 2147483648
    %v2314 = vxor.u32 %v2305, 2147483648
    %v2315 = vxor.u32 %v2221, 2147483648
    %v2316 = vxor.u32 %v2223, 2147483648
    %v2317 = vxor.u32 %v2307, 2147483648
    %v2318 = vxor.u32 %v2309, 2147483648
    %v2319 = vmul.f32 %v2311, 1.442695
    %v2320 = vpow.pop %v2319
    %v2321 = vmul.f32 %v2312, 1.442695
    %v2322 = vpow.pop %v2321
    %v2323 = vmul.f32 %v2313, 1.442695
    %v2324 = vpow.pop %v2323
    %v2325 = vmul.f32 %v2314, 1.442695
    %v2326 = vpow.pop %v2325
    %v2327 = vmul.f32 %v2315, 1.442695
    %v2328 = vpow.pop %v2327
    %v2329 = vmul.f32 %v2316, 1.442695
    %v2330 = vpow.pop %v2329
    %v2331 = vmul.f32 %v2317, 1.442695
    %v2332 = vpow.pop %v2331
    %v2333 = vmul.f32 %v2318, 1.442695
    %v2334 = vpow.pop %v2333
    %v2335 = vadd.f32 %v2320, 1.0
    %v2336 = vadd.f32 %v2322, 1.0
    %v2337 = vadd.f32 %v2324, 1.0
    %v2338 = vadd.f32 %v2326, 1.0
    %v2339 = vadd.f32 %v2328, 1.0
    %v2340 = vadd.f32 %v2330, 1.0
    %v2341 = vadd.f32 %v2332, 1.0
    %v2342 = vadd.f32 %v2334, 1.0
    %v2343 = vrcp.pop %v2335
    %v2344 = vmul.f32 1.0, %v2343
    %v2345 = vrcp.pop %v2336
    %v2346 = vmul.f32 1.0, %v2345
    %v2347 = vrcp.pop %v2337
    %v2348 = vmul.f32 1.0, %v2347
    %v2349 = vrcp.pop %v2338
    %v2350 = vmul.f32 1.0, %v2349
    %v2351 = vrcp.pop %v2339
    %v2352 = vmul.f32 1.0, %v2351
    %v2353 = vrcp.pop %v2340
    %v2354 = vmul.f32 1.0, %v2353
    %v2355 = vrcp.pop %v2341
    %v2356 = vmul.f32 1.0, %v2355
    %v2357 = vrcp.pop %v2342
    %v2358 = vmul.f32 1.0, %v2357
    %v2359 = vmul.f32 %v2217, %v2344
    %v2360 = vmul.f32 %v2219, %v2346
    %v2361 = vmul.f32 %v2303, %v2348
    %v2362 = vmul.f32 %v2305, %v2350
    %v2363 = vmul.f32 %v2221, %v2352
    %v2364 = vmul.f32 %v2223, %v2354
    %v2365 = vmul.f32 %v2307, %v2356
    %v2366 = vmul.f32 %v2309, %v2358
    %v2367 = vadd.f32 %v2359, %v663
    %v2368 = vadd.f32 %v2360, %v664
    %v2369 = vadd.f32 %v2361, %v665
    %v2370 = vadd.f32 %v2362, %v666
    %v2371 = vadd.f32 %v2363, %v667
    %v2372 = vadd.f32 %v2364, %v668
    %v2373 = vadd.f32 %v2365, %v669
    %v2374 = vadd.f32 %v2366, %v670
    %v2375 = vld [vmem:[%s8] sm:$0xf]
    %v2376 = vld [vmem:[%s4] sm:$0x7]
    %2377 = vrot.lane.b32.xlu0 %v2367, 17
    %v2378 = vpop.permute.xlu0 %2377
    %2379 = vrot.lane.b32.xlu0 %v2371, 17
    %v2380 = vpop.permute.xlu0 %2379
    %2381 = vrot.lane.b32.xlu0 %v2368, 17
    %v2382 = vpop.permute.xlu0 %2381
    %2383 = vrot.lane.b32.xlu0 %v2372, 17
    %v2384 = vpop.permute.xlu0 %2383
    %2385 = vrot.lane.b32.xlu0 %v2369, 17
    %v2386 = vpop.permute.xlu0 %2385
    %2387 = vrot.lane.b32.xlu0 %v2373, 17
    %v2388 = vpop.permute.xlu0 %2387
    %2389 = vrot.lane.b32.xlu0 %v2370, 17
    %v2390 = vpop.permute.xlu0 %2389
    %2391 = vrot.lane.b32.xlu0 %v2374, 17
    %v2392 = vpop.permute.xlu0 %2391
    %v2393 = vsel %vm176, %v2386, %v2390
    %v2394 = vsel %vm176, %v2388, %v2392
    %v2395 = vsel %vm176, %v2382, %v2386
    %v2396 = vsel %vm176, %v2384, %v2388
    %v2397 = vsel %vm176, %v2378, %v2382
    %v2398 = vsel %vm176, %v2380, %v2384
    %v2399 = vsel %vm176, %v2390, %v2378
    %v2400 = vsel %vm176, %v2392, %v2380
    %v2401 = vmul.f32 %v2399, %v186
    %v2402 = vmul.f32 %v2397, %v190
    %v2403 = vmul.f32 %v2395, %v194
    %v2404 = vmul.f32 %v2393, %v198
    %v2405 = vmul.f32 %v2400, %v186
    %v2406 = vmul.f32 %v2398, %v190
    %v2407 = vmul.f32 %v2396, %v194
    %v2408 = vmul.f32 %v2394, %v198
    %2409 = vrot.lane.b32.xlu0 %v2367, 16
    %v2410 = vpop.permute.xlu0 %2409
    %2411 = vrot.lane.b32.xlu0 %v2371, 16
    %v2412 = vpop.permute.xlu0 %2411
    %2413 = vrot.lane.b32.xlu0 %v2368, 16
    %v2414 = vpop.permute.xlu0 %2413
    %2415 = vrot.lane.b32.xlu0 %v2372, 16
    %v2416 = vpop.permute.xlu0 %2415
    %2417 = vrot.lane.b32.xlu0 %v2369, 16
    %v2418 = vpop.permute.xlu0 %2417
    %2419 = vrot.lane.b32.xlu0 %v2373, 16
    %v2420 = vpop.permute.xlu0 %2419
    %2421 = vrot.lane.b32.xlu0 %v2370, 16
    %v2422 = vpop.permute.xlu0 %2421
    %2423 = vrot.lane.b32.xlu0 %v2374, 16
    %v2424 = vpop.permute.xlu0 %2423
    %v2425 = vsel %vm215, %v2418, %v2422
    %v2426 = vsel %vm215, %v2420, %v2424
    %v2427 = vsel %vm215, %v2414, %v2418
    %v2428 = vsel %vm215, %v2416, %v2420
    %v2429 = vsel %vm215, %v2410, %v2414
    %v2430 = vsel %vm215, %v2412, %v2416
    %v2431 = vsel %vm215, %v2422, %v2410
    %v2432 = vsel %vm215, %v2424, %v2412
    %v2433 = vmul.f32 %v2431, %v226
    %v2434 = vmul.f32 %v2429, %v230
    %v2435 = vmul.f32 %v2427, %v234
    %v2436 = vmul.f32 %v2425, %v238
    %v2437 = vmul.f32 %v2432, %v226
    %v2438 = vmul.f32 %v2430, %v230
    %v2439 = vmul.f32 %v2428, %v234
    %v2440 = vmul.f32 %v2426, %v238
    %2441 = vrot.lane.b32.xlu0 %v2367, 15
    %v2442 = vpop.permute.xlu0 %2441
    %2443 = vrot.lane.b32.xlu0 %v2371, 15
    %v2444 = vpop.permute.xlu0 %2443
    %2445 = vrot.lane.b32.xlu0 %v2368, 15
    %v2446 = vpop.permute.xlu0 %2445
    %2447 = vrot.lane.b32.xlu0 %v2372, 15
    %v2448 = vpop.permute.xlu0 %2447
    %2449 = vrot.lane.b32.xlu0 %v2369, 15
    %v2450 = vpop.permute.xlu0 %2449
    %2451 = vrot.lane.b32.xlu0 %v2373, 15
    %v2452 = vpop.permute.xlu0 %2451
    %2453 = vrot.lane.b32.xlu0 %v2370, 15
    %v2454 = vpop.permute.xlu0 %2453
    %2455 = vrot.lane.b32.xlu0 %v2374, 15
    %v2456 = vpop.permute.xlu0 %2455
    %v2457 = vsel %vm255, %v2450, %v2454
    %v2458 = vsel %vm255, %v2452, %v2456
    %v2459 = vsel %vm255, %v2446, %v2450
    %v2460 = vsel %vm255, %v2448, %v2452
    %v2461 = vsel %vm255, %v2442, %v2446
    %v2462 = vsel %vm255, %v2444, %v2448
    %v2463 = vsel %vm255, %v2454, %v2442
    %v2464 = vsel %vm255, %v2456, %v2444
    %v2465 = vmul.f32 %v2463, %v266
    %v2466 = vmul.f32 %v2461, %v270
    %v2467 = vmul.f32 %v2459, %v274
    %v2468 = vmul.f32 %v2457, %v278
    %v2469 = vmul.f32 %v2464, %v266
    %v2470 = vmul.f32 %v2462, %v270
    %v2471 = vmul.f32 %v2460, %v274
    %v2472 = vmul.f32 %v2458, %v278
    %2473 = vrot.lane.b32.xlu0 %v2367, 1
    %v2474 = vpop.permute.xlu0 %2473
    %2475 = vrot.lane.b32.xlu0 %v2371, 1
    %v2476 = vpop.permute.xlu0 %2475
    %2477 = vrot.lane.b32.xlu0 %v2368, 1
    %v2478 = vpop.permute.xlu0 %2477
    %2479 = vrot.lane.b32.xlu0 %v2372, 1
    %v2480 = vpop.permute.xlu0 %2479
    %2481 = vrot.lane.b32.xlu0 %v2369, 1
    %v2482 = vpop.permute.xlu0 %2481
    %2483 = vrot.lane.b32.xlu0 %v2373, 1
    %v2484 = vpop.permute.xlu0 %2483
    %2485 = vrot.lane.b32.xlu0 %v2370, 1
    %v2486 = vpop.permute.xlu0 %2485
    %2487 = vrot.lane.b32.xlu0 %v2374, 1
    %v2488 = vpop.permute.xlu0 %2487
    %v2489 = vsel %vm295, %v2482, %v2486
    %v2490 = vsel %vm295, %v2484, %v2488
    %v2491 = vsel %vm295, %v2478, %v2482
    %v2492 = vsel %vm295, %v2480, %v2484
    %v2493 = vsel %vm295, %v2474, %v2478
    %v2494 = vsel %vm295, %v2476, %v2480
    %v2495 = vsel %vm295, %v2486, %v2474
    %v2496 = vsel %vm295, %v2488, %v2476
    %v2497 = vmul.f32 %v2495, %v306
    %v2498 = vmul.f32 %v2493, %v310
    %v2499 = vmul.f32 %v2491, %v314
    %v2500 = vmul.f32 %v2489, %v318
    %v2501 = vmul.f32 %v2496, %v306
    %v2502 = vmul.f32 %v2494, %v310
    %v2503 = vmul.f32 %v2492, %v314
    %v2504 = vmul.f32 %v2490, %v318
    %2505 = vrot.lane.b32.xlu0 %v2367, 127
    %v2506 = vpop.permute.xlu0 %2505
    %2507 = vrot.lane.b32.xlu0 %v2371, 127
    %v2508 = vpop.permute.xlu0 %2507
    %2509 = vrot.lane.b32.xlu0 %v2368, 127
    %v2510 = vpop.permute.xlu0 %2509
    %2511 = vrot.lane.b32.xlu0 %v2372, 127
    %v2512 = vpop.permute.xlu0 %2511
    %2513 = vrot.lane.b32.xlu0 %v2369, 127
    %v2514 = vpop.permute.xlu0 %2513
    %2515 = vrot.lane.b32.xlu0 %v2373, 127
    %v2516 = vpop.permute.xlu0 %2515
    %2517 = vrot.lane.b32.xlu0 %v2370, 127
    %v2518 = vpop.permute.xlu0 %2517
    %2519 = vrot.lane.b32.xlu0 %v2374, 127
    %v2520 = vpop.permute.xlu0 %2519
    %v2521 = vsel %vm335, %v2514, %v2518
    %v2522 = vsel %vm335, %v2516, %v2520
    %v2523 = vsel %vm335, %v2510, %v2514
    %v2524 = vsel %vm335, %v2512, %v2516
    %v2525 = vsel %vm335, %v2506, %v2510
    %v2526 = vsel %vm335, %v2508, %v2512
    %v2527 = vsel %vm335, %v2518, %v2506
    %v2528 = vsel %vm335, %v2520, %v2508
    %v2529 = vmul.f32 %v2525, %v346
    %v2530 = vmul.f32 %v2523, %v350
    %v2531 = vmul.f32 %v2521, %v354
    %v2532 = vmul.f32 %v2527, %v358
    %v2533 = vmul.f32 %v2526, %v346
    %v2534 = vmul.f32 %v2524, %v350
    %v2535 = vmul.f32 %v2522, %v354
    %v2536 = vmul.f32 %v2528, %v358
    %2537 = vrot.lane.b32.xlu0 %v2367, 113
    %v2538 = vpop.permute.xlu0 %2537
    %2539 = vrot.lane.b32.xlu0 %v2371, 113
    %v2540 = vpop.permute.xlu0 %2539
    %2541 = vrot.lane.b32.xlu0 %v2368, 113
    %v2542 = vpop.permute.xlu0 %2541
    %2543 = vrot.lane.b32.xlu0 %v2372, 113
    %v2544 = vpop.permute.xlu0 %2543
    %2545 = vrot.lane.b32.xlu0 %v2369, 113
    %v2546 = vpop.permute.xlu0 %2545
    %2547 = vrot.lane.b32.xlu0 %v2373, 113
    %v2548 = vpop.permute.xlu0 %2547
    %2549 = vrot.lane.b32.xlu0 %v2370, 113
    %v2550 = vpop.permute.xlu0 %2549
    %2551 = vrot.lane.b32.xlu0 %v2374, 113
    %v2552 = vpop.permute.xlu0 %2551
    %v2553 = vsel %vm375, %v2546, %v2550
    %v2554 = vsel %vm375, %v2548, %v2552
    %v2555 = vsel %vm375, %v2542, %v2546
    %v2556 = vsel %vm375, %v2544, %v2548
    %v2557 = vsel %vm375, %v2538, %v2542
    %v2558 = vsel %vm375, %v2540, %v2544
    %v2559 = vsel %vm375, %v2550, %v2538
    %v2560 = vsel %vm375, %v2552, %v2540
    %v2561 = vmul.f32 %v2557, %v386
    %v2562 = vmul.f32 %v2555, %v390
    %v2563 = vmul.f32 %v2553, %v394
    %v2564 = vmul.f32 %v2559, %v398
    %v2565 = vmul.f32 %v2558, %v386
    %v2566 = vmul.f32 %v2556, %v390
    %v2567 = vmul.f32 %v2554, %v394
    %v2568 = vmul.f32 %v2560, %v398
    %2569 = vrot.lane.b32.xlu0 %v2367, 112
    %v2570 = vpop.permute.xlu0 %2569
    %2571 = vrot.lane.b32.xlu0 %v2371, 112
    %v2572 = vpop.permute.xlu0 %2571
    %2573 = vrot.lane.b32.xlu0 %v2368, 112
    %v2574 = vpop.permute.xlu0 %2573
    %2575 = vrot.lane.b32.xlu0 %v2372, 112
    %v2576 = vpop.permute.xlu0 %2575
    %2577 = vrot.lane.b32.xlu0 %v2369, 112
    %v2578 = vpop.permute.xlu0 %2577
    %2579 = vrot.lane.b32.xlu0 %v2373, 112
    %v2580 = vpop.permute.xlu0 %2579
    %2581 = vrot.lane.b32.xlu0 %v2370, 112
    %v2582 = vpop.permute.xlu0 %2581
    %2583 = vrot.lane.b32.xlu0 %v2374, 112
    %v2584 = vpop.permute.xlu0 %2583
    %v2585 = vsel %vm415, %v2578, %v2582
    %v2586 = vsel %vm415, %v2580, %v2584
    %v2587 = vsel %vm415, %v2574, %v2578
    %v2588 = vsel %vm415, %v2576, %v2580
    %v2589 = vsel %vm415, %v2570, %v2574
    %v2590 = vsel %vm415, %v2572, %v2576
    %v2591 = vsel %vm415, %v2582, %v2570
    %v2592 = vsel %vm415, %v2584, %v2572
    %v2593 = vmul.f32 %v2589, %v426
    %v2594 = vmul.f32 %v2587, %v430
    %v2595 = vmul.f32 %v2585, %v434
    %v2596 = vmul.f32 %v2591, %v438
    %v2597 = vmul.f32 %v2590, %v426
    %v2598 = vmul.f32 %v2588, %v430
    %v2599 = vmul.f32 %v2586, %v434
    %v2600 = vmul.f32 %v2592, %v438
    %2601 = vrot.lane.b32.xlu0 %v2367, 111
    %v2602 = vpop.permute.xlu0 %2601
    %2603 = vrot.lane.b32.xlu0 %v2371, 111
    %v2604 = vpop.permute.xlu0 %2603
    %2605 = vrot.lane.b32.xlu0 %v2368, 111
    %v2606 = vpop.permute.xlu0 %2605
    %2607 = vrot.lane.b32.xlu0 %v2372, 111
    %v2608 = vpop.permute.xlu0 %2607
    %2609 = vrot.lane.b32.xlu0 %v2369, 111
    %v2610 = vpop.permute.xlu0 %2609
    %2611 = vrot.lane.b32.xlu0 %v2373, 111
    %v2612 = vpop.permute.xlu0 %2611
    %2613 = vrot.lane.b32.xlu0 %v2370, 111
    %v2614 = vpop.permute.xlu0 %2613
    %2615 = vrot.lane.b32.xlu0 %v2374, 111
    %v2616 = vpop.permute.xlu0 %2615
    %v2617 = vsel %vm455, %v2610, %v2614
    %v2618 = vsel %vm455, %v2612, %v2616
    %v2619 = vsel %vm455, %v2606, %v2610
    %v2620 = vsel %vm455, %v2608, %v2612
    %v2621 = vsel %vm455, %v2602, %v2606
    %v2622 = vsel %vm455, %v2604, %v2608
    %v2623 = vsel %vm455, %v2614, %v2602
    %v2624 = vsel %vm455, %v2616, %v2604
    %v2625 = vmul.f32 %v2621, %v466
    %v2626 = vmul.f32 %v2619, %v470
    %v2627 = vmul.f32 %v2617, %v474
    %v2628 = vmul.f32 %v2623, %v478
    %v2629 = vmul.f32 %v2622, %v466
    %v2630 = vmul.f32 %v2620, %v470
    %v2631 = vmul.f32 %v2618, %v474
    %v2632 = vmul.f32 %v2624, %v478
    %v2633 = vpack.c.bf16 %v2405, %v2401
    %v2634 = vpack.c.bf16 %v2406, %v2402
    %v2635 = vpack.c.bf16 %v2407, %v2403
    %v2636 = vpack.c.bf16 %v2408, %v2404
    %v2637 = vpack.c.bf16 %v2437, %v2433
    %v2638 = vpack.c.bf16 %v2438, %v2434
    %v2639 = vpack.c.bf16 %v2439, %v2435
    %v2640 = vpack.c.bf16 %v2440, %v2436
    %v2641 = vpack.c.bf16 %v2469, %v2465
    %v2642 = vpack.c.bf16 %v2470, %v2466
    %v2643 = vpack.c.bf16 %v2471, %v2467
    %v2644 = vpack.c.bf16 %v2472, %v2468
    %v2645 = vpack.c.bf16 %v2501, %v2497
    %v2646 = vpack.c.bf16 %v2502, %v2498
    %v2647 = vpack.c.bf16 %v2503, %v2499
    %v2648 = vpack.c.bf16 %v2504, %v2500
    %v2649 = vpack.c.bf16 %v2371, %v2367
    %v2650 = vpack.c.bf16 %v2372, %v2368
    %v2651 = vpack.c.bf16 %v2373, %v2369
    %v2652 = vpack.c.bf16 %v2374, %v2370
    %v2653 = vpack.c.bf16 %v2533, %v2529
    %v2654 = vpack.c.bf16 %v2534, %v2530
    %v2655 = vpack.c.bf16 %v2535, %v2531
    %v2656 = vpack.c.bf16 %v2536, %v2532
    %v2657 = vpack.c.bf16 %v2565, %v2561
    %v2658 = vpack.c.bf16 %v2566, %v2562
    %v2659 = vpack.c.bf16 %v2567, %v2563
    %v2660 = vpack.c.bf16 %v2568, %v2564
    %v2661 = vpack.c.bf16 %v2597, %v2593
    %v2662 = vpack.c.bf16 %v2598, %v2594
    %v2663 = vpack.c.bf16 %v2599, %v2595
    %v2664 = vpack.c.bf16 %v2600, %v2596
    %v2665 = vpack.c.bf16 %v2629, %v2625
    %v2666 = vpack.c.bf16 %v2630, %v2626
    %v2667 = vpack.c.bf16 %v2631, %v2627
    %v2668 = vpack.c.bf16 %v2632, %v2628
    %2670 = vset.pattern.permute.xlu0 0
    %2671 = vperm.xlu0 %2670, %v2376
    %v2672 = vpop.permute.xlu0 %2671
    %v2676 = vunpack.c.l.s4 1983009808
    %v2677 = vunpack.c.0.s8 %v2676
    %v2678 = vlaneseq
    %v2679 = vshrl.u32 %v2678, 7
    %v2680 = vsub.s32 %v2677, %v2679
    %v2681 = vrot.slane %v2375, %v2680
    %v2682 = vcombine.high %v2681, %v2681
    %v2685 = vsel %vm1136, %v2682, 0
    %2687 = vmatprep.subr.bf16.mxu0 %v2634
    %2688 = vmatpush1.bf16.msra.mxu0 %v2633
    %2689 = vmatprep.subr.bf16.mxu0 %v2638
    %2690 = vmatpush1.bf16.msra.mxu0 %v2637
    %2691 = vmatprep.subr.bf16.mxu0 %v2642
    %2692 = vmatpush1.bf16.msra.mxu0 %v2641
    %2693 = vmatprep.subr.bf16.mxu0 %v2646
    %2694 = vmatpush1.bf16.msra.mxu0 %v2645
    %2695 = vmatprep.subr.bf16.mxu0 %v2650
    %2696 = vmatpush1.bf16.msra.mxu0 %v2649
    %2697 = vmatprep.subr.bf16.mxu0 %v2654
    %2698 = vmatpush1.bf16.msra.mxu0 %v2653
    %2699 = vmatprep.subr.bf16.mxu0 %v2658
    %2700 = vmatpush1.bf16.msra.mxu0 %v2657
    %2701 = vmatprep.subr.bf16.mxu0 %v2662
    %2702 = vmatpush1.bf16.msra.mxu0 %v2661
    %2703 = vmatprep.subr.bf16.mxu0 %v2666
    %2704 = vmatpush1.bf16.msra.mxu0 %v2665
    %2705 = vmatprep.subr.bf16.mxu0 0
    %2706 = vmatpush1.bf16.msra.mxu0 0
    %2707 = vmatprep.subr.bf16.mxu0 0
    %2708 = vmatpush1.bf16.msra.mxu0 0
    %2709 = vmatprep.subr.bf16.mxu0 0
    %2710 = vmatpush1.bf16.msra.mxu0 0
    %2711 = vmatprep.subr.bf16.mxu0 0
    %2712 = vmatpush1.bf16.msra.mxu0 0
    %2713 = vmatprep.subr.bf16.mxu0 0
    %2714 = vmatpush1.bf16.msra.mxu0 0
    %2715 = vmatprep.subr.bf16.mxu0 0
    %2716 = vmatpush1.bf16.msra.mxu0 0
    %2717 = vmatprep.subr.bf16.mxu0 0
    %2718 = vmatpush1.bf16.msra.mxu0 0
    %2719 = vmatprep.mubr.bf16.mxu0 %v2685
    %2720 = vmatmul.mubr.bf16.gmra.mrb[0].mxu0 %v2681
    %v2721 = vpop.f32.mrb[0].mxu0
    %v2722 = vadd.f32 %v2672, %v2721
    %v2723 = vpop.f32.mrb[0].mxu0
    %v2724 = vadd.f32 %v2672, %v2723
    %v2725 = vpop.f32.mrb[0].mxu0
    %v2726 = vpop.f32.mrb[0].mxu0
    %2727 = vdwg.mxu0
    %2728 = vmatprep.subr.bf16.mxu0 %v2636
    %2729 = vmatpush1.bf16.msra.mxu0 %v2635
    %2730 = vmatprep.subr.bf16.mxu0 %v2640
    %2731 = vmatpush1.bf16.msra.mxu0 %v2639
    %2732 = vmatprep.subr.bf16.mxu0 %v2644
    %2733 = vmatpush1.bf16.msra.mxu0 %v2643
    %2734 = vmatprep.subr.bf16.mxu0 %v2648
    %2735 = vmatpush1.bf16.msra.mxu0 %v2647
    %2736 = vmatprep.subr.bf16.mxu0 %v2652
    %2737 = vmatpush1.bf16.msra.mxu0 %v2651
    %2738 = vmatprep.subr.bf16.mxu0 %v2656
    %2739 = vmatpush1.bf16.msra.mxu0 %v2655
    %2740 = vmatprep.subr.bf16.mxu0 %v2660
    %2741 = vmatpush1.bf16.msra.mxu0 %v2659
    %2742 = vmatprep.subr.bf16.mxu0 %v2664
    %2743 = vmatpush1.bf16.msra.mxu0 %v2663
    %2744 = vmatprep.subr.bf16.mxu0 %v2668
    %2745 = vmatpush1.bf16.msra.mxu0 %v2667
    %2746 = vmatprep.subr.bf16.mxu0 0
    %2747 = vmatpush1.bf16.msra.mxu0 0
    %2748 = vmatprep.subr.bf16.mxu0 0
    %2749 = vmatpush1.bf16.msra.mxu0 0
    %2750 = vmatprep.subr.bf16.mxu0 0
    %2751 = vmatpush1.bf16.msra.mxu0 0
    %2752 = vmatprep.subr.bf16.mxu0 0
    %2753 = vmatpush1.bf16.msra.mxu0 0
    %2754 = vmatprep.subr.bf16.mxu0 0
    %2755 = vmatpush1.bf16.msra.mxu0 0
    %2756 = vmatprep.subr.bf16.mxu0 0
    %2757 = vmatpush1.bf16.msra.mxu0 0
    %2758 = vmatprep.subr.bf16.mxu0 0
    %2759 = vmatpush1.bf16.msra.mxu0 0
    %2760 = vmatprep.mubr.bf16.mxu0 %v2685
    %2761 = vmatmul.mubr.bf16.gmra.mrb[0].mxu0 %v2681
    %v2762 = vpop.f32.mrb[0].mxu0
    %v2763 = vadd.f32 %v2672, %v2762
    %v2764 = vpop.f32.mrb[0].mxu0
    %v2765 = vadd.f32 %v2672, %v2764
    %v2766 = vpop.f32.mrb[0].mxu0
    %v2767 = vpop.f32.mrb[0].mxu0
    %2768 = vdwg.mxu0
    %v2773 = vcombine.low %v2722, %v2724
    %v2774 = vcombine.low %v2763, %v2765
    %2777 = vst [vmem:[%s13] sm:$0x77] %v2773
    %2778 = vst [vmem:[%s13 + $0x8] sm:$0x77] %v2774
    // Predicated region
    $region86: #{tpu_custom_call.1} parent=1 // pred_check
      _
    $region87: #{tpu_custom_call.1} parent=1 // pred_check_branch
      %2780 = sbr.rel (0) target = $region89
    $region88: #{tpu_custom_call.1} parent=1 // pred_region
      _
    $region89: #{tpu_custom_call.1} parent=1 // pred_fallthru
      _
    // Predicated region
    $region90: #{tpu_custom_call.1} parent=1 // pred_check
      _
    $region91: #{tpu_custom_call.1} parent=1 // pred_check_branch
      %2782 = sbr.rel (0) target = $region93
    $region92: #{tpu_custom_call.1} parent=1 // pred_region
      _
    $region93: #{tpu_custom_call.1} parent=1 // pred_fallthru
      _
    %2783 = vsyncpa [#allocation3], 1
    %2784 = vsyncpa [#allocation5], 1
    %2785 = vsyncpa [#allocation8], 1
    %2786 = vsyncpa [#allocation11], 1
    %2787 = vsyncpa [#allocation14], 1

</llo_original>
